<compile_context>
chip_gen: v6e
topology: v6e:2x2x1
jax: 0.10.0
libtpu: 0.0.40
codegen_flags: <defaults>
</compile_context>

<pallas_src>
import functools

import jax
import jax.numpy as jnp
from jax.experimental import pallas as pl
from jax.experimental.pallas import tpu as pltpu


def _round_up(v, m):
    return (v + m - 1) // m * m


# ----------------------------------------------------------------------------
# Pallas kernels
# ----------------------------------------------------------------------------

def _shortcut_stats_kernel(x_ref, w_ref, b_ref, x0_ref, st_ref):
    """1x1 conv (pre-upsample grid, bf16 MXU) + GroupNorm-1 statistics.

    x_ref:  (1, Cin, HW)     f32 (stats computed in f32)
    w_ref:  (Cout, Cin)      bf16
    b_ref:  (Cout, 1)        f32
    x0_ref: (1, Cout, HW)    bf16 shortcut output (lane-dense)
    st_ref: (1, 2*Cin, 1)    f32  rows [:Cin] = sum(x), rows [Cin:] = sum(x*x)
    """
    x = x_ref[0]
    cin = x.shape[0]
    y = jnp.dot(w_ref[...], x.astype(jnp.bfloat16),
                preferred_element_type=jnp.float32) + b_ref[...]
    x0_ref[0] = y.astype(x0_ref.dtype)
    st_ref[0, 0:cin, :] = jnp.sum(x, axis=1, keepdims=True)
    st_ref[0, cin:2 * cin, :] = jnp.sum(x * x, axis=1, keepdims=True)


def _build_tap_stack(act, m_ref, stack_ref, *, W, cin, cpad):
    """Write the 9 shifted+masked taps into row groups of one stacked operand.

    act:       (Cin, n)      f32, affine + ReLU already applied
    m_ref:     (9, n)        f32 precomputed 0/1 border masks (tap-major)
    stack_ref: (9*cpad, n)   f32 VMEM scratch, row group t holds tap t
    """
    n = act.shape[-1]
    if cpad != cin:
        # Pad rows carry zero weights; zero them so garbage (NaN) can't leak.
        stack_ref[...] = jnp.zeros(stack_ref.shape, stack_ref.dtype)
    t = 0
    for dy in (-1, 0, 1):
        for dx in (-1, 0, 1):
            shift = dy * W + dx                      # flattened source offset
            tap = act if shift == 0 else pltpu.roll(act, (-shift) % n, axis=1)
            if t != 4:                               # center tap needs no mask
                tap = tap * m_ref[t:t + 1, :]
            stack_ref[t * cpad:t * cpad + cin, :] = tap
            t += 1


def _gn_conv_stats_kernel(x_ref, sc_ref, sh_ref, w_ref, b_ref, m_ref,
                          o_ref, st_ref, stack_ref, *, W):
    """[GN scale/shift + ReLU + 3x3 conv (one stacked matmul) + bias] + stats.

    x_ref:  (1, Cin, n) bf16;  sc/sh: (1, Cin, 1) f32
    w_ref:  (Cout, 9*cpad) bf16 (tap-major, zero-padded columns)
    b_ref:  (Cout, 1) f32;     m_ref: (9, n) f32
    o_ref:  (1, Cout, n) bf16; st_ref: (1, 2*Cout, 1) f32
    stack_ref: (9*cpad, n) f32 VMEM scratch
    """
    cin = x_ref.shape[1]
    cpad = stack_ref.shape[0] // 9
    act = jnp.maximum(x_ref[0].astype(jnp.float32) * sc_ref[0] + sh_ref[0], 0.0)
    _build_tap_stack(act, m_ref, stack_ref, W=W, cin=cin, cpad=cpad)
    y = jnp.dot(w_ref[...], stack_ref[...].astype(jnp.bfloat16),
                preferred_element_type=jnp.float32) + b_ref[...]
    cout = y.shape[0]
    o_ref[0] = y.astype(o_ref.dtype)
    st_ref[0, 0:cout, :] = jnp.sum(y, axis=1, keepdims=True)
    st_ref[0, cout:2 * cout, :] = jnp.sum(y * y, axis=1, keepdims=True)


def _gn_conv_res_kernel(x_ref, sc_ref, sh_ref, w_ref, b_ref, m_ref, res_ref,
                        o_ref, stack_ref, *, W):
    """[GN scale/shift + ReLU + 3x3 conv (one stacked matmul) + bias + residual]."""
    cin = x_ref.shape[1]
    cpad = stack_ref.shape[0] // 9
    act = jnp.maximum(x_ref[0].astype(jnp.float32) * sc_ref[0] + sh_ref[0], 0.0)
    _build_tap_stack(act, m_ref, stack_ref, W=W, cin=cin, cpad=cpad)
    y = jnp.dot(w_ref[...], stack_ref[...].astype(jnp.bfloat16),
                preferred_element_type=jnp.float32)
    o_ref[0] = (y + b_ref[...] + res_ref[0].astype(jnp.float32)).astype(o_ref.dtype)


# ----------------------------------------------------------------------------
# Pallas wrappers
# ----------------------------------------------------------------------------

def shortcut_and_stats(x_flat, w0, b0):
    """x_flat: (N, Cin, HW) f32; w0: (Cout, Cin); b0: (Cout,)."""
    N, Cin, HW = x_flat.shape
    Cout = w0.shape[0]
    return pl.pallas_call(
        _shortcut_stats_kernel,
        grid=(N,),
        in_specs=[
            pl.BlockSpec((1, Cin, HW), lambda i: (i, 0, 0)),
            pl.BlockSpec((Cout, Cin), lambda i: (0, 0)),
            pl.BlockSpec((Cout, 1), lambda i: (0, 0)),
        ],
        out_specs=[
            pl.BlockSpec((1, Cout, HW), lambda i: (i, 0, 0)),
            pl.BlockSpec((1, 2 * Cin, 1), lambda i: (i, 0, 0)),
        ],
        out_shape=[
            jax.ShapeDtypeStruct((N, Cout, HW), jnp.bfloat16),
            jax.ShapeDtypeStruct((N, 2 * Cin, 1), jnp.float32),
        ],
        compiler_params=pltpu.CompilerParams(dimension_semantics=("parallel",)),
    )(x_flat.astype(jnp.float32), w0.astype(jnp.bfloat16),
      b0.reshape(Cout, 1).astype(jnp.float32))


def fused_gn_conv3x3(x_img_flat, scale, shift, w_mat, b, masks, *, W,
                     emit_stats, res=None, out_dtype=jnp.float32):
    """x_img_flat: (N, Cin, n) bf16; scale/shift: (N, Cin, 1);
    w_mat: (Cout, 9*cpad) tap-major packed weights; b: (Cout,);
    masks: (9, n) f32; optional res: (N, Cout, n) bf16."""
    N, Cin, n = x_img_flat.shape
    Cout, K = w_mat.shape
    cpad = K // 9
    assert cpad * 9 == K and cpad >= Cin

    in_specs = [
        pl.BlockSpec((1, Cin, n), lambda i: (i, 0, 0)),
        pl.BlockSpec((1, Cin, 1), lambda i: (i, 0, 0)),
        pl.BlockSpec((1, Cin, 1), lambda i: (i, 0, 0)),
        pl.BlockSpec((Cout, K), lambda i: (0, 0)),
        pl.BlockSpec((Cout, 1), lambda i: (0, 0)),
        pl.BlockSpec((9, n), lambda i: (0, 0)),
    ]
    args = [x_img_flat.astype(jnp.bfloat16),
            scale.astype(jnp.float32), shift.astype(jnp.float32),
            w_mat.astype(jnp.bfloat16),
            b.reshape(Cout, 1).astype(jnp.float32),
            masks.astype(jnp.float32)]
    # Stacked conv operand lives in VMEM; f32 rows so 8-aligned row-group
    # stores stay on the well-supported (unpacked) masked-store path.
    scratch = [pltpu.VMEM((K, n), jnp.float32)]

    if emit_stats:
        kernel = functools.partial(_gn_conv_stats_kernel, W=W)
        out_shape = [jax.ShapeDtypeStruct((N, Cout, n), out_dtype),
                     jax.ShapeDtypeStruct((N, 2 * Cout, 1), jnp.float32)]
        out_specs = [pl.BlockSpec((1, Cout, n), lambda i: (i, 0, 0)),
                     pl.BlockSpec((1, 2 * Cout, 1), lambda i: (i, 0, 0))]
    else:
        kernel = functools.partial(_gn_conv_res_kernel, W=W)
        in_specs.append(pl.BlockSpec((1, Cout, n), lambda i: (i, 0, 0)))
        args.append(res.astype(jnp.bfloat16))
        out_shape = jax.ShapeDtypeStruct((N, Cout, n), out_dtype)
        out_specs = pl.BlockSpec((1, Cout, n), lambda i: (i, 0, 0))

    return pl.pallas_call(
        kernel,
        grid=(N,),
        in_specs=in_specs,
        out_specs=out_specs,
        out_shape=out_shape,
        scratch_shapes=scratch,
        compiler_params=pltpu.CompilerParams(dimension_semantics=("parallel",)),
    )(*args)


# ----------------------------------------------------------------------------
# Glue (plain JAX): weight packing, masks, GN-stat folding, upsample, SN setup
# ----------------------------------------------------------------------------

def pack_conv3x3_weights(w, cpad):
    """(Cout, Cin, 3, 3) -> (Cout, 9*cpad), tap-major columns, zero-padded."""
    cout, cin = w.shape[0], w.shape[1]
    wt = jnp.transpose(w, (0, 2, 3, 1)).reshape(cout, 9, cin)
    if cpad != cin:
        wt = jnp.pad(wt, ((0, 0), (0, 0), (0, cpad - cin)))
    return wt.reshape(cout, 9 * cpad)


def make_border_masks(H, W, dtype=jnp.float32):
    """(9, H*W) 0/1 masks for the 3x3 / pad=1 taps on a flattened image."""
    pos = jnp.arange(H * W, dtype=jnp.int32)
    r = pos // W
    c = pos % W
    rows = []
    for dy in (-1, 0, 1):
        for dx in (-1, 0, 1):
            valid = ((r + dy >= 0) & (r + dy <= H - 1) &
                     (c + dx >= 0) & (c + dx <= W - 1))
            rows.append(valid)
    return jnp.stack(rows, axis=0).astype(dtype)


def fold_groupnorm_affine(stats, count, gamma, beta, groups=4, eps=1e-5):
    """Fold GroupNorm stats + conditional gamma/beta into per-channel scale/shift.

    stats: (N, 2*C, 1): rows [:C] per-channel sum, rows [C:] per-channel sum(x^2)
    over `count` spatial positions.
    """
    N = stats.shape[0]
    C = stats.shape[1] // 2
    s1 = stats[:, :C, 0]
    s2 = stats[:, C:, 0]
    cg = C // groups
    n = float(count * cg)
    gs1 = s1.reshape(N, groups, cg).sum(-1)
    gs2 = s2.reshape(N, groups, cg).sum(-1)
    mean = gs1 / n
    var = jnp.maximum(gs2 / n - mean * mean, 0.0)   # clamp cancellation noise
    inv = jax.lax.rsqrt(var + eps)
    mean_c = jnp.repeat(mean, cg, axis=1)
    inv_c = jnp.repeat(inv, cg, axis=1)
    scale = inv_c * gamma
    shift = beta - mean_c * scale
    return scale.astype(jnp.float32), shift.astype(jnp.float32)


def up2_nearest_nchw(x):
    """Nearest-neighbor 2x upsample, NCHW (matches F.interpolate mode='nearest')."""
    return jnp.repeat(jnp.repeat(x, 2, axis=2), 2, axis=3)


def spectral_normalize(w, key, n_power_iterations=1):
    """Parameter-setup glue reproducing torch spectral_norm's forward rescale."""
    wm = w.reshape(w.shape[0], -1)
    u = jax.random.normal(key, (wm.shape[0],), dtype=jnp.float32)
    u = u / (jnp.linalg.norm(u) + 1e-12)
    v = None
    for _ in range(n_power_iterations):
        v = wm.T @ u
        v = v / (jnp.linalg.norm(v) + 1e-12)
        u = wm @ v
        u = u / (jnp.linalg.norm(u) + 1e-12)
    sigma = u @ (wm @ v)
    return w / sigma


# ----------------------------------------------------------------------------
# GenResidualBlock forward
# ----------------------------------------------------------------------------

def gen_residual_block_forward(x_nchw, labels, params, upsample=True):
    """PyTorch-equivalent forward.  x_nchw: (N, Cin, H, W) f32, labels: (N,) int."""
    x = x_nchw.astype(jnp.float32)
    N, Cin, H, W = x.shape
    Cout = params["w1"].shape[0]

    emb1 = params["embed1"][labels]
    gamma1, beta1 = emb1[:, :Cin], emb1[:, Cin:]
    emb2 = params["embed2"][labels]
    gamma2, beta2 = emb2[:, :Cout], emb2[:, Cout:]

    # --- K1: shortcut 1x1 conv on the pre-upsample grid + GN1 statistics ---
    x_flat = x.reshape(N, Cin, H * W)
    w0_mat = params["w0"].reshape(Cout, Cin)
    x0, st1 = shortcut_and_stats(x_flat, w0_mat, params["b0"])     # x0 bf16
    scale1, shift1 = fold_groupnorm_affine(st1, H * W, gamma1, beta1)

    # GN affine + ReLU commute with nearest upsample -> only the raw input is
    # upsampled (in bf16, halving that HBM round trip); the affine/ReLU are
    # applied inside K2.
    xb = x.astype(jnp.bfloat16)
    xm = up2_nearest_nchw(xb) if upsample else xb
    Ho, Wo = xm.shape[2], xm.shape[3]
    n_out = Ho * Wo
    masks = make_border_masks(Ho, Wo)

    # f32 stacked-operand scratch => 8-row alignment for the tap row groups.
    cpad1 = _round_up(Cin, 8)
    cpad2 = _round_up(Cout, 8)
    w1_mat = pack_conv3x3_weights(params["w1"], cpad1)
    w2_mat = pack_conv3x3_weights(params["w2"], cpad2)

    # --- K2: GN1-affine + ReLU + conv3x3 (one matmul) + bias, emits GN2 stats ---
    h1, st2 = fused_gn_conv3x3(
        xm.reshape(N, Cin, n_out),
        scale1.reshape(N, Cin, 1), shift1.reshape(N, Cin, 1),
        w1_mat, params["b1"], masks,
        W=Wo, emit_stats=True, out_dtype=jnp.bfloat16)
    scale2, shift2 = fold_groupnorm_affine(st2, n_out, gamma2, beta2)

    # Residual on the output grid (upsample the cheap, already-convolved bf16 x0).
    x0_img = x0.reshape(N, Cout, H, W)
    res = up2_nearest_nchw(x0_img) if upsample else x0_img
    res = res.reshape(N, Cout, n_out)

    # --- K3: GN2-affine + ReLU + conv3x3 (one matmul) + bias + residual add ---
    out = fused_gn_conv3x3(
        h1, scale2.reshape(N, Cout, 1), shift2.reshape(N, Cout, 1),
        w2_mat, params["b2"], masks,
        W=Wo, emit_stats=False, res=res, out_dtype=jnp.float32)

    return out.reshape(N, Cout, Ho, Wo)


# ----------------------------------------------------------------------------
# Pure-JAX f32 reference (for correctness check)
# ----------------------------------------------------------------------------

def _ref_conv_nchw(x, w, b, pad):
    y = jax.lax.conv_general_dilated(
        x, w, (1, 1), [(pad, pad), (pad, pad)],
        dimension_numbers=("NCHW", "OIHW", "NCHW"),
        precision=jax.lax.Precision.HIGHEST)
    return y + b[None, :, None, None]


def _ref_gn_affine_nchw(x, gamma, beta, G=4, eps=1e-5):
    N, C, H, W = x.shape
    xr = x.reshape(N, G, C // G, H, W)
    mu = xr.mean(axis=(2, 3, 4), keepdims=True)
    var = ((xr - mu) ** 2).mean(axis=(2, 3, 4), keepdims=True)
    y = ((xr - mu) / jnp.sqrt(var + eps)).reshape(N, C, H, W)
    return gamma[:, :, None, None] * y + beta[:, :, None, None]


def ref_forward(x, labels, p, upsample=True):
    x = x.astype(jnp.float32)
    Cin = x.shape[1]
    Cout = p["w1"].shape[0]
    emb1 = p["embed1"][labels]
    g1, bt1 = emb1[:, :Cin], emb1[:, Cin:]
    emb2 = p["embed2"][labels]
    g2, bt2 = emb2[:, :Cout], emb2[:, Cout:]

    x0 = up2_nearest_nchw(x) if upsample else x
    x0 = _ref_conv_nchw(x0, p["w0"], p["b0"], 0)

    h = jnp.maximum(_ref_gn_affine_nchw(x, g1, bt1), 0.0)
    if upsample:
        h = up2_nearest_nchw(h)
    h = _ref_conv_nchw(h, p["w1"], p["b1"], 1)
    h = jnp.maximum(_ref_gn_affine_nchw(h, g2, bt2), 0.0)
    h = _ref_conv_nchw(h, p["w2"], p["b2"], 1)
    return h + x0


# ----------------------------------------------------------------------------
# Main
# ----------------------------------------------------------------------------

def init_params(key, in_channels, out_channels, num_classes, sn=True):
    ks = jax.random.split(key, 8)
    w1 = 0.1 * jax.random.normal(ks[0], (out_channels, in_channels, 3, 3), jnp.float32)
    w2 = 0.1 * jax.random.normal(ks[1], (out_channels, out_channels, 3, 3), jnp.float32)
    w0 = 0.1 * jax.random.normal(ks[2], (out_channels, in_channels, 1, 1), jnp.float32)
    b1 = 0.05 * jax.random.normal(ks[3], (out_channels,), jnp.float32)
    b2 = 0.05 * jax.random.normal(ks[4], (out_channels,), jnp.float32)
    b0 = 0.05 * jax.random.normal(ks[5], (out_channels,), jnp.float32)
    if sn:
        sk = jax.random.split(ks[6], 3)
        w1 = spectral_normalize(w1, sk[0])
        w2 = spectral_normalize(w2, sk[1])
        w0 = spectral_normalize(w0, sk[2])
    e1 = jnp.concatenate(
        [jnp.ones((num_classes, in_channels)), jnp.zeros((num_classes, in_channels))], axis=1)
    e2 = jnp.concatenate(
        [jnp.ones((num_classes, out_channels)), jnp.zeros((num_classes, out_channels))], axis=1)
    e1 = e1 + 0.1 * jax.random.normal(ks[7], e1.shape, jnp.float32)
    e2 = e2 + 0.1 * jax.random.normal(jax.random.fold_in(ks[7], 1), e2.shape, jnp.float32)
    return {"w0": w0, "b0": b0, "w1": w1, "b1": b1, "w2": w2, "b2": b2,
            "embed1": e1, "embed2": e2}


if __name__ == "__main__":
    N, Cin, Cout, H, W = 2, 4, 8, 16, 16
    num_classes = 10

    key = jax.random.PRNGKey(0)
    kx, kl, kp = jax.random.split(key, 3)
    x = jax.random.normal(kx, (N, Cin, H, W), jnp.float32)
    labels = jax.random.randint(kl, (N,), 0, num_classes)
    params = init_params(kp, Cin, Cout, num_classes, sn=True)

    fwd = jax.jit(functools.partial(gen_residual_block_forward, upsample=True))
    out = jax.block_until_ready(fwd(x, labels, params))
    assert out.shape == (N, Cout, 2 * H, 2 * W), out.shape

    ref = jax.block_until_ready(ref_forward(x, labels, params, upsample=True))
    max_err = float(jnp.max(jnp.abs(out - ref)))
    # bf16 matmul operands + bf16 intermediates/residual => loose tolerance.
    if not jnp.allclose(out, ref, atol=5e-2, rtol=5e-2):
        raise AssertionError(f"Pallas output mismatch vs reference, max_abs_err={max_err}")

    print("KERNEL_OK")
</pallas_src>

<mosaic_0001>
module attributes {stable_mosaic.version = 11 : i64} {
  func.func @_shortcut_stats_kernel(%arg0: i32, %arg1: memref<1x4x256xf32, #tpu.memory_space<vmem>>, %arg2: memref<8x4xbf16, #tpu.memory_space<vmem>>, %arg3: memref<8x1xf32, #tpu.memory_space<vmem>>, %arg4: memref<1x8x256xbf16, #tpu.memory_space<vmem>>, %arg5: memref<1x8x1xf32, #tpu.memory_space<vmem>>) attributes {dimension_semantics = [#tpu.dimension_semantics<parallel>], iteration_bounds = array<i64: 2>, scalar_prefetch = 0 : i64, scratch_operands = 0 : i64, tpu.core_type = #tpu.core_type<tc>, window_params = [{transform_indices = @transform_0, window_bounds = array<i64: 1, 4, 256>}, {pipeline_mode = #tpu.pipeline_mode<synchronous>, transform_indices = @transform_1, window_bounds = array<i64: 8, 4>}, {pipeline_mode = #tpu.pipeline_mode<synchronous>, transform_indices = @transform_2, window_bounds = array<i64: 8, 1>}, {transform_indices = @transform_3, window_bounds = array<i64: 1, 8, 256>}, {transform_indices = @transform_4, window_bounds = array<i64: 1, 8, 1>}]} {
    %c0 = arith.constant 0 : index
    %c0_0 = arith.constant 0 : index
    %c0_1 = arith.constant 0 : index
    %0 = vector.load %arg1[%c0, %c0_0, %c0_1] : memref<1x4x256xf32, #tpu.memory_space<vmem>>, vector<1x4x256xf32>
    %1 = vector.shape_cast %0 : vector<1x4x256xf32> to vector<4x256xf32>
    %c0_2 = arith.constant 0 : index
    %c0_3 = arith.constant 0 : index
    %2 = vector.load %arg2[%c0_2, %c0_3] : memref<8x4xbf16, #tpu.memory_space<vmem>>, vector<8x4xbf16>
    %3 = arith.truncf %1 : vector<4x256xf32> to vector<4x256xbf16>
    %cst = arith.constant dense<0.000000e+00> : vector<8x256xf32>
    %4 = tpu.matmul %2, %3, %cst {dimension_numbers = #tpu.dot_dimension_numbers<[1], [0], [0], [1], [0, 0, 1, 1], [], []>} : vector<8x4xbf16>, vector<4x256xbf16>, vector<8x256xf32> -> vector<8x256xf32>
    %c0_4 = arith.constant 0 : index
    %c0_5 = arith.constant 0 : index
    %5 = vector.load %arg3[%c0_4, %c0_5] : memref<8x1xf32, #tpu.memory_space<vmem>>, vector<8x1xf32>
    %6 = vector.broadcast %5 : vector<8x1xf32> to vector<8x256xf32>
    %7 = arith.addf %4, %6 : vector<8x256xf32>
    %8 = arith.truncf %7 : vector<8x256xf32> to vector<8x256xbf16>
    %c0_6 = arith.constant 0 : index
    %c0_7 = arith.constant 0 : index
    %c0_8 = arith.constant 0 : index
    %9 = vector.load %arg4[%c0_6, %c0_7, %c0_8] : memref<1x8x256xbf16, #tpu.memory_space<vmem>>, vector<1x8x256xbf16>
    %10 = vector.shape_cast %9 : vector<1x8x256xbf16> to vector<8x256xbf16>
    %11 = vector.shape_cast %8 : vector<8x256xbf16> to vector<1x8x256xbf16>
    tpu.vector_store %arg4[%c0_6, %c0_7, %c0_8], %11 {strides = array<i32>} : memref<1x8x256xbf16, #tpu.memory_space<vmem>>, vector<1x8x256xbf16>,
    %cst_9 = arith.constant dense<0.000000e+00> : vector<4xf32>
    %12 = vector.multi_reduction <add>, %1, %cst_9 [1] : vector<4x256xf32> to vector<4xf32>
    %13 = vector.shape_cast %12 : vector<4xf32> to vector<4x1xf32>
    %c0_10 = arith.constant 0 : index
    %c0_11 = arith.constant 0 : index
    %c0_12 = arith.constant 0 : index
    %14 = vector.load %arg5[%c0_10, %c0_11, %c0_12] : memref<1x8x1xf32, #tpu.memory_space<vmem>>, vector<1x4x1xf32>
    %15 = vector.shape_cast %14 : vector<1x4x1xf32> to vector<4x1xf32>
    %16 = vector.shape_cast %13 : vector<4x1xf32> to vector<1x4x1xf32>
    tpu.vector_store %arg5[%c0_10, %c0_11, %c0_12], %16 {strides = array<i32>} : memref<1x8x1xf32, #tpu.memory_space<vmem>>, vector<1x4x1xf32>,
    %17 = arith.mulf %1, %1 : vector<4x256xf32>
    %cst_13 = arith.constant dense<0.000000e+00> : vector<4xf32>
    %18 = vector.multi_reduction <add>, %17, %cst_13 [1] : vector<4x256xf32> to vector<4xf32>
    %19 = vector.shape_cast %18 : vector<4xf32> to vector<4x1xf32>
    %c0_14 = arith.constant 0 : index
    %c4 = arith.constant 4 : index
    %c0_15 = arith.constant 0 : index
    %20 = vector.load %arg5[%c0_14, %c4, %c0_15] : memref<1x8x1xf32, #tpu.memory_space<vmem>>, vector<1x4x1xf32>
    %21 = vector.shape_cast %20 : vector<1x4x1xf32> to vector<4x1xf32>
    %22 = vector.shape_cast %19 : vector<4x1xf32> to vector<1x4x1xf32>
    tpu.vector_store %arg5[%c0_14, %c4, %c0_15], %22 {strides = array<i32>} : memref<1x8x1xf32, #tpu.memory_space<vmem>>, vector<1x4x1xf32>,
    return
  }
  func.func @transform_0(%arg0: i32) -> (i32, i32, i32) {
    %c0_i32 = arith.constant 0 : i32
    %c0_i32_0 = arith.constant 0 : i32
    %c0_i32_1 = arith.constant 0 : i32
    return %arg0, %c0_i32, %c0_i32_0 : i32, i32, i32
  }
  func.func @transform_1(%arg0: i32) -> (i32, i32) {
    %c0_i32 = arith.constant 0 : i32
    %c0_i32_0 = arith.constant 0 : i32
    %c0_i32_1 = arith.constant 0 : i32
    return %c0_i32, %c0_i32_0 : i32, i32
  }
  func.func @transform_2(%arg0: i32) -> (i32, i32) {
    %c0_i32 = arith.constant 0 : i32
    %c0_i32_0 = arith.constant 0 : i32
    %c0_i32_1 = arith.constant 0 : i32
    return %c0_i32, %c0_i32_0 : i32, i32
  }
  func.func @transform_3(%arg0: i32) -> (i32, i32, i32) {
    %c0_i32 = arith.constant 0 : i32
    %c0_i32_0 = arith.constant 0 : i32
    %c0_i32_1 = arith.constant 0 : i32
    return %arg0, %c0_i32, %c0_i32_0 : i32, i32, i32
  }
  func.func @transform_4(%arg0: i32) -> (i32, i32, i32) {
    %c0_i32 = arith.constant 0 : i32
    %c0_i32_0 = arith.constant 0 : i32
    %c0_i32_1 = arith.constant 0 : i32
    return %arg0, %c0_i32, %c0_i32_0 : i32, i32, i32
  }
}

module attributes {stable_mosaic.version = 11 : i64} {
  func.func @_gn_conv_stats_kernel(%arg0: i32, %arg1: memref<1x4x1024xbf16, #tpu.memory_space<vmem>>, %arg2: memref<1x4x1xf32, #tpu.memory_space<vmem>>, %arg3: memref<1x4x1xf32, #tpu.memory_space<vmem>>, %arg4: memref<8x72xbf16, #tpu.memory_space<vmem>>, %arg5: memref<8x1xf32, #tpu.memory_space<vmem>>, %arg6: memref<9x1024xf32, #tpu.memory_space<vmem>>, %arg7: memref<1x8x1024xbf16, #tpu.memory_space<vmem>>, %arg8: memref<1x16x1xf32, #tpu.memory_space<vmem>>, %arg9: memref<72x1024xf32, #tpu.memory_space<vmem>>) attributes {dimension_semantics = [#tpu.dimension_semantics<parallel>], iteration_bounds = array<i64: 2>, scalar_prefetch = 0 : i64, scratch_operands = 1 : i64, tpu.core_type = #tpu.core_type<tc>, window_params = [{transform_indices = @transform_0, window_bounds = array<i64: 1, 4, 1024>}, {transform_indices = @transform_1, window_bounds = array<i64: 1, 4, 1>}, {transform_indices = @transform_2, window_bounds = array<i64: 1, 4, 1>}, {pipeline_mode = #tpu.pipeline_mode<synchronous>, transform_indices = @transform_3, window_bounds = array<i64: 8, 72>}, {pipeline_mode = #tpu.pipeline_mode<synchronous>, transform_indices = @transform_4, window_bounds = array<i64: 8, 1>}, {pipeline_mode = #tpu.pipeline_mode<synchronous>, transform_indices = @transform_5, window_bounds = array<i64: 9, 1024>}, {transform_indices = @transform_6, window_bounds = array<i64: 1, 8, 1024>}, {transform_indices = @transform_7, window_bounds = array<i64: 1, 16, 1>}]} {
    %c0 = arith.constant 0 : index
    %c0_0 = arith.constant 0 : index
    %c0_1 = arith.constant 0 : index
    %0 = vector.load %arg1[%c0, %c0_0, %c0_1] : memref<1x4x1024xbf16, #tpu.memory_space<vmem>>, vector<1x4x1024xbf16>
    %1 = vector.shape_cast %0 : vector<1x4x1024xbf16> to vector<4x1024xbf16>
    %2 = arith.extf %1 : vector<4x1024xbf16> to vector<4x1024xf32>
    %c0_2 = arith.constant 0 : index
    %c0_3 = arith.constant 0 : index
    %c0_4 = arith.constant 0 : index
    %3 = vector.load %arg2[%c0_2, %c0_3, %c0_4] : memref<1x4x1xf32, #tpu.memory_space<vmem>>, vector<1x4x1xf32>
    %4 = vector.shape_cast %3 : vector<1x4x1xf32> to vector<4x1xf32>
    %5 = vector.broadcast %4 : vector<4x1xf32> to vector<4x1024xf32>
    %6 = arith.mulf %2, %5 : vector<4x1024xf32>
    %c0_5 = arith.constant 0 : index
    %c0_6 = arith.constant 0 : index
    %c0_7 = arith.constant 0 : index
    %7 = vector.load %arg3[%c0_5, %c0_6, %c0_7] : memref<1x4x1xf32, #tpu.memory_space<vmem>>, vector<1x4x1xf32>
    %8 = vector.shape_cast %7 : vector<1x4x1xf32> to vector<4x1xf32>
    %9 = vector.broadcast %8 : vector<4x1xf32> to vector<4x1024xf32>
    %10 = arith.addf %6, %9 : vector<4x1024xf32>
    %cst = arith.constant 0.000000e+00 : f32
    %11 = vector.broadcast %cst : f32 to vector<4x1024xf32>
    %12 = arith.maximumf %10, %11 : vector<4x1024xf32>
    %cst_8 = arith.constant 0.000000e+00 : f32
    %13 = vector.broadcast %cst_8 : f32 to vector<72x1024xf32>
    %c0_9 = arith.constant 0 : index
    %c0_10 = arith.constant 0 : index
    %14 = vector.load %arg9[%c0_9, %c0_10] : memref<72x1024xf32, #tpu.memory_space<vmem>>, vector<72x1024xf32>
    tpu.vector_store %arg9[%c0_9, %c0_10], %13 {strides = array<i32>} : memref<72x1024xf32, #tpu.memory_space<vmem>>, vector<72x1024xf32>,
    %c33_i32 = arith.constant 33 : i32
    %15 = tpu.dynamic_rotate %12 by %c33_i32 dim 1 : vector<4x1024xf32>, i32 -> vector<4x1024xf32>
    %c0_11 = arith.constant 0 : index
    %c0_12 = arith.constant 0 : index
    %16 = vector.load %arg6[%c0_11, %c0_12] : memref<9x1024xf32, #tpu.memory_space<vmem>>, vector<1x1024xf32>
    %17 = vector.broadcast %16 : vector<1x1024xf32> to vector<4x1024xf32>
    %18 = arith.mulf %15, %17 : vector<4x1024xf32>
    %c0_13 = arith.constant 0 : index
    %c0_14 = arith.constant 0 : index
    %19 = vector.load %arg9[%c0_13, %c0_14] : memref<72x1024xf32, #tpu.memory_space<vmem>>, vector<4x1024xf32>
    tpu.vector_store %arg9[%c0_13, %c0_14], %18 {strides = array<i32>} : memref<72x1024xf32, #tpu.memory_space<vmem>>, vector<4x1024xf32>,
    %c32_i32 = arith.constant 32 : i32
    %20 = tpu.dynamic_rotate %12 by %c32_i32 dim 1 : vector<4x1024xf32>, i32 -> vector<4x1024xf32>
    %c1 = arith.constant 1 : index
    %c0_15 = arith.constant 0 : index
    %21 = vector.load %arg6[%c1, %c0_15] : memref<9x1024xf32, #tpu.memory_space<vmem>>, vector<1x1024xf32>
    %22 = vector.broadcast %21 : vector<1x1024xf32> to vector<4x1024xf32>
    %23 = arith.mulf %20, %22 : vector<4x1024xf32>
    %c8 = arith.constant 8 : index
    %c0_16 = arith.constant 0 : index
    %24 = vector.load %arg9[%c8, %c0_16] : memref<72x1024xf32, #tpu.memory_space<vmem>>, vector<4x1024xf32>
    tpu.vector_store %arg9[%c8, %c0_16], %23 {strides = array<i32>} : memref<72x1024xf32, #tpu.memory_space<vmem>>, vector<4x1024xf32>,
    %c31_i32 = arith.constant 31 : i32
    %25 = tpu.dynamic_rotate %12 by %c31_i32 dim 1 : vector<4x1024xf32>, i32 -> vector<4x1024xf32>
    %c2 = arith.constant 2 : index
    %c0_17 = arith.constant 0 : index
    %26 = vector.load %arg6[%c2, %c0_17] : memref<9x1024xf32, #tpu.memory_space<vmem>>, vector<1x1024xf32>
    %27 = vector.broadcast %26 : vector<1x1024xf32> to vector<4x1024xf32>
    %28 = arith.mulf %25, %27 : vector<4x1024xf32>
    %c16 = arith.constant 16 : index
    %c0_18 = arith.constant 0 : index
    %29 = vector.load %arg9[%c16, %c0_18] : memref<72x1024xf32, #tpu.memory_space<vmem>>, vector<4x1024xf32>
    tpu.vector_store %arg9[%c16, %c0_18], %28 {strides = array<i32>} : memref<72x1024xf32, #tpu.memory_space<vmem>>, vector<4x1024xf32>,
    %c1_i32 = arith.constant 1 : i32
    %30 = tpu.dynamic_rotate %12 by %c1_i32 dim 1 : vector<4x1024xf32>, i32 -> vector<4x1024xf32>
    %c3 = arith.constant 3 : index
    %c0_19 = arith.constant 0 : index
    %31 = vector.load %arg6[%c3, %c0_19] : memref<9x1024xf32, #tpu.memory_space<vmem>>, vector<1x1024xf32>
    %32 = vector.broadcast %31 : vector<1x1024xf32> to vector<4x1024xf32>
    %33 = arith.mulf %30, %32 : vector<4x1024xf32>
    %c24 = arith.constant 24 : index
    %c0_20 = arith.constant 0 : index
    %34 = vector.load %arg9[%c24, %c0_20] : memref<72x1024xf32, #tpu.memory_space<vmem>>, vector<4x1024xf32>
    tpu.vector_store %arg9[%c24, %c0_20], %33 {strides = array<i32>} : memref<72x1024xf32, #tpu.memory_space<vmem>>, vector<4x1024xf32>,
    %c32 = arith.constant 32 : index
    %c0_21 = arith.constant 0 : index
    %35 = vector.load %arg9[%c32, %c0_21] : memref<72x1024xf32, #tpu.memory_space<vmem>>, vector<4x1024xf32>
    tpu.vector_store %arg9[%c32, %c0_21], %12 {strides = array<i32>} : memref<72x1024xf32, #tpu.memory_space<vmem>>, vector<4x1024xf32>,
    %c1023_i32 = arith.constant 1023 : i32
    %36 = tpu.dynamic_rotate %12 by %c1023_i32 dim 1 : vector<4x1024xf32>, i32 -> vector<4x1024xf32>
    %c5 = arith.constant 5 : index
    %c0_22 = arith.constant 0 : index
    %37 = vector.load %arg6[%c5, %c0_22] : memref<9x1024xf32, #tpu.memory_space<vmem>>, vector<1x1024xf32>
    %38 = vector.broadcast %37 : vector<1x1024xf32> to vector<4x1024xf32>
    %39 = arith.mulf %36, %38 : vector<4x1024xf32>
    %c40 = arith.constant 40 : index
    %c0_23 = arith.constant 0 : index
    %40 = vector.load %arg9[%c40, %c0_23] : memref<72x1024xf32, #tpu.memory_space<vmem>>, vector<4x1024xf32>
    tpu.vector_store %arg9[%c40, %c0_23], %39 {strides = array<i32>} : memref<72x1024xf32, #tpu.memory_space<vmem>>, vector<4x1024xf32>,
    %c993_i32 = arith.constant 993 : i32
    %41 = tpu.dynamic_rotate %12 by %c993_i32 dim 1 : vector<4x1024xf32>, i32 -> vector<4x1024xf32>
    %c6 = arith.constant 6 : index
    %c0_24 = arith.constant 0 : index
    %42 = vector.load %arg6[%c6, %c0_24] : memref<9x1024xf32, #tpu.memory_space<vmem>>, vector<1x1024xf32>
    %43 = vector.broadcast %42 : vector<1x1024xf32> to vector<4x1024xf32>
    %44 = arith.mulf %41, %43 : vector<4x1024xf32>
    %c48 = arith.constant 48 : index
    %c0_25 = arith.constant 0 : index
    %45 = vector.load %arg9[%c48, %c0_25] : memref<72x1024xf32, #tpu.memory_space<vmem>>, vector<4x1024xf32>
    tpu.vector_store %arg9[%c48, %c0_25], %44 {strides = array<i32>} : memref<72x1024xf32, #tpu.memory_space<vmem>>, vector<4x1024xf32>,
    %c992_i32 = arith.constant 992 : i32
    %46 = tpu.dynamic_rotate %12 by %c992_i32 dim 1 : vector<4x1024xf32>, i32 -> vector<4x1024xf32>
    %c7 = arith.constant 7 : index
    %c0_26 = arith.constant 0 : index
    %47 = vector.load %arg6[%c7, %c0_26] : memref<9x1024xf32, #tpu.memory_space<vmem>>, vector<1x1024xf32>
    %48 = vector.broadcast %47 : vector<1x1024xf32> to vector<4x1024xf32>
    %49 = arith.mulf %46, %48 : vector<4x1024xf32>
    %c56 = arith.constant 56 : index
    %c0_27 = arith.constant 0 : index
    %50 = vector.load %arg9[%c56, %c0_27] : memref<72x1024xf32, #tpu.memory_space<vmem>>, vector<4x1024xf32>
    tpu.vector_store %arg9[%c56, %c0_27], %49 {strides = array<i32>} : memref<72x1024xf32, #tpu.memory_space<vmem>>, vector<4x1024xf32>,
    %c991_i32 = arith.constant 991 : i32
    %51 = tpu.dynamic_rotate %12 by %c991_i32 dim 1 : vector<4x1024xf32>, i32 -> vector<4x1024xf32>
    %c8_28 = arith.constant 8 : index
    %c0_29 = arith.constant 0 : index
    %52 = vector.load %arg6[%c8_28, %c0_29] : memref<9x1024xf32, #tpu.memory_space<vmem>>, vector<1x1024xf32>
    %53 = vector.broadcast %52 : vector<1x1024xf32> to vector<4x1024xf32>
    %54 = arith.mulf %51, %53 : vector<4x1024xf32>
    %c64 = arith.constant 64 : index
    %c0_30 = arith.constant 0 : index
    %55 = vector.load %arg9[%c64, %c0_30] : memref<72x1024xf32, #tpu.memory_space<vmem>>, vector<4x1024xf32>
    tpu.vector_store %arg9[%c64, %c0_30], %54 {strides = array<i32>} : memref<72x1024xf32, #tpu.memory_space<vmem>>, vector<4x1024xf32>,
    %c0_31 = arith.constant 0 : index
    %c0_32 = arith.constant 0 : index
    %56 = vector.load %arg4[%c0_31, %c0_32] : memref<8x72xbf16, #tpu.memory_space<vmem>>, vector<8x72xbf16>
    %c0_33 = arith.constant 0 : index
    %c0_34 = arith.constant 0 : index
    %57 = vector.load %arg9[%c0_33, %c0_34] : memref<72x1024xf32, #tpu.memory_space<vmem>>, vector<72x1024xf32>
    %58 = arith.truncf %57 : vector<72x1024xf32> to vector<72x1024xbf16>
    %cst_35 = arith.constant dense<0.000000e+00> : vector<8x1024xf32>
    %59 = tpu.matmul %56, %58, %cst_35 {dimension_numbers = #tpu.dot_dimension_numbers<[1], [0], [0], [1], [0, 0, 1, 1], [], []>} : vector<8x72xbf16>, vector<72x1024xbf16>, vector<8x1024xf32> -> vector<8x1024xf32>
    %c0_36 = arith.constant 0 : index
    %c0_37 = arith.constant 0 : index
    %60 = vector.load %arg5[%c0_36, %c0_37] : memref<8x1xf32, #tpu.memory_space<vmem>>, vector<8x1xf32>
    %61 = vector.broadcast %60 : vector<8x1xf32> to vector<8x1024xf32>
    %62 = arith.addf %59, %61 : vector<8x1024xf32>
    %63 = arith.truncf %62 : vector<8x1024xf32> to vector<8x1024xbf16>
    %c0_38 = arith.constant 0 : index
    %c0_39 = arith.constant 0 : index
    %c0_40 = arith.constant 0 : index
    %64 = vector.load %arg7[%c0_38, %c0_39, %c0_40] : memref<1x8x1024xbf16, #tpu.memory_space<vmem>>, vector<1x8x1024xbf16>
    %65 = vector.shape_cast %64 : vector<1x8x1024xbf16> to vector<8x1024xbf16>
    %66 = vector.shape_cast %63 : vector<8x1024xbf16> to vector<1x8x1024xbf16>
    tpu.vector_store %arg7[%c0_38, %c0_39, %c0_40], %66 {strides = array<i32>} : memref<1x8x1024xbf16, #tpu.memory_space<vmem>>, vector<1x8x1024xbf16>,
    %cst_41 = arith.constant dense<0.000000e+00> : vector<8xf32>
    %67 = vector.multi_reduction <add>, %62, %cst_41 [1] : vector<8x1024xf32> to vector<8xf32>
    %68 = vector.shape_cast %67 : vector<8xf32> to vector<8x1xf32>
    %c0_42 = arith.constant 0 : index
    %c0_43 = arith.constant 0 : index
    %c0_44 = arith.constant 0 : index
    %69 = vector.load %arg8[%c0_42, %c0_43, %c0_44] : memref<1x16x1xf32, #tpu.memory_space<vmem>>, vector<1x8x1xf32>
    %70 = vector.shape_cast %69 : vector<1x8x1xf32> to vector<8x1xf32>
    %71 = vector.shape_cast %68 : vector<8x1xf32> to vector<1x8x1xf32>
    tpu.vector_store %arg8[%c0_42, %c0_43, %c0_44], %71 {strides = array<i32>} : memref<1x16x1xf32, #tpu.memory_space<vmem>>, vector<1x8x1xf32>,
    %72 = arith.mulf %62, %62 : vector<8x1024xf32>
    %cst_45 = arith.constant dense<0.000000e+00> : vector<8xf32>
    %73 = vector.multi_reduction <add>, %72, %cst_45 [1] : vector<8x1024xf32> to vector<8xf32>
    %74 = vector.shape_cast %73 : vector<8xf32> to vector<8x1xf32>
    %c0_46 = arith.constant 0 : index
    %c8_47 = arith.constant 8 : index
    %c0_48 = arith.constant 0 : index
    %75 = vector.load %arg8[%c0_46, %c8_47, %c0_48] : memref<1x16x1xf32, #tpu.memory_space<vmem>>, vector<1x8x1xf32>
    %76 = vector.shape_cast %75 : vector<1x8x1xf32> to vector<8x1xf32>
    %77 = vector.shape_cast %74 : vector<8x1xf32> to vector<1x8x1xf32>
    tpu.vector_store %arg8[%c0_46, %c8_47, %c0_48], %77 {strides = array<i32>} : memref<1x16x1xf32, #tpu.memory_space<vmem>>, vector<1x8x1xf32>,
    return
  }
  func.func @transform_0(%arg0: i32) -> (i32, i32, i32) {
    %c0_i32 = arith.constant 0 : i32
    %c0_i32_0 = arith.constant 0 : i32
    %c0_i32_1 = arith.constant 0 : i32
    return %arg0, %c0_i32, %c0_i32_0 : i32, i32, i32
  }
  func.func @transform_1(%arg0: i32) -> (i32, i32, i32) {
    %c0_i32 = arith.constant 0 : i32
    %c0_i32_0 = arith.constant 0 : i32
    %c0_i32_1 = arith.constant 0 : i32
    return %arg0, %c0_i32, %c0_i32_0 : i32, i32, i32
  }
  func.func @transform_2(%arg0: i32) -> (i32, i32, i32) {
    %c0_i32 = arith.constant 0 : i32
    %c0_i32_0 = arith.constant 0 : i32
    %c0_i32_1 = arith.constant 0 : i32
    return %arg0, %c0_i32, %c0_i32_0 : i32, i32, i32
  }
  func.func @transform_3(%arg0: i32) -> (i32, i32) {
    %c0_i32 = arith.constant 0 : i32
    %c0_i32_0 = arith.constant 0 : i32
    %c0_i32_1 = arith.constant 0 : i32
    return %c0_i32, %c0_i32_0 : i32, i32
  }
  func.func @transform_4(%arg0: i32) -> (i32, i32) {
    %c0_i32 = arith.constant 0 : i32
    %c0_i32_0 = arith.constant 0 : i32
    %c0_i32_1 = arith.constant 0 : i32
    return %c0_i32, %c0_i32_0 : i32, i32
  }
  func.func @transform_5(%arg0: i32) -> (i32, i32) {
    %c0_i32 = arith.constant 0 : i32
    %c0_i32_0 = arith.constant 0 : i32
    %c0_i32_1 = arith.constant 0 : i32
    return %c0_i32, %c0_i32_0 : i32, i32
  }
  func.func @transform_6(%arg0: i32) -> (i32, i32, i32) {
    %c0_i32 = arith.constant 0 : i32
    %c0_i32_0 = arith.constant 0 : i32
    %c0_i32_1 = arith.constant 0 : i32
    return %arg0, %c0_i32, %c0_i32_0 : i32, i32, i32
  }
  func.func @transform_7(%arg0: i32) -> (i32, i32, i32) {
    %c0_i32 = arith.constant 0 : i32
    %c0_i32_0 = arith.constant 0 : i32
    %c0_i32_1 = arith.constant 0 : i32
    return %arg0, %c0_i32, %c0_i32_0 : i32, i32, i32
  }
}

module attributes {stable_mosaic.version = 11 : i64} {
  func.func @_gn_conv_res_kernel(%arg0: i32, %arg1: memref<1x8x1024xbf16, #tpu.memory_space<vmem>>, %arg2: memref<1x8x1xf32, #tpu.memory_space<vmem>>, %arg3: memref<1x8x1xf32, #tpu.memory_space<vmem>>, %arg4: memref<8x72xbf16, #tpu.memory_space<vmem>>, %arg5: memref<8x1xf32, #tpu.memory_space<vmem>>, %arg6: memref<9x1024xf32, #tpu.memory_space<vmem>>, %arg7: memref<1x8x1024xbf16, #tpu.memory_space<vmem>>, %arg8: memref<1x8x1024xf32, #tpu.memory_space<vmem>>, %arg9: memref<72x1024xf32, #tpu.memory_space<vmem>>) attributes {dimension_semantics = [#tpu.dimension_semantics<parallel>], iteration_bounds = array<i64: 2>, scalar_prefetch = 0 : i64, scratch_operands = 1 : i64, tpu.core_type = #tpu.core_type<tc>, window_params = [{transform_indices = @transform_0, window_bounds = array<i64: 1, 8, 1024>}, {transform_indices = @transform_1, window_bounds = array<i64: 1, 8, 1>}, {transform_indices = @transform_2, window_bounds = array<i64: 1, 8, 1>}, {pipeline_mode = #tpu.pipeline_mode<synchronous>, transform_indices = @transform_3, window_bounds = array<i64: 8, 72>}, {pipeline_mode = #tpu.pipeline_mode<synchronous>, transform_indices = @transform_4, window_bounds = array<i64: 8, 1>}, {pipeline_mode = #tpu.pipeline_mode<synchronous>, transform_indices = @transform_5, window_bounds = array<i64: 9, 1024>}, {transform_indices = @transform_6, window_bounds = array<i64: 1, 8, 1024>}, {transform_indices = @transform_7, window_bounds = array<i64: 1, 8, 1024>}]} {
    %c0 = arith.constant 0 : index
    %c0_0 = arith.constant 0 : index
    %c0_1 = arith.constant 0 : index
    %0 = vector.load %arg1[%c0, %c0_0, %c0_1] : memref<1x8x1024xbf16, #tpu.memory_space<vmem>>, vector<1x8x1024xbf16>
    %1 = vector.shape_cast %0 : vector<1x8x1024xbf16> to vector<8x1024xbf16>
    %2 = arith.extf %1 : vector<8x1024xbf16> to vector<8x1024xf32>
    %c0_2 = arith.constant 0 : index
    %c0_3 = arith.constant 0 : index
    %c0_4 = arith.constant 0 : index
    %3 = vector.load %arg2[%c0_2, %c0_3, %c0_4] : memref<1x8x1xf32, #tpu.memory_space<vmem>>, vector<1x8x1xf32>
    %4 = vector.shape_cast %3 : vector<1x8x1xf32> to vector<8x1xf32>
    %5 = vector.broadcast %4 : vector<8x1xf32> to vector<8x1024xf32>
    %6 = arith.mulf %2, %5 : vector<8x1024xf32>
    %c0_5 = arith.constant 0 : index
    %c0_6 = arith.constant 0 : index
    %c0_7 = arith.constant 0 : index
    %7 = vector.load %arg3[%c0_5, %c0_6, %c0_7] : memref<1x8x1xf32, #tpu.memory_space<vmem>>, vector<1x8x1xf32>
    %8 = vector.shape_cast %7 : vector<1x8x1xf32> to vector<8x1xf32>
    %9 = vector.broadcast %8 : vector<8x1xf32> to vector<8x1024xf32>
    %10 = arith.addf %6, %9 : vector<8x1024xf32>
    %cst = arith.constant 0.000000e+00 : f32
    %11 = vector.broadcast %cst : f32 to vector<8x1024xf32>
    %12 = arith.maximumf %10, %11 : vector<8x1024xf32>
    %c33_i32 = arith.constant 33 : i32
    %13 = tpu.dynamic_rotate %12 by %c33_i32 dim 1 : vector<8x1024xf32>, i32 -> vector<8x1024xf32>
    %c0_8 = arith.constant 0 : index
    %c0_9 = arith.constant 0 : index
    %14 = vector.load %arg6[%c0_8, %c0_9] : memref<9x1024xf32, #tpu.memory_space<vmem>>, vector<1x1024xf32>
    %15 = vector.broadcast %14 : vector<1x1024xf32> to vector<8x1024xf32>
    %16 = arith.mulf %13, %15 : vector<8x1024xf32>
    %c0_10 = arith.constant 0 : index
    %c0_11 = arith.constant 0 : index
    %17 = vector.load %arg9[%c0_10, %c0_11] : memref<72x1024xf32, #tpu.memory_space<vmem>>, vector<8x1024xf32>
    tpu.vector_store %arg9[%c0_10, %c0_11], %16 {strides = array<i32>} : memref<72x1024xf32, #tpu.memory_space<vmem>>, vector<8x1024xf32>,
    %c32_i32 = arith.constant 32 : i32
    %18 = tpu.dynamic_rotate %12 by %c32_i32 dim 1 : vector<8x1024xf32>, i32 -> vector<8x1024xf32>
    %c1 = arith.constant 1 : index
    %c0_12 = arith.constant 0 : index
    %19 = vector.load %arg6[%c1, %c0_12] : memref<9x1024xf32, #tpu.memory_space<vmem>>, vector<1x1024xf32>
    %20 = vector.broadcast %19 : vector<1x1024xf32> to vector<8x1024xf32>
    %21 = arith.mulf %18, %20 : vector<8x1024xf32>
    %c8 = arith.constant 8 : index
    %c0_13 = arith.constant 0 : index
    %22 = vector.load %arg9[%c8, %c0_13] : memref<72x1024xf32, #tpu.memory_space<vmem>>, vector<8x1024xf32>
    tpu.vector_store %arg9[%c8, %c0_13], %21 {strides = array<i32>} : memref<72x1024xf32, #tpu.memory_space<vmem>>, vector<8x1024xf32>,
    %c31_i32 = arith.constant 31 : i32
    %23 = tpu.dynamic_rotate %12 by %c31_i32 dim 1 : vector<8x1024xf32>, i32 -> vector<8x1024xf32>
    %c2 = arith.constant 2 : index
    %c0_14 = arith.constant 0 : index
    %24 = vector.load %arg6[%c2, %c0_14] : memref<9x1024xf32, #tpu.memory_space<vmem>>, vector<1x1024xf32>
    %25 = vector.broadcast %24 : vector<1x1024xf32> to vector<8x1024xf32>
    %26 = arith.mulf %23, %25 : vector<8x1024xf32>
    %c16 = arith.constant 16 : index
    %c0_15 = arith.constant 0 : index
    %27 = vector.load %arg9[%c16, %c0_15] : memref<72x1024xf32, #tpu.memory_space<vmem>>, vector<8x1024xf32>
    tpu.vector_store %arg9[%c16, %c0_15], %26 {strides = array<i32>} : memref<72x1024xf32, #tpu.memory_space<vmem>>, vector<8x1024xf32>,
    %c1_i32 = arith.constant 1 : i32
    %28 = tpu.dynamic_rotate %12 by %c1_i32 dim 1 : vector<8x1024xf32>, i32 -> vector<8x1024xf32>
    %c3 = arith.constant 3 : index
    %c0_16 = arith.constant 0 : index
    %29 = vector.load %arg6[%c3, %c0_16] : memref<9x1024xf32, #tpu.memory_space<vmem>>, vector<1x1024xf32>
    %30 = vector.broadcast %29 : vector<1x1024xf32> to vector<8x1024xf32>
    %31 = arith.mulf %28, %30 : vector<8x1024xf32>
    %c24 = arith.constant 24 : index
    %c0_17 = arith.constant 0 : index
    %32 = vector.load %arg9[%c24, %c0_17] : memref<72x1024xf32, #tpu.memory_space<vmem>>, vector<8x1024xf32>
    tpu.vector_store %arg9[%c24, %c0_17], %31 {strides = array<i32>} : memref<72x1024xf32, #tpu.memory_space<vmem>>, vector<8x1024xf32>,
    %c32 = arith.constant 32 : index
    %c0_18 = arith.constant 0 : index
    %33 = vector.load %arg9[%c32, %c0_18] : memref<72x1024xf32, #tpu.memory_space<vmem>>, vector<8x1024xf32>
    tpu.vector_store %arg9[%c32, %c0_18], %12 {strides = array<i32>} : memref<72x1024xf32, #tpu.memory_space<vmem>>, vector<8x1024xf32>,
    %c1023_i32 = arith.constant 1023 : i32
    %34 = tpu.dynamic_rotate %12 by %c1023_i32 dim 1 : vector<8x1024xf32>, i32 -> vector<8x1024xf32>
    %c5 = arith.constant 5 : index
    %c0_19 = arith.constant 0 : index
    %35 = vector.load %arg6[%c5, %c0_19] : memref<9x1024xf32, #tpu.memory_space<vmem>>, vector<1x1024xf32>
    %36 = vector.broadcast %35 : vector<1x1024xf32> to vector<8x1024xf32>
    %37 = arith.mulf %34, %36 : vector<8x1024xf32>
    %c40 = arith.constant 40 : index
    %c0_20 = arith.constant 0 : index
    %38 = vector.load %arg9[%c40, %c0_20] : memref<72x1024xf32, #tpu.memory_space<vmem>>, vector<8x1024xf32>
    tpu.vector_store %arg9[%c40, %c0_20], %37 {strides = array<i32>} : memref<72x1024xf32, #tpu.memory_space<vmem>>, vector<8x1024xf32>,
    %c993_i32 = arith.constant 993 : i32
    %39 = tpu.dynamic_rotate %12 by %c993_i32 dim 1 : vector<8x1024xf32>, i32 -> vector<8x1024xf32>
    %c6 = arith.constant 6 : index
    %c0_21 = arith.constant 0 : index
    %40 = vector.load %arg6[%c6, %c0_21] : memref<9x1024xf32, #tpu.memory_space<vmem>>, vector<1x1024xf32>
    %41 = vector.broadcast %40 : vector<1x1024xf32> to vector<8x1024xf32>
    %42 = arith.mulf %39, %41 : vector<8x1024xf32>
    %c48 = arith.constant 48 : index
    %c0_22 = arith.constant 0 : index
    %43 = vector.load %arg9[%c48, %c0_22] : memref<72x1024xf32, #tpu.memory_space<vmem>>, vector<8x1024xf32>
    tpu.vector_store %arg9[%c48, %c0_22], %42 {strides = array<i32>} : memref<72x1024xf32, #tpu.memory_space<vmem>>, vector<8x1024xf32>,
    %c992_i32 = arith.constant 992 : i32
    %44 = tpu.dynamic_rotate %12 by %c992_i32 dim 1 : vector<8x1024xf32>, i32 -> vector<8x1024xf32>
    %c7 = arith.constant 7 : index
    %c0_23 = arith.constant 0 : index
    %45 = vector.load %arg6[%c7, %c0_23] : memref<9x1024xf32, #tpu.memory_space<vmem>>, vector<1x1024xf32>
    %46 = vector.broadcast %45 : vector<1x1024xf32> to vector<8x1024xf32>
    %47 = arith.mulf %44, %46 : vector<8x1024xf32>
    %c56 = arith.constant 56 : index
    %c0_24 = arith.constant 0 : index
    %48 = vector.load %arg9[%c56, %c0_24] : memref<72x1024xf32, #tpu.memory_space<vmem>>, vector<8x1024xf32>
    tpu.vector_store %arg9[%c56, %c0_24], %47 {strides = array<i32>} : memref<72x1024xf32, #tpu.memory_space<vmem>>, vector<8x1024xf32>,
    %c991_i32 = arith.constant 991 : i32
    %49 = tpu.dynamic_rotate %12 by %c991_i32 dim 1 : vector<8x1024xf32>, i32 -> vector<8x1024xf32>
    %c8_25 = arith.constant 8 : index
    %c0_26 = arith.constant 0 : index
    %50 = vector.load %arg6[%c8_25, %c0_26] : memref<9x1024xf32, #tpu.memory_space<vmem>>, vector<1x1024xf32>
    %51 = vector.broadcast %50 : vector<1x1024xf32> to vector<8x1024xf32>
    %52 = arith.mulf %49, %51 : vector<8x1024xf32>
    %c64 = arith.constant 64 : index
    %c0_27 = arith.constant 0 : index
    %53 = vector.load %arg9[%c64, %c0_27] : memref<72x1024xf32, #tpu.memory_space<vmem>>, vector<8x1024xf32>
    tpu.vector_store %arg9[%c64, %c0_27], %52 {strides = array<i32>} : memref<72x1024xf32, #tpu.memory_space<vmem>>, vector<8x1024xf32>,
    %c0_28 = arith.constant 0 : index
    %c0_29 = arith.constant 0 : index
    %54 = vector.load %arg4[%c0_28, %c0_29] : memref<8x72xbf16, #tpu.memory_space<vmem>>, vector<8x72xbf16>
    %c0_30 = arith.constant 0 : index
    %c0_31 = arith.constant 0 : index
    %55 = vector.load %arg9[%c0_30, %c0_31] : memref<72x1024xf32, #tpu.memory_space<vmem>>, vector<72x1024xf32>
    %56 = arith.truncf %55 : vector<72x1024xf32> to vector<72x1024xbf16>
    %cst_32 = arith.constant dense<0.000000e+00> : vector<8x1024xf32>
    %57 = tpu.matmul %54, %56, %cst_32 {dimension_numbers = #tpu.dot_dimension_numbers<[1], [0], [0], [1], [0, 0, 1, 1], [], []>} : vector<8x72xbf16>, vector<72x1024xbf16>, vector<8x1024xf32> -> vector<8x1024xf32>
    %c0_33 = arith.constant 0 : index
    %c0_34 = arith.constant 0 : index
    %58 = vector.load %arg5[%c0_33, %c0_34] : memref<8x1xf32, #tpu.memory_space<vmem>>, vector<8x1xf32>
    %59 = vector.broadcast %58 : vector<8x1xf32> to vector<8x1024xf32>
    %60 = arith.addf %57, %59 : vector<8x1024xf32>
    %c0_35 = arith.constant 0 : index
    %c0_36 = arith.constant 0 : index
    %c0_37 = arith.constant 0 : index
    %61 = vector.load %arg7[%c0_35, %c0_36, %c0_37] : memref<1x8x1024xbf16, #tpu.memory_space<vmem>>, vector<1x8x1024xbf16>
    %62 = vector.shape_cast %61 : vector<1x8x1024xbf16> to vector<8x1024xbf16>
    %63 = arith.extf %62 : vector<8x1024xbf16> to vector<8x1024xf32>
    %64 = arith.addf %60, %63 : vector<8x1024xf32>
    %c0_38 = arith.constant 0 : index
    %c0_39 = arith.constant 0 : index
    %c0_40 = arith.constant 0 : index
    %65 = vector.load %arg8[%c0_38, %c0_39, %c0_40] : memref<1x8x1024xf32, #tpu.memory_space<vmem>>, vector<1x8x1024xf32>
    %66 = vector.shape_cast %65 : vector<1x8x1024xf32> to vector<8x1024xf32>
    %67 = vector.shape_cast %64 : vector<8x1024xf32> to vector<1x8x1024xf32>
    tpu.vector_store %arg8[%c0_38, %c0_39, %c0_40], %67 {strides = array<i32>} : memref<1x8x1024xf32, #tpu.memory_space<vmem>>, vector<1x8x1024xf32>,
    return
  }
  func.func @transform_0(%arg0: i32) -> (i32, i32, i32) {
    %c0_i32 = arith.constant 0 : i32
    %c0_i32_0 = arith.constant 0 : i32
    %c0_i32_1 = arith.constant 0 : i32
    return %arg0, %c0_i32, %c0_i32_0 : i32, i32, i32
  }
  func.func @transform_1(%arg0: i32) -> (i32, i32, i32) {
    %c0_i32 = arith.constant 0 : i32
    %c0_i32_0 = arith.constant 0 : i32
    %c0_i32_1 = arith.constant 0 : i32
    return %arg0, %c0_i32, %c0_i32_0 : i32, i32, i32
  }
  func.func @transform_2(%arg0: i32) -> (i32, i32, i32) {
    %c0_i32 = arith.constant 0 : i32
    %c0_i32_0 = arith.constant 0 : i32
    %c0_i32_1 = arith.constant 0 : i32
    return %arg0, %c0_i32, %c0_i32_0 : i32, i32, i32
  }
  func.func @transform_3(%arg0: i32) -> (i32, i32) {
    %c0_i32 = arith.constant 0 : i32
    %c0_i32_0 = arith.constant 0 : i32
    %c0_i32_1 = arith.constant 0 : i32
    return %c0_i32, %c0_i32_0 : i32, i32
  }
  func.func @transform_4(%arg0: i32) -> (i32, i32) {
    %c0_i32 = arith.constant 0 : i32
    %c0_i32_0 = arith.constant 0 : i32
    %c0_i32_1 = arith.constant 0 : i32
    return %c0_i32, %c0_i32_0 : i32, i32
  }
  func.func @transform_5(%arg0: i32) -> (i32, i32) {
    %c0_i32 = arith.constant 0 : i32
    %c0_i32_0 = arith.constant 0 : i32
    %c0_i32_1 = arith.constant 0 : i32
    return %c0_i32, %c0_i32_0 : i32, i32
  }
  func.func @transform_6(%arg0: i32) -> (i32, i32, i32) {
    %c0_i32 = arith.constant 0 : i32
    %c0_i32_0 = arith.constant 0 : i32
    %c0_i32_1 = arith.constant 0 : i32
    return %arg0, %c0_i32, %c0_i32_0 : i32, i32, i32
  }
  func.func @transform_7(%arg0: i32) -> (i32, i32, i32) {
    %c0_i32 = arith.constant 0 : i32
    %c0_i32_0 = arith.constant 0 : i32
    %c0_i32_1 = arith.constant 0 : i32
    return %arg0, %c0_i32, %c0_i32_0 : i32, i32, i32
  }
}

</mosaic_0001>

<llo_original>
// kernel: gen_residual_block_forward.3
$region0: #{gen_residual_block_forward.3}
  #allocation0 [shape = 'u32[]', space=smem, size = 0x4, offset = 0x4, fixed_abs, tag = 'smem constant byte address 0x4 - core index']
  #allocation1 [shape = 'u32[144,128]{1,0:T(1,128)}', space=vmem, size = 0x12000, scoped, tag = 'internal scratch']
  %s0 = inlined_call_operand.vmem [shape: f32[2,4,256], index: 0, kind: input, shape index: {}]
  %s1 = inlined_call_operand.vmem [shape: bf16[8,4], index: 1, kind: input, shape index: {}]
  %s2 = inlined_call_operand.vmem [shape: f32[8,1], index: 2, kind: input, shape index: {}]
  %s3 = inlined_call_operand.vmem [shape: bf16[2,8,256], index: 3, kind: output, shape index: {0}]
  %s4 = inlined_call_operand.vmem [shape: f32[2,8,1], index: 4, kind: output, shape index: {1}]
  %5 = xla_tuple %s3, %s4
  %s6 = sld [smem:[#allocation0]]
  $region53: #{gen_residual_block_forward.3} parent=0
    _
  %s8 = ssub.s32 1, %s6
  %s9 = scalar_select 0, %s8, %s6
  loop: start=0, step=1, limit=4
  $region2: #{gen_residual_block_forward.3} parent=0 // loop_pre_header
    _
  $region3: #{gen_residual_block_forward.3} parent=0 // loop_header
    %s11 = sphi 0, %s15
    %p12 = scmp.ge.s32.totalorder %s11, 4
    %s21 = sphi 0, %s23
    %s24 = sphi 0, %s21
    %s25 = sphi 0, %s24
    %s41 = sphi 0, %s25
    %s45 = sphi 0, %s45
    %s47 = sphi 0, %s45
    %s48 = sphi 0, %s47
    %s62 = sphi 0, %s48
    %s66 = sphi 0, %s66
    %s68 = sphi 0, %s66
    %s69 = sphi 0, %s68
    %s83 = sphi 0, %s69
    %s89 = sphi 0, %s91
    %s92 = sphi 0, %s89
    %s93 = sphi 0, %s92
    %s109 = sphi 0, %s93
    %s115 = sphi 0, %s117
    %s118 = sphi 0, %s115
    %s119 = sphi 0, %s118
    %s135 = sphi 0, %s119
  $region4: #{gen_residual_block_forward.3} parent=0 // loop_header_branch
    %14 = sbr.rel (%p12) target = $region8
  $region5: #{gen_residual_block_forward.3} parent=0 // loop_body
    %s16 = ssub.s32 %s11, 1
    %s17 = ssub.s32 %s11, 2
    %s18 = sadd.s32 %s11, 1
    %s19 = ssub.s32 %s11, %s18
    %p20 = scmp.eq.s32.totalorder %s19, 0
    %s22 = sadd.s32 %s21, 1
    %s23 = scalar_select %p20, %s21, %s22
    %p26 = pneg %p20
    %p27 = scmp.eq.s32.totalorder %s11, 1
    %p28 = por %p26, %p27
    %p29 = scmp.ne.s32.totalorder %s21, %s24
    %p30 = scmp.eq.s32.totalorder %s11, 0
    %p31 = por %p29, %p30
    %p32 = scmp.ne.s32.totalorder %s21, %s24
    %p33 = scmp.eq.s32.totalorder %s16, 1
    %p34 = por %p32, %p33
    %p35 = scmp.ne.s32.totalorder %s24, %s25
    %p36 = scmp.eq.s32.totalorder %s16, 0
    %p37 = por %p35, %p36
    %p38 = scmp.ne.s32.totalorder %s24, %s25
    %p39 = scmp.eq.s32.totalorder %s17, 1
    %p40 = por %p38, %p39
    %p42 = scmp.ne.s32.totalorder %s25, %s41
    %p43 = scmp.eq.s32.totalorder %s17, 0
    %p44 = por %p42, %p43
    %s46 = sadd.s32 %s45, 1
    %p49 = scmp.eq.s32.totalorder %s11, 1
    %p50 = scmp.ne.s32.totalorder %s45, %s47
    %p51 = scmp.eq.s32.totalorder %s11, 0
    %p52 = por %p50, %p51
    %p53 = scmp.ne.s32.totalorder %s45, %s47
    %p54 = scmp.eq.s32.totalorder %s16, 1
    %p55 = por %p53, %p54
    %p56 = scmp.ne.s32.totalorder %s47, %s48
    %p57 = scmp.eq.s32.totalorder %s16, 0
    %p58 = por %p56, %p57
    %p59 = scmp.ne.s32.totalorder %s47, %s48
    %p60 = scmp.eq.s32.totalorder %s17, 1
    %p61 = por %p59, %p60
    %p63 = scmp.ne.s32.totalorder %s48, %s62
    %p64 = scmp.eq.s32.totalorder %s17, 0
    %p65 = por %p63, %p64
    %s67 = sadd.s32 %s66, 1
    %p70 = scmp.eq.s32.totalorder %s11, 1
    %p71 = scmp.ne.s32.totalorder %s66, %s68
    %p72 = scmp.eq.s32.totalorder %s11, 0
    %p73 = por %p71, %p72
    %p74 = scmp.ne.s32.totalorder %s66, %s68
    %p75 = scmp.eq.s32.totalorder %s16, 1
    %p76 = por %p74, %p75
    %p77 = scmp.ne.s32.totalorder %s68, %s69
    %p78 = scmp.eq.s32.totalorder %s16, 0
    %p79 = por %p77, %p78
    %p80 = scmp.ne.s32.totalorder %s68, %s69
    %p81 = scmp.eq.s32.totalorder %s17, 1
    %p82 = por %p80, %p81
    %p84 = scmp.ne.s32.totalorder %s69, %s83
    %p85 = scmp.eq.s32.totalorder %s17, 0
    %p86 = por %p84, %p85
    %s87 = ssub.s32 %s11, %s18
    %p88 = scmp.eq.s32.totalorder %s87, 0
    %s90 = sadd.s32 %s89, 1
    %s91 = scalar_select %p88, %s89, %s90
    %p94 = pneg %p88
    %p95 = scmp.eq.s32.totalorder %s11, 1
    %p96 = por %p94, %p95
    %p97 = scmp.ne.s32.totalorder %s89, %s92
    %p98 = scmp.eq.s32.totalorder %s11, 0
    %p99 = por %p97, %p98
    %p100 = scmp.ne.s32.totalorder %s89, %s92
    %p101 = scmp.eq.s32.totalorder %s16, 1
    %p102 = por %p100, %p101
    %p103 = scmp.ne.s32.totalorder %s92, %s93
    %p104 = scmp.eq.s32.totalorder %s16, 0
    %p105 = por %p103, %p104
    %p106 = scmp.ne.s32.totalorder %s92, %s93
    %p107 = scmp.eq.s32.totalorder %s17, 1
    %p108 = por %p106, %p107
    %p110 = scmp.ne.s32.totalorder %s93, %s109
    %p111 = scmp.eq.s32.totalorder %s17, 0
    %p112 = por %p110, %p111
    %s113 = ssub.s32 %s11, %s18
    %p114 = scmp.eq.s32.totalorder %s113, 0
    %s116 = sadd.s32 %s115, 1
    %s117 = scalar_select %p114, %s115, %s116
    %p120 = pneg %p114
    %p121 = scmp.eq.s32.totalorder %s11, 1
    %p122 = por %p120, %p121
    %p123 = scmp.ne.s32.totalorder %s115, %s118
    %p124 = scmp.eq.s32.totalorder %s11, 0
    %p125 = por %p123, %p124
    %p126 = scmp.ne.s32.totalorder %s115, %s118
    %p127 = scmp.eq.s32.totalorder %s16, 1
    %p128 = por %p126, %p127
    %p129 = scmp.ne.s32.totalorder %s118, %s119
    %p130 = scmp.eq.s32.totalorder %s16, 0
    %p131 = por %p129, %p130
    %p132 = scmp.ne.s32.totalorder %s118, %s119
    %p133 = scmp.eq.s32.totalorder %s17, 1
    %p134 = por %p132, %p133
    %p136 = scmp.ne.s32.totalorder %s119, %s135
    %p137 = scmp.eq.s32.totalorder %s17, 0
    %p138 = por %p136, %p137
    %p139 = scmp.le.s32.totalorder 1, %s11
    %p140 = scmp.lt.s32.totalorder %s11, 3
    %p141 = pnand %p139, %p140
    %p142 = pneg %p141
    // Predicated region
    $region9: #{gen_residual_block_forward.3} parent=5 // pred_check
      _
    $region10: #{gen_residual_block_forward.3} parent=5 // pred_check_branch
      %144 = sbr.rel (%p141) target = $region12
    $region11: #{gen_residual_block_forward.3} parent=5 // pred_region
      %s145 = ssub.s32 %s11, 1
      // Predicated region
      $region13: #{gen_residual_block_forward.3} parent=11 // pred_check
        %p146 = pneg %p58
      $region14: #{gen_residual_block_forward.3} parent=11 // pred_check_branch
        %148 = sbr.rel (%p146) target = $region16
      $region15: #{gen_residual_block_forward.3} parent=11 // pred_region
        _
      $region16: #{gen_residual_block_forward.3} parent=11 // pred_fallthru
        _
      // Predicated region
      $region17: #{gen_residual_block_forward.3} parent=11 // pred_check
        %p149 = pneg %p79
      $region18: #{gen_residual_block_forward.3} parent=11 // pred_check_branch
        %151 = sbr.rel (%p149) target = $region20
      $region19: #{gen_residual_block_forward.3} parent=11 // pred_region
        _
      $region20: #{gen_residual_block_forward.3} parent=11 // pred_fallthru
        _
    $region12: #{gen_residual_block_forward.3} parent=5 // pred_fallthru
      _
    %p152 = scmp.lt.s32.totalorder %s11, 2
    // Predicated region
    $region21: #{gen_residual_block_forward.3} parent=5 // pred_check
      %p153 = pneg %p152
    $region22: #{gen_residual_block_forward.3} parent=5 // pred_check_branch
      %155 = sbr.rel (%p153) target = $region24
    $region23: #{gen_residual_block_forward.3} parent=5 // pred_region
      // Predicated region
      $region25: #{gen_residual_block_forward.3} parent=23 // pred_check
        %p156 = pneg %p31
      $region26: #{gen_residual_block_forward.3} parent=23 // pred_check_branch
        %158 = sbr.rel (%p156) target = $region28
      $region27: #{gen_residual_block_forward.3} parent=23 // pred_region
        %p159 = scmp.lt.s32.totalorder %s11, 1
        %s160 = scalar_select %p159, %s11, 1
        %s161 = smul.addr %s160, 2
        %s162 = smul.addr %s161, 4
        %s163 = scalar_lea.vmem %s0, %s162
      $region28: #{gen_residual_block_forward.3} parent=23 // pred_fallthru
        _
    $region24: #{gen_residual_block_forward.3} parent=5 // pred_fallthru
      _
    %p164 = scmp.le.s32.totalorder 1, %s11
    %p165 = scmp.lt.s32.totalorder %s11, 3
    %p166 = pnand %p164, %p165
    %p167 = pneg %p166
    // Predicated region
    $region29: #{gen_residual_block_forward.3} parent=5 // pred_check
      _
    $region30: #{gen_residual_block_forward.3} parent=5 // pred_check_branch
      %169 = sbr.rel (%p166) target = $region32
    $region31: #{gen_residual_block_forward.3} parent=5 // pred_region
      %s170 = ssub.s32 %s11, 1
      %p171 = scmp.lt.s32.totalorder %s16, 1
      %s172 = scalar_select %p171, %s16, 1
      %s173 = smul.addr %s172, 2
      %s174 = smul.addr %s173, 4
      %s175 = scalar_lea.vmem %s0, %s174
      %p176 = pneg %p37
      %p177 = pneg %p34
      %p178 = pneg %p58
      %p179 = pneg %p55
      %p180 = pneg %p79
      %p181 = pneg %p76
      %p182 = pneg %p105
      %p183 = pneg %p102
      %p184 = scmp.lt.s32.totalorder %s16, 1
      %s185 = scalar_select %p184, %s16, 1
      %s186 = smul.addr %s185, 2
      %s187 = smul.addr %s186, 4
      %s188 = scalar_lea.vmem %s3, %s187
      %p189 = pneg %p131
      %p190 = pneg %p128
      %p191 = scmp.lt.s32.totalorder %s16, 1
      %s192 = scalar_select %p191, %s16, 1
      %s193 = smul.addr %s192, 8
      %s194 = scalar_lea.vmem %s4, %s193
      %p195 = scmp.lt.s32.totalorder %s16, 1
      %s196 = scalar_select %p195, %s16, 1
      %s197 = smul.addr %s196, 2
      %s198 = smul.addr %s197, 4
      %s199 = scalar_lea.vmem %s0, %s198
      %p200 = scmp.lt.s32.totalorder %s16, 1
      %s201 = scalar_select %p200, %s16, 1
      %s202 = smul.addr %s201, 2
      %s203 = smul.addr %s202, 4
      %s204 = scalar_lea.vmem %s3, %s203
      %p205 = scmp.lt.s32.totalorder %s16, 1
      %s206 = scalar_select %p205, %s16, 1
      %s207 = smul.addr %s206, 8
      %s208 = scalar_lea.vmem %s4, %s207
      %v210 = vld [vmem:[%s199] sm:$0xff]
      %v211 = vld [vmem:[%s1] sm:$0xf]
      %v213 = vcombine.high %v210, %v210
      %v215 = vpack.c.bf16 %v210, %v210
      %v216 = vpack.c.bf16 %v213, %v213
      %v217 = vld [vmem:[%s2] sm:$0xff]
      %219 = vset.pattern.permute.xlu0 0
      %220 = vperm.xlu0 %219, %v217
      %v221 = vpop.permute.xlu0 %220
      %vm223 = vcmask 31744
      %v225 = vsel %vm223, %v211, 0
      %vm227 = vcmask 1041408
      %v229 = vsel %vm227, %v215, 0
      %v232 = vsel %vm227, %v216, 0
      %234 = vmatprep.subr.bf16.mxu0 0
      %235 = vmatpush1.bf16.msra.mxu0 0
      %236 = vmatprep.subr.bf16.mxu0 0
      %237 = vmatpush1.bf16.msra.mxu0 0
      %238 = vmatprep.subr.bf16.mxu0 0
      %239 = vmatpush1.bf16.msra.mxu0 0
      %240 = vmatprep.subr.bf16.mxu0 0
      %241 = vmatpush1.bf16.msra.mxu0 0
      %242 = vmatprep.subr.bf16.mxu0 0
      %243 = vmatpush1.bf16.msra.mxu0 0
      %244 = vmatprep.subr.bf16.mxu0 0
      %245 = vmatpush1.bf16.msra.mxu0 0
      %246 = vmatprep.subr.bf16.mxu0 0
      %247 = vmatpush1.bf16.msra.mxu0 0
      %248 = vmatprep.subr.bf16.mxu0 %v232
      %249 = vmatpush1.bf16.msra.mxu0 %v229
      %250 = vmatprep.subr.bf16.mxu0 0
      %251 = vmatpush2.bf16.msra.mxu0 0
      %252 = vmatprep.subr.bf16.mxu0 0
      %253 = vmatpush2.bf16.msra.mxu0 0
      %254 = vmatprep.subr.bf16.mxu0 0
      %255 = vmatpush2.bf16.msra.mxu0 0
      %256 = vmatprep.subr.bf16.mxu0 0
      %257 = vmatpush2.bf16.msra.mxu0 0
      %258 = vmatprep.subr.bf16.mxu0 0
      %259 = vmatpush2.bf16.msra.mxu0 0
      %260 = vmatprep.subr.bf16.mxu0 0
      %261 = vmatpush2.bf16.msra.mxu0 0
      %262 = vmatprep.subr.bf16.mxu0 0
      %263 = vmatpush2.bf16.msra.mxu0 0
      %264 = vmatprep.subr.bf16.mxu0 0
      %265 = vmatpush2.bf16.msra.mxu0 0
      %266 = vmatprep.mubr.bf16.mxu0 0
      %267 = vmatmul.mubr.bf16.gmra.mxu0 %v225
      %v268 = vpop.f32.mrf.mxu0
      %v269 = vadd.f32 %v221, %v268
      %v270 = vpop.f32.mrf.mxu0
      %v271 = vadd.f32 %v221, %v270
      %v272 = vpop.f32.mrf.mxu0
      %v273 = vpop.f32.mrf.mxu0
      %274 = vdwg.mxu0
      %v275 = vpack.c.bf16 %v269, %v269
      %v276 = vpack.c.bf16 %v271, %v271
      %v279 = vunpack.c.l.b16 %v275
      %v280 = vunpack.c.l.b16 %v276
      %v281 = vpack.c.b16 %v280, %v279
      %283 = vst [vmem:[%s204] sm:$0xff] %v281
      %vm284 = vcmask 1043456
      %v285 = vsel %vm284, %v210, 0.0
      %v286 = vsel %vm284, %v213, 0.0
      %v287 = vadd.f32 %v285, %v286
      %288 = vadd.xlane.f32.xlu0 %v287
      %v289 = vpop.xlane.xlu0 %288
      %vm290 = vcmask 3072
      %291 = vst.msk [vmem:[%s208] sm:$0xf] %vm290, %v289
      %v292 = vmul.f32 %v210, %v210
      %v294 = vcombine.high %v292, %v292
      %v296 = vsel %vm284, %v292, 0.0
      %v297 = vsel %vm284, %v294, 0.0
      %v298 = vadd.f32 %v296, %v297
      %299 = vadd.xlane.f32.xlu0 %v298
      %v300 = vpop.xlane.xlu0 %299
      %301 = vst.msk [vmem:[%s208 + $0x4] sm:$0xf] %vm290, %v300
      %p302 = scmp.lt.s32.totalorder %s16, 1
      %s303 = scalar_select %p302, %s16, 1
      %s304 = smul.addr %s303, 2
      %s305 = smul.addr %s304, 4
      %s306 = scalar_lea.vmem %s3, %s305
      %p307 = scmp.lt.s32.totalorder %s16, 1
      %s308 = scalar_select %p307, %s16, 1
      %s309 = smul.addr %s308, 8
      %s310 = scalar_lea.vmem %s4, %s309
      // Predicated region
      $region33: #{gen_residual_block_forward.3} parent=31 // pred_check
        %p311 = pneg %p102
      $region34: #{gen_residual_block_forward.3} parent=31 // pred_check_branch
        %313 = sbr.rel (%p311) target = $region36
      $region35: #{gen_residual_block_forward.3} parent=31 // pred_region
        _
      $region36: #{gen_residual_block_forward.3} parent=31 // pred_fallthru
        _
      // Predicated region
      $region37: #{gen_residual_block_forward.3} parent=31 // pred_check
        %p314 = pneg %p128
      $region38: #{gen_residual_block_forward.3} parent=31 // pred_check_branch
        %316 = sbr.rel (%p314) target = $region40
      $region39: #{gen_residual_block_forward.3} parent=31 // pred_region
        _
      $region40: #{gen_residual_block_forward.3} parent=31 // pred_fallthru
        _
    $region32: #{gen_residual_block_forward.3} parent=5 // pred_fallthru
      _
    %p317 = scmp.le.s32.totalorder 2, %s11
    // Predicated region
    $region41: #{gen_residual_block_forward.3} parent=5 // pred_check
      %p318 = pneg %p317
    $region42: #{gen_residual_block_forward.3} parent=5 // pred_check_branch
      %320 = sbr.rel (%p318) target = $region44
    $region43: #{gen_residual_block_forward.3} parent=5 // pred_region
      %s321 = ssub.s32 %s11, 2
      // Predicated region
      $region45: #{gen_residual_block_forward.3} parent=43 // pred_check
        %p322 = pneg %p108
      $region46: #{gen_residual_block_forward.3} parent=43 // pred_check_branch
        %324 = sbr.rel (%p322) target = $region48
      $region47: #{gen_residual_block_forward.3} parent=43 // pred_region
        %p325 = scmp.lt.s32.totalorder %s17, 1
        %s326 = scalar_select %p325, %s17, 1
        %s327 = smul.addr %s326, 2
        %s328 = smul.addr %s327, 4
        %s329 = scalar_lea.vmem %s3, %s328
      $region48: #{gen_residual_block_forward.3} parent=43 // pred_fallthru
        _
      // Predicated region
      $region49: #{gen_residual_block_forward.3} parent=43 // pred_check
        %p330 = pneg %p134
      $region50: #{gen_residual_block_forward.3} parent=43 // pred_check_branch
        %332 = sbr.rel (%p330) target = $region52
      $region51: #{gen_residual_block_forward.3} parent=43 // pred_region
        %p333 = scmp.lt.s32.totalorder %s17, 1
        %s334 = scalar_select %p333, %s17, 1
        %s335 = smul.addr %s334, 8
        %s336 = scalar_lea.vmem %s4, %s335
      $region52: #{gen_residual_block_forward.3} parent=43 // pred_fallthru
        _
    $region44: #{gen_residual_block_forward.3} parent=5 // pred_fallthru
      _
  $region6: #{gen_residual_block_forward.3} parent=0 // loop_footer
    %s15 = sadd.s32 1, %s11
  $region7: #{gen_residual_block_forward.3} parent=0 // loop_footer_branch
    %10 = sbr.rel target = $region3
  $region8: #{gen_residual_block_forward.3} parent=0 // loop_exit
    _

// kernel: squeeze.2
$region0: #{squeeze.2}
  %s0 = inlined_call_operand.vmem [shape: f32[2,8], index: 0, kind: input, shape index: {}]
  %s1 = inlined_call_operand.vmem [shape: f32[2,4,2], index: 1, kind: output, shape index: {}]
  $region1: #{squeeze.2} parent=0
    #allocation0 [shape = 'u8[8192]{0}', space=vmem, size = 0x2000, scoped, tag = 'scoped mem for output reshape']
    #allocation1 [shape = 'u8[4096]{0}', space=vmem, size = 0x1000, scoped, tag = 'scoped mem for input reshape']
    %s3 = sshll.u32 1, 2
    %s4 = ssub.s32 %s3, 1
    %v5 = vld [vmem:[%s0] sm:%s4]
    %6 = vst [vmem:[#allocation1] sm:%s4] %v5
    %v7 = vld [vmem:[#allocation1] sm:$0x3]
    %vm8 = vcmask 15360
    %9 = vst.msk [vmem:[#allocation0] ss:$8 sm:$0x3] %vm8, %v7
    %v10 = vld [vmem:[#allocation1] sm:$0x3]
    %11 = vrot.lane.b32.xlu0 %v10, 126
    %v12 = vpop.permute.xlu0 %11
    %vm13 = vcmask 15360
    %s14 = scalar_lea.vmem [#allocation0], 1
    %15 = vst.msk [vmem:[%s14] ss:$8 sm:$0x3] %vm13, %v12
    %v16 = vld [vmem:[#allocation1] sm:$0x3]
    %17 = vrot.lane.b32.xlu0 %v16, 124
    %v18 = vpop.permute.xlu0 %17
    %vm19 = vcmask 15360
    %s20 = scalar_lea.vmem [#allocation0], 2
    %21 = vst.msk [vmem:[%s20] ss:$8 sm:$0x3] %vm19, %v18
    %v22 = vld [vmem:[#allocation1] sm:$0x3]
    %23 = vrot.lane.b32.xlu0 %v22, 122
    %v24 = vpop.permute.xlu0 %23
    %vm25 = vcmask 15360
    %s26 = scalar_lea.vmem [#allocation0], 3
    %27 = vst.msk [vmem:[%s26] ss:$8 sm:$0x3] %vm25, %v24
    %s29 = sshll.u32 1, 4
    %s30 = ssub.s32 %s29, 1
    %v32 = vld [vmem:[#allocation0] sm:%s30]
    %s33 = sshll.u32 1, 4
    %s34 = ssub.s32 %s33, 1
    %35 = vst [vmem:[%s1] sm:%s34] %v32
    %s36 = scalar_lea.vmem [#allocation0], 8
    %v37 = vld [vmem:[%s36] sm:%s30]
    %s38 = sshll.u32 1, 4
    %s39 = ssub.s32 %s38, 1
    %s40 = scalar_lea.vmem %s1, 4
    %41 = vst [vmem:[%s40] sm:%s39] %v37

// kernel: gen_residual_block_forward.4
$region0: #{gen_residual_block_forward.4}
  #allocation0 [shape = 'u32[]', space=smem, size = 0x4, offset = 0x4, fixed_abs, tag = 'smem constant byte address 0x4 - core index']
  #allocation1 [shape = 'u32[144,128]{1,0:T(1,128)}', space=vmem, size = 0x12000, scoped, tag = 'internal scratch']
  #allocation2 [shape = 'f32[72,1024]{1,0:T(8,128)}', space=vmem, size = 0x48000, scoped, tag = 'scratch operand']
  %s0 = inlined_call_operand.vmem [shape: bf16[2,4,1024], index: 0, kind: input, shape index: {}]
  %s1 = inlined_call_operand.vmem [shape: f32[2,4,1], index: 1, kind: input, shape index: {}]
  %s2 = inlined_call_operand.vmem [shape: f32[2,4,1], index: 2, kind: input, shape index: {}]
  %s3 = inlined_call_operand.vmem [shape: bf16[8,72], index: 3, kind: input, shape index: {}]
  %s4 = inlined_call_operand.vmem [shape: f32[8,1], index: 4, kind: input, shape index: {}]
  %s5 = inlined_call_operand.vmem [shape: f32[9,1024], index: 5, kind: input, shape index: {}]
  %s6 = inlined_call_operand.vmem [shape: bf16[2,8,1024], index: 6, kind: output, shape index: {0}]
  %s7 = inlined_call_operand.vmem [shape: f32[2,16,1], index: 7, kind: output, shape index: {1}]
  %8 = xla_tuple %s6, %s7
  %s9 = sld [smem:[#allocation0]]
  $region65: #{gen_residual_block_forward.4} parent=0
    _
  %s11 = ssub.s32 1, %s9
  %s12 = scalar_select 0, %s11, %s9
  loop: start=0, step=1, limit=4
  $region2: #{gen_residual_block_forward.4} parent=0 // loop_pre_header
    _
  $region3: #{gen_residual_block_forward.4} parent=0 // loop_header
    %s14 = sphi 0, %s18
    %p15 = scmp.ge.s32.totalorder %s14, 4
    %s24 = sphi 0, %s26
    %s27 = sphi 0, %s24
    %s28 = sphi 0, %s27
    %s44 = sphi 0, %s28
    %s50 = sphi 0, %s52
    %s53 = sphi 0, %s50
    %s54 = sphi 0, %s53
    %s70 = sphi 0, %s54
    %s76 = sphi 0, %s78
    %s79 = sphi 0, %s76
    %s80 = sphi 0, %s79
    %s96 = sphi 0, %s80
    %s100 = sphi 0, %s100
    %s102 = sphi 0, %s100
    %s103 = sphi 0, %s102
    %s117 = sphi 0, %s103
    %s121 = sphi 0, %s121
    %s123 = sphi 0, %s121
    %s124 = sphi 0, %s123
    %s138 = sphi 0, %s124
    %s142 = sphi 0, %s142
    %s144 = sphi 0, %s142
    %s145 = sphi 0, %s144
    %s159 = sphi 0, %s145
    %s165 = sphi 0, %s167
    %s168 = sphi 0, %s165
    %s169 = sphi 0, %s168
    %s185 = sphi 0, %s169
    %s191 = sphi 0, %s193
    %s194 = sphi 0, %s191
    %s195 = sphi 0, %s194
    %s211 = sphi 0, %s195
  $region4: #{gen_residual_block_forward.4} parent=0 // loop_header_branch
    %17 = sbr.rel (%p15) target = $region8
  $region5: #{gen_residual_block_forward.4} parent=0 // loop_body
    %s19 = ssub.s32 %s14, 1
    %s20 = ssub.s32 %s14, 2
    %s21 = sadd.s32 %s14, 1
    %s22 = ssub.s32 %s14, %s21
    %p23 = scmp.eq.s32.totalorder %s22, 0
    %s25 = sadd.s32 %s24, 1
    %s26 = scalar_select %p23, %s24, %s25
    %p29 = pneg %p23
    %p30 = scmp.eq.s32.totalorder %s14, 1
    %p31 = por %p29, %p30
    %p32 = scmp.ne.s32.totalorder %s24, %s27
    %p33 = scmp.eq.s32.totalorder %s14, 0
    %p34 = por %p32, %p33
    %p35 = scmp.ne.s32.totalorder %s24, %s27
    %p36 = scmp.eq.s32.totalorder %s19, 1
    %p37 = por %p35, %p36
    %p38 = scmp.ne.s32.totalorder %s27, %s28
    %p39 = scmp.eq.s32.totalorder %s19, 0
    %p40 = por %p38, %p39
    %p41 = scmp.ne.s32.totalorder %s27, %s28
    %p42 = scmp.eq.s32.totalorder %s20, 1
    %p43 = por %p41, %p42
    %p45 = scmp.ne.s32.totalorder %s28, %s44
    %p46 = scmp.eq.s32.totalorder %s20, 0
    %p47 = por %p45, %p46
    %s48 = ssub.s32 %s14, %s21
    %p49 = scmp.eq.s32.totalorder %s48, 0
    %s51 = sadd.s32 %s50, 1
    %s52 = scalar_select %p49, %s50, %s51
    %p55 = pneg %p49
    %p56 = scmp.eq.s32.totalorder %s14, 1
    %p57 = por %p55, %p56
    %p58 = scmp.ne.s32.totalorder %s50, %s53
    %p59 = scmp.eq.s32.totalorder %s14, 0
    %p60 = por %p58, %p59
    %p61 = scmp.ne.s32.totalorder %s50, %s53
    %p62 = scmp.eq.s32.totalorder %s19, 1
    %p63 = por %p61, %p62
    %p64 = scmp.ne.s32.totalorder %s53, %s54
    %p65 = scmp.eq.s32.totalorder %s19, 0
    %p66 = por %p64, %p65
    %p67 = scmp.ne.s32.totalorder %s53, %s54
    %p68 = scmp.eq.s32.totalorder %s20, 1
    %p69 = por %p67, %p68
    %p71 = scmp.ne.s32.totalorder %s54, %s70
    %p72 = scmp.eq.s32.totalorder %s20, 0
    %p73 = por %p71, %p72
    %s74 = ssub.s32 %s14, %s21
    %p75 = scmp.eq.s32.totalorder %s74, 0
    %s77 = sadd.s32 %s76, 1
    %s78 = scalar_select %p75, %s76, %s77
    %p81 = pneg %p75
    %p82 = scmp.eq.s32.totalorder %s14, 1
    %p83 = por %p81, %p82
    %p84 = scmp.ne.s32.totalorder %s76, %s79
    %p85 = scmp.eq.s32.totalorder %s14, 0
    %p86 = por %p84, %p85
    %p87 = scmp.ne.s32.totalorder %s76, %s79
    %p88 = scmp.eq.s32.totalorder %s19, 1
    %p89 = por %p87, %p88
    %p90 = scmp.ne.s32.totalorder %s79, %s80
    %p91 = scmp.eq.s32.totalorder %s19, 0
    %p92 = por %p90, %p91
    %p93 = scmp.ne.s32.totalorder %s79, %s80
    %p94 = scmp.eq.s32.totalorder %s20, 1
    %p95 = por %p93, %p94
    %p97 = scmp.ne.s32.totalorder %s80, %s96
    %p98 = scmp.eq.s32.totalorder %s20, 0
    %p99 = por %p97, %p98
    %s101 = sadd.s32 %s100, 1
    %p104 = scmp.eq.s32.totalorder %s14, 1
    %p105 = scmp.ne.s32.totalorder %s100, %s102
    %p106 = scmp.eq.s32.totalorder %s14, 0
    %p107 = por %p105, %p106
    %p108 = scmp.ne.s32.totalorder %s100, %s102
    %p109 = scmp.eq.s32.totalorder %s19, 1
    %p110 = por %p108, %p109
    %p111 = scmp.ne.s32.totalorder %s102, %s103
    %p112 = scmp.eq.s32.totalorder %s19, 0
    %p113 = por %p111, %p112
    %p114 = scmp.ne.s32.totalorder %s102, %s103
    %p115 = scmp.eq.s32.totalorder %s20, 1
    %p116 = por %p114, %p115
    %p118 = scmp.ne.s32.totalorder %s103, %s117
    %p119 = scmp.eq.s32.totalorder %s20, 0
    %p120 = por %p118, %p119
    %s122 = sadd.s32 %s121, 1
    %p125 = scmp.eq.s32.totalorder %s14, 1
    %p126 = scmp.ne.s32.totalorder %s121, %s123
    %p127 = scmp.eq.s32.totalorder %s14, 0
    %p128 = por %p126, %p127
    %p129 = scmp.ne.s32.totalorder %s121, %s123
    %p130 = scmp.eq.s32.totalorder %s19, 1
    %p131 = por %p129, %p130
    %p132 = scmp.ne.s32.totalorder %s123, %s124
    %p133 = scmp.eq.s32.totalorder %s19, 0
    %p134 = por %p132, %p133
    %p135 = scmp.ne.s32.totalorder %s123, %s124
    %p136 = scmp.eq.s32.totalorder %s20, 1
    %p137 = por %p135, %p136
    %p139 = scmp.ne.s32.totalorder %s124, %s138
    %p140 = scmp.eq.s32.totalorder %s20, 0
    %p141 = por %p139, %p140
    %s143 = sadd.s32 %s142, 1
    %p146 = scmp.eq.s32.totalorder %s14, 1
    %p147 = scmp.ne.s32.totalorder %s142, %s144
    %p148 = scmp.eq.s32.totalorder %s14, 0
    %p149 = por %p147, %p148
    %p150 = scmp.ne.s32.totalorder %s142, %s144
    %p151 = scmp.eq.s32.totalorder %s19, 1
    %p152 = por %p150, %p151
    %p153 = scmp.ne.s32.totalorder %s144, %s145
    %p154 = scmp.eq.s32.totalorder %s19, 0
    %p155 = por %p153, %p154
    %p156 = scmp.ne.s32.totalorder %s144, %s145
    %p157 = scmp.eq.s32.totalorder %s20, 1
    %p158 = por %p156, %p157
    %p160 = scmp.ne.s32.totalorder %s145, %s159
    %p161 = scmp.eq.s32.totalorder %s20, 0
    %p162 = por %p160, %p161
    %s163 = ssub.s32 %s14, %s21
    %p164 = scmp.eq.s32.totalorder %s163, 0
    %s166 = sadd.s32 %s165, 1
    %s167 = scalar_select %p164, %s165, %s166
    %p170 = pneg %p164
    %p171 = scmp.eq.s32.totalorder %s14, 1
    %p172 = por %p170, %p171
    %p173 = scmp.ne.s32.totalorder %s165, %s168
    %p174 = scmp.eq.s32.totalorder %s14, 0
    %p175 = por %p173, %p174
    %p176 = scmp.ne.s32.totalorder %s165, %s168
    %p177 = scmp.eq.s32.totalorder %s19, 1
    %p178 = por %p176, %p177
    %p179 = scmp.ne.s32.totalorder %s168, %s169
    %p180 = scmp.eq.s32.totalorder %s19, 0
    %p181 = por %p179, %p180
    %p182 = scmp.ne.s32.totalorder %s168, %s169
    %p183 = scmp.eq.s32.totalorder %s20, 1
    %p184 = por %p182, %p183
    %p186 = scmp.ne.s32.totalorder %s169, %s185
    %p187 = scmp.eq.s32.totalorder %s20, 0
    %p188 = por %p186, %p187
    %s189 = ssub.s32 %s14, %s21
    %p190 = scmp.eq.s32.totalorder %s189, 0
    %s192 = sadd.s32 %s191, 1
    %s193 = scalar_select %p190, %s191, %s192
    %p196 = pneg %p190
    %p197 = scmp.eq.s32.totalorder %s14, 1
    %p198 = por %p196, %p197
    %p199 = scmp.ne.s32.totalorder %s191, %s194
    %p200 = scmp.eq.s32.totalorder %s14, 0
    %p201 = por %p199, %p200
    %p202 = scmp.ne.s32.totalorder %s191, %s194
    %p203 = scmp.eq.s32.totalorder %s19, 1
    %p204 = por %p202, %p203
    %p205 = scmp.ne.s32.totalorder %s194, %s195
    %p206 = scmp.eq.s32.totalorder %s19, 0
    %p207 = por %p205, %p206
    %p208 = scmp.ne.s32.totalorder %s194, %s195
    %p209 = scmp.eq.s32.totalorder %s20, 1
    %p210 = por %p208, %p209
    %p212 = scmp.ne.s32.totalorder %s195, %s211
    %p213 = scmp.eq.s32.totalorder %s20, 0
    %p214 = por %p212, %p213
    %p215 = scmp.le.s32.totalorder 1, %s14
    %p216 = scmp.lt.s32.totalorder %s14, 3
    %p217 = pnand %p215, %p216
    %p218 = pneg %p217
    // Predicated region
    $region9: #{gen_residual_block_forward.4} parent=5 // pred_check
      _
    $region10: #{gen_residual_block_forward.4} parent=5 // pred_check_branch
      %220 = sbr.rel (%p217) target = $region12
    $region11: #{gen_residual_block_forward.4} parent=5 // pred_region
      %s221 = ssub.s32 %s14, 1
      // Predicated region
      $region13: #{gen_residual_block_forward.4} parent=11 // pred_check
        %p222 = pneg %p113
      $region14: #{gen_residual_block_forward.4} parent=11 // pred_check_branch
        %224 = sbr.rel (%p222) target = $region16
      $region15: #{gen_residual_block_forward.4} parent=11 // pred_region
        _
      $region16: #{gen_residual_block_forward.4} parent=11 // pred_fallthru
        _
      // Predicated region
      $region17: #{gen_residual_block_forward.4} parent=11 // pred_check
        %p225 = pneg %p134
      $region18: #{gen_residual_block_forward.4} parent=11 // pred_check_branch
        %227 = sbr.rel (%p225) target = $region20
      $region19: #{gen_residual_block_forward.4} parent=11 // pred_region
        _
      $region20: #{gen_residual_block_forward.4} parent=11 // pred_fallthru
        _
      // Predicated region
      $region21: #{gen_residual_block_forward.4} parent=11 // pred_check
        %p228 = pneg %p155
      $region22: #{gen_residual_block_forward.4} parent=11 // pred_check_branch
        %230 = sbr.rel (%p228) target = $region24
      $region23: #{gen_residual_block_forward.4} parent=11 // pred_region
        _
      $region24: #{gen_residual_block_forward.4} parent=11 // pred_fallthru
        _
    $region12: #{gen_residual_block_forward.4} parent=5 // pred_fallthru
      _
    %p231 = scmp.lt.s32.totalorder %s14, 2
    // Predicated region
    $region25: #{gen_residual_block_forward.4} parent=5 // pred_check
      %p232 = pneg %p231
    $region26: #{gen_residual_block_forward.4} parent=5 // pred_check_branch
      %234 = sbr.rel (%p232) target = $region28
    $region27: #{gen_residual_block_forward.4} parent=5 // pred_region
      // Predicated region
      $region29: #{gen_residual_block_forward.4} parent=27 // pred_check
        %p235 = pneg %p34
      $region30: #{gen_residual_block_forward.4} parent=27 // pred_check_branch
        %237 = sbr.rel (%p235) target = $region32
      $region31: #{gen_residual_block_forward.4} parent=27 // pred_region
        %p238 = scmp.lt.s32.totalorder %s14, 1
        %s239 = scalar_select %p238, %s14, 1
        %s240 = smul.addr %s239, 8
        %s241 = smul.addr %s240, 2
        %s242 = scalar_lea.vmem %s0, %s241
      $region32: #{gen_residual_block_forward.4} parent=27 // pred_fallthru
        _
      // Predicated region
      $region33: #{gen_residual_block_forward.4} parent=27 // pred_check
        %p243 = pneg %p60
      $region34: #{gen_residual_block_forward.4} parent=27 // pred_check_branch
        %245 = sbr.rel (%p243) target = $region36
      $region35: #{gen_residual_block_forward.4} parent=27 // pred_region
        %p246 = scmp.lt.s32.totalorder %s14, 1
        %s247 = scalar_select %p246, %s14, 1
        %s248 = smul.addr %s247, 4
        %s249 = scalar_lea.vmem %s1, %s248
      $region36: #{gen_residual_block_forward.4} parent=27 // pred_fallthru
        _
      // Predicated region
      $region37: #{gen_residual_block_forward.4} parent=27 // pred_check
        %p250 = pneg %p86
      $region38: #{gen_residual_block_forward.4} parent=27 // pred_check_branch
        %252 = sbr.rel (%p250) target = $region40
      $region39: #{gen_residual_block_forward.4} parent=27 // pred_region
        %p253 = scmp.lt.s32.totalorder %s14, 1
        %s254 = scalar_select %p253, %s14, 1
        %s255 = smul.addr %s254, 4
        %s256 = scalar_lea.vmem %s2, %s255
      $region40: #{gen_residual_block_forward.4} parent=27 // pred_fallthru
        _
    $region28: #{gen_residual_block_forward.4} parent=5 // pred_fallthru
      _
    %p257 = scmp.le.s32.totalorder 1, %s14
    %p258 = scmp.lt.s32.totalorder %s14, 3
    %p259 = pnand %p257, %p258
    %p260 = pneg %p259
    // Predicated region
    $region41: #{gen_residual_block_forward.4} parent=5 // pred_check
      _
    $region42: #{gen_residual_block_forward.4} parent=5 // pred_check_branch
      %262 = sbr.rel (%p259) target = $region44
    $region43: #{gen_residual_block_forward.4} parent=5 // pred_region
      %s263 = ssub.s32 %s14, 1
      %p264 = scmp.lt.s32.totalorder %s19, 1
      %s265 = scalar_select %p264, %s19, 1
      %s266 = smul.addr %s265, 8
      %s267 = smul.addr %s266, 2
      %s268 = scalar_lea.vmem %s0, %s267
      %p269 = pneg %p40
      %p270 = pneg %p37
      %p271 = scmp.lt.s32.totalorder %s19, 1
      %s272 = scalar_select %p271, %s19, 1
      %s273 = smul.addr %s272, 4
      %s274 = scalar_lea.vmem %s1, %s273
      %p275 = pneg %p66
      %p276 = pneg %p63
      %p277 = scmp.lt.s32.totalorder %s19, 1
      %s278 = scalar_select %p277, %s19, 1
      %s279 = smul.addr %s278, 4
      %s280 = scalar_lea.vmem %s2, %s279
      %p281 = pneg %p92
      %p282 = pneg %p89
      %p283 = pneg %p113
      %p284 = pneg %p110
      %p285 = pneg %p134
      %p286 = pneg %p131
      %p287 = pneg %p155
      %p288 = pneg %p152
      %p289 = pneg %p181
      %p290 = pneg %p178
      %p291 = scmp.lt.s32.totalorder %s19, 1
      %s292 = scalar_select %p291, %s19, 1
      %s293 = smul.addr %s292, 8
      %s294 = smul.addr %s293, 4
      %s295 = scalar_lea.vmem %s6, %s294
      %p296 = pneg %p207
      %p297 = pneg %p204
      %p298 = scmp.lt.s32.totalorder %s19, 1
      %s299 = scalar_select %p298, %s19, 1
      %s300 = smul.addr %s299, 2
      %s301 = smul.addr %s300, 8
      %s302 = scalar_lea.vmem %s7, %s301
      %p303 = scmp.lt.s32.totalorder %s19, 1
      %s304 = scalar_select %p303, %s19, 1
      %s305 = smul.addr %s304, 8
      %s306 = smul.addr %s305, 2
      %s307 = scalar_lea.vmem %s0, %s306
      %p308 = scmp.lt.s32.totalorder %s19, 1
      %s309 = scalar_select %p308, %s19, 1
      %s310 = smul.addr %s309, 4
      %s311 = scalar_lea.vmem %s1, %s310
      %p312 = scmp.lt.s32.totalorder %s19, 1
      %s313 = scalar_select %p312, %s19, 1
      %s314 = smul.addr %s313, 4
      %s315 = scalar_lea.vmem %s2, %s314
      %p316 = scmp.lt.s32.totalorder %s19, 1
      %s317 = scalar_select %p316, %s19, 1
      %s318 = smul.addr %s317, 8
      %s319 = smul.addr %s318, 4
      %s320 = scalar_lea.vmem %s6, %s319
      %p321 = scmp.lt.s32.totalorder %s19, 1
      %s322 = scalar_select %p321, %s19, 1
      %s323 = smul.addr %s322, 2
      %s324 = smul.addr %s323, 8
      %s325 = scalar_lea.vmem %s7, %s324
      %v327 = vld [vmem:[%s307] sm:$0xff]
      %v328 = vld [vmem:[%s307 + $0x8] sm:$0xff]
      %v329 = vunpack.c.l.bf16 %v327
      %v330 = vunpack.c.h.bf16 %v327
      %v331 = vunpack.c.l.bf16 %v328
      %v332 = vunpack.c.h.bf16 %v328
      %v333 = vld [vmem:[%s311] sm:$0xf]
      %335 = vset.pattern.permute.xlu0 0
      %336 = vperm.xlu0 %335, %v333
      %v337 = vpop.permute.xlu0 %336
      %v339 = vunpack.c.l.s4 839922192
      %v340 = vunpack.c.0.s8 %v339
      %v341 = vlaneseq
      %v342 = vshrl.u32 %v341, 7
      %v343 = vsub.s32 %v340, %v342
      %v344 = vrot.slane %v337, %v343
      %v346 = vmul.f32 %v329, %v344
      %v347 = vmul.f32 %v330, %v344
      %v348 = vmul.f32 %v331, %v344
      %v349 = vmul.f32 %v332, %v344
      %v350 = vld [vmem:[%s315] sm:$0xf]
      %352 = vset.pattern.permute.xlu0 0
      %353 = vperm.xlu0 %352, %v350
      %v354 = vpop.permute.xlu0 %353
      %v356 = vunpack.c.l.s4 839922192
      %v357 = vunpack.c.0.s8 %v356
      %v358 = vlaneseq
      %v359 = vshrl.u32 %v358, 7
      %v360 = vsub.s32 %v357, %v359
      %v361 = vrot.slane %v354, %v360
      %v363 = vadd.f32 %v346, %v361
      %v364 = vadd.f32 %v347, %v361
      %v365 = vadd.f32 %v348, %v361
      %v366 = vadd.f32 %v349, %v361
      %v367 = vmax.f32 %v363, 0.0
      %v368 = vmax.f32 %v364, 0.0
      %v369 = vmax.f32 %v365, 0.0
      %v370 = vmax.f32 %v366, 0.0
      %371 = vst [vmem:[#allocation2] sm:$0xff] 0.0
      %372 = vst [vmem:[#allocation2 + $0x8] sm:$0xff] 0.0
      %373 = vst [vmem:[#allocation2 + $0x10] sm:$0xff] 0.0
      %374 = vst [vmem:[#allocation2 + $0x18] sm:$0xff] 0.0
      %375 = vst [vmem:[#allocation2 + $0x20] sm:$0xff] 0.0
      %376 = vst [vmem:[#allocation2 + $0x28] sm:$0xff] 0.0
      %377 = vst [vmem:[#allocation2 + $0x30] sm:$0xff] 0.0
      %378 = vst [vmem:[#allocation2 + $0x38] sm:$0xff] 0.0
      %379 = vst [vmem:[#allocation2 + $0x40] sm:$0xff] 0.0
      %380 = vst [vmem:[#allocation2 + $0x48] sm:$0xff] 0.0
      %381 = vst [vmem:[#allocation2 + $0x50] sm:$0xff] 0.0
      %382 = vst [vmem:[#allocation2 + $0x58] sm:$0xff] 0.0
      %383 = vst [vmem:[#allocation2 + $0x60] sm:$0xff] 0.0
      %384 = vst [vmem:[#allocation2 + $0x68] sm:$0xff] 0.0
      %385 = vst [vmem:[#allocation2 + $0x70] sm:$0xff] 0.0
      %386 = vst [vmem:[#allocation2 + $0x78] sm:$0xff] 0.0
      %387 = vst [vmem:[#allocation2 + $0x80] sm:$0xff] 0.0
      %388 = vst [vmem:[#allocation2 + $0x88] sm:$0xff] 0.0
      %389 = vst [vmem:[#allocation2 + $0x90] sm:$0xff] 0.0
      %390 = vst [vmem:[#allocation2 + $0x98] sm:$0xff] 0.0
      %391 = vst [vmem:[#allocation2 + $0xa0] sm:$0xff] 0.0
      %392 = vst [vmem:[#allocation2 + $0xa8] sm:$0xff] 0.0
      %393 = vst [vmem:[#allocation2 + $0xb0] sm:$0xff] 0.0
      %394 = vst [vmem:[#allocation2 + $0xb8] sm:$0xff] 0.0
      %395 = vst [vmem:[#allocation2 + $0xc0] sm:$0xff] 0.0
      %396 = vst [vmem:[#allocation2 + $0xc8] sm:$0xff] 0.0
      %397 = vst [vmem:[#allocation2 + $0xd0] sm:$0xff] 0.0
      %398 = vst [vmem:[#allocation2 + $0xd8] sm:$0xff] 0.0
      %399 = vst [vmem:[#allocation2 + $0xe0] sm:$0xff] 0.0
      %400 = vst [vmem:[#allocation2 + $0xe8] sm:$0xff] 0.0
      %401 = vst [vmem:[#allocation2 + $0xf0] sm:$0xff] 0.0
      %402 = vst [vmem:[#allocation2 + $0xf8] sm:$0xff] 0.0
      %403 = vst [vmem:[#allocation2 + $0x100] sm:$0xff] 0.0
      %404 = vst [vmem:[#allocation2 + $0x108] sm:$0xff] 0.0
      %405 = vst [vmem:[#allocation2 + $0x110] sm:$0xff] 0.0
      %406 = vst [vmem:[#allocation2 + $0x118] sm:$0xff] 0.0
      %407 = vst [vmem:[#allocation2 + $0x120] sm:$0xff] 0.0
      %408 = vst [vmem:[#allocation2 + $0x128] sm:$0xff] 0.0
      %409 = vst [vmem:[#allocation2 + $0x130] sm:$0xff] 0.0
      %410 = vst [vmem:[#allocation2 + $0x138] sm:$0xff] 0.0
      %411 = vst [vmem:[#allocation2 + $0x140] sm:$0xff] 0.0
      %412 = vst [vmem:[#allocation2 + $0x148] sm:$0xff] 0.0
      %413 = vst [vmem:[#allocation2 + $0x150] sm:$0xff] 0.0
      %414 = vst [vmem:[#allocation2 + $0x158] sm:$0xff] 0.0
      %415 = vst [vmem:[#allocation2 + $0x160] sm:$0xff] 0.0
      %416 = vst [vmem:[#allocation2 + $0x168] sm:$0xff] 0.0
      %417 = vst [vmem:[#allocation2 + $0x170] sm:$0xff] 0.0
      %418 = vst [vmem:[#allocation2 + $0x178] sm:$0xff] 0.0
      %419 = vst [vmem:[#allocation2 + $0x180] sm:$0xff] 0.0
      %420 = vst [vmem:[#allocation2 + $0x188] sm:$0xff] 0.0
      %421 = vst [vmem:[#allocation2 + $0x190] sm:$0xff] 0.0
      %422 = vst [vmem:[#allocation2 + $0x198] sm:$0xff] 0.0
      %423 = vst [vmem:[#allocation2 + $0x1a0] sm:$0xff] 0.0
      %424 = vst [vmem:[#allocation2 + $0x1a8] sm:$0xff] 0.0
      %425 = vst [vmem:[#allocation2 + $0x1b0] sm:$0xff] 0.0
      %426 = vst [vmem:[#allocation2 + $0x1b8] sm:$0xff] 0.0
      %427 = vst [vmem:[#allocation2 + $0x1c0] sm:$0xff] 0.0
      %428 = vst [vmem:[#allocation2 + $0x1c8] sm:$0xff] 0.0
      %429 = vst [vmem:[#allocation2 + $0x1d0] sm:$0xff] 0.0
      %430 = vst [vmem:[#allocation2 + $0x1d8] sm:$0xff] 0.0
      %431 = vst [vmem:[#allocation2 + $0x1e0] sm:$0xff] 0.0
      %432 = vst [vmem:[#allocation2 + $0x1e8] sm:$0xff] 0.0
      %433 = vst [vmem:[#allocation2 + $0x1f0] sm:$0xff] 0.0
      %434 = vst [vmem:[#allocation2 + $0x1f8] sm:$0xff] 0.0
      %435 = vst [vmem:[#allocation2 + $0x200] sm:$0xff] 0.0
      %436 = vst [vmem:[#allocation2 + $0x208] sm:$0xff] 0.0
      %437 = vst [vmem:[#allocation2 + $0x210] sm:$0xff] 0.0
      %438 = vst [vmem:[#allocation2 + $0x218] sm:$0xff] 0.0
      %439 = vst [vmem:[#allocation2 + $0x220] sm:$0xff] 0.0
      %440 = vst [vmem:[#allocation2 + $0x228] sm:$0xff] 0.0
      %441 = vst [vmem:[#allocation2 + $0x230] sm:$0xff] 0.0
      %442 = vst [vmem:[#allocation2 + $0x238] sm:$0xff] 0.0
      %v447 = vcombine.high %v367, %v367
      %v448 = vcombine.high %v368, %v368
      %v449 = vcombine.high %v369, %v369
      %v450 = vcombine.high %v370, %v370
      %455 = vrot.lane.b32.xlu0 %v367, 33
      %v456 = vpop.permute.xlu0 %455
      %457 = vrot.lane.b32.xlu0 %v447, 33
      %v458 = vpop.permute.xlu0 %457
      %459 = vrot.lane.b32.xlu0 %v368, 33
      %v460 = vpop.permute.xlu0 %459
      %461 = vrot.lane.b32.xlu0 %v448, 33
      %v462 = vpop.permute.xlu0 %461
      %463 = vrot.lane.b32.xlu0 %v369, 33
      %v464 = vpop.permute.xlu0 %463
      %465 = vrot.lane.b32.xlu0 %v449, 33
      %v466 = vpop.permute.xlu0 %465
      %467 = vrot.lane.b32.xlu0 %v370, 33
      %v468 = vpop.permute.xlu0 %467
      %469 = vrot.lane.b32.xlu0 %v450, 33
      %v470 = vpop.permute.xlu0 %469
      %v471 = vlaneseq
      %v472 = vand.u32 %v471, 127
      %vm473 = vcmp.lt.s32.totalorder %v472, 33
      %v474 = vsel %vm473, %v468, %v470
      %v475 = vsel %vm473, %v466, %v468
      %v476 = vsel %vm473, %v464, %v466
      %v477 = vsel %vm473, %v462, %v464
      %v478 = vsel %vm473, %v460, %v462
      %v479 = vsel %vm473, %v458, %v460
      %v480 = vsel %vm473, %v456, %v458
      %v481 = vsel %vm473, %v470, %v456
      %v482 = vld [vmem:[%s5] ss:$8 sm:$0xf]
      %v483 = vld [vmem:[%s5] ss:$8 sm:$0xf0]
      %v484 = vor.u32 %v482, %v483
      %v486 = vlaneseq
      %v487 = vshrl.u32 %v486, 7
      %v488 = vsub.s32 0, %v487
      %v489 = vrot.slane %v484, %v488
      %v490 = vlaneseq
      %v491 = vshrl.u32 %v490, 7
      %v492 = vsub.s32 1, %v491
      %v493 = vrot.slane %v484, %v492
      %v494 = vlaneseq
      %v495 = vshrl.u32 %v494, 7
      %v496 = vsub.s32 2, %v495
      %v497 = vrot.slane %v484, %v496
      %v498 = vlaneseq
      %v499 = vshrl.u32 %v498, 7
      %v500 = vsub.s32 3, %v499
      %v501 = vrot.slane %v484, %v500
      %v502 = vlaneseq
      %v503 = vshrl.u32 %v502, 7
      %v504 = vsub.s32 4, %v503
      %v505 = vrot.slane %v484, %v504
      %v506 = vlaneseq
      %v507 = vshrl.u32 %v506, 7
      %v508 = vsub.s32 5, %v507
      %v509 = vrot.slane %v484, %v508
      %v510 = vlaneseq
      %v511 = vshrl.u32 %v510, 7
      %v512 = vsub.s32 6, %v511
      %v513 = vrot.slane %v484, %v512
      %v514 = vlaneseq
      %v515 = vshrl.u32 %v514, 7
      %v516 = vsub.s32 7, %v515
      %v517 = vrot.slane %v484, %v516
      %v526 = vmul.f32 %v481, %v489
      %v527 = vmul.f32 %v480, %v493
      %v528 = vmul.f32 %v479, %v497
      %v529 = vmul.f32 %v478, %v501
      %v530 = vmul.f32 %v477, %v505
      %v531 = vmul.f32 %v476, %v509
      %v532 = vmul.f32 %v475, %v513
      %v533 = vmul.f32 %v474, %v517
      %534 = vst [vmem:[#allocation2] sm:$0xf] %v526
      %535 = vst [vmem:[#allocation2 + $0x8] sm:$0xf] %v527
      %536 = vst [vmem:[#allocation2 + $0x10] sm:$0xf] %v528
      %537 = vst [vmem:[#allocation2 + $0x18] sm:$0xf] %v529
      %538 = vst [vmem:[#allocation2 + $0x20] sm:$0xf] %v530
      %539 = vst [vmem:[#allocation2 + $0x28] sm:$0xf] %v531
      %540 = vst [vmem:[#allocation2 + $0x30] sm:$0xf] %v532
      %541 = vst [vmem:[#allocation2 + $0x38] sm:$0xf] %v533
      %542 = vrot.lane.b32.xlu0 %v367, 32
      %v543 = vpop.permute.xlu0 %542
      %544 = vrot.lane.b32.xlu0 %v447, 32
      %v545 = vpop.permute.xlu0 %544
      %546 = vrot.lane.b32.xlu0 %v368, 32
      %v547 = vpop.permute.xlu0 %546
      %548 = vrot.lane.b32.xlu0 %v448, 32
      %v549 = vpop.permute.xlu0 %548
      %550 = vrot.lane.b32.xlu0 %v369, 32
      %v551 = vpop.permute.xlu0 %550
      %552 = vrot.lane.b32.xlu0 %v449, 32
      %v553 = vpop.permute.xlu0 %552
      %554 = vrot.lane.b32.xlu0 %v370, 32
      %v555 = vpop.permute.xlu0 %554
      %556 = vrot.lane.b32.xlu0 %v450, 32
      %v557 = vpop.permute.xlu0 %556
      %vm558 = vcmp.lt.s32.totalorder %v472, 32
      %v559 = vsel %vm558, %v555, %v557
      %v560 = vsel %vm558, %v553, %v555
      %v561 = vsel %vm558, %v551, %v553
      %v562 = vsel %vm558, %v549, %v551
      %v563 = vsel %vm558, %v547, %v549
      %v564 = vsel %vm558, %v545, %v547
      %v565 = vsel %vm558, %v543, %v545
      %v566 = vsel %vm558, %v557, %v543
      %s567 = scalar_lea.vmem %s5, 1
      %v568 = vld [vmem:[%s567] ss:$8 sm:$0xf]
      %v569 = vld [vmem:[%s567] ss:$8 sm:$0xf0]
      %v570 = vor.u32 %v568, %v569
      %v572 = vlaneseq
      %v573 = vshrl.u32 %v572, 7
      %v574 = vsub.s32 0, %v573
      %v575 = vrot.slane %v570, %v574
      %v576 = vlaneseq
      %v577 = vshrl.u32 %v576, 7
      %v578 = vsub.s32 1, %v577
      %v579 = vrot.slane %v570, %v578
      %v580 = vlaneseq
      %v581 = vshrl.u32 %v580, 7
      %v582 = vsub.s32 2, %v581
      %v583 = vrot.slane %v570, %v582
      %v584 = vlaneseq
      %v585 = vshrl.u32 %v584, 7
      %v586 = vsub.s32 3, %v585
      %v587 = vrot.slane %v570, %v586
      %v588 = vlaneseq
      %v589 = vshrl.u32 %v588, 7
      %v590 = vsub.s32 4, %v589
      %v591 = vrot.slane %v570, %v590
      %v592 = vlaneseq
      %v593 = vshrl.u32 %v592, 7
      %v594 = vsub.s32 5, %v593
      %v595 = vrot.slane %v570, %v594
      %v596 = vlaneseq
      %v597 = vshrl.u32 %v596, 7
      %v598 = vsub.s32 6, %v597
      %v599 = vrot.slane %v570, %v598
      %v600 = vlaneseq
      %v601 = vshrl.u32 %v600, 7
      %v602 = vsub.s32 7, %v601
      %v603 = vrot.slane %v570, %v602
      %v612 = vmul.f32 %v566, %v575
      %v613 = vmul.f32 %v565, %v579
      %v614 = vmul.f32 %v564, %v583
      %v615 = vmul.f32 %v563, %v587
      %v616 = vmul.f32 %v562, %v591
      %v617 = vmul.f32 %v561, %v595
      %v618 = vmul.f32 %v560, %v599
      %v619 = vmul.f32 %v559, %v603
      %620 = vst [vmem:[#allocation2 + $0x40] sm:$0xf] %v612
      %621 = vst [vmem:[#allocation2 + $0x48] sm:$0xf] %v613
      %622 = vst [vmem:[#allocation2 + $0x50] sm:$0xf] %v614
      %623 = vst [vmem:[#allocation2 + $0x58] sm:$0xf] %v615
      %624 = vst [vmem:[#allocation2 + $0x60] sm:$0xf] %v616
      %625 = vst [vmem:[#allocation2 + $0x68] sm:$0xf] %v617
      %626 = vst [vmem:[#allocation2 + $0x70] sm:$0xf] %v618
      %627 = vst [vmem:[#allocation2 + $0x78] sm:$0xf] %v619
      %628 = vrot.lane.b32.xlu0 %v367, 31
      %v629 = vpop.permute.xlu0 %628
      %630 = vrot.lane.b32.xlu0 %v447, 31
      %v631 = vpop.permute.xlu0 %630
      %632 = vrot.lane.b32.xlu0 %v368, 31
      %v633 = vpop.permute.xlu0 %632
      %634 = vrot.lane.b32.xlu0 %v448, 31
      %v635 = vpop.permute.xlu0 %634
      %636 = vrot.lane.b32.xlu0 %v369, 31
      %v637 = vpop.permute.xlu0 %636
      %638 = vrot.lane.b32.xlu0 %v449, 31
      %v639 = vpop.permute.xlu0 %638
      %640 = vrot.lane.b32.xlu0 %v370, 31
      %v641 = vpop.permute.xlu0 %640
      %642 = vrot.lane.b32.xlu0 %v450, 31
      %v643 = vpop.permute.xlu0 %642
      %vm644 = vcmp.lt.s32.totalorder %v472, 31
      %v645 = vsel %vm644, %v641, %v643
      %v646 = vsel %vm644, %v639, %v641
      %v647 = vsel %vm644, %v637, %v639
      %v648 = vsel %vm644, %v635, %v637
      %v649 = vsel %vm644, %v633, %v635
      %v650 = vsel %vm644, %v631, %v633
      %v651 = vsel %vm644, %v629, %v631
      %v652 = vsel %vm644, %v643, %v629
      %s653 = scalar_lea.vmem %s5, 2
      %v654 = vld [vmem:[%s653] ss:$8 sm:$0xf]
      %v655 = vld [vmem:[%s653] ss:$8 sm:$0xf0]
      %v656 = vor.u32 %v654, %v655
      %v658 = vlaneseq
      %v659 = vshrl.u32 %v658, 7
      %v660 = vsub.s32 0, %v659
      %v661 = vrot.slane %v656, %v660
      %v662 = vlaneseq
      %v663 = vshrl.u32 %v662, 7
      %v664 = vsub.s32 1, %v663
      %v665 = vrot.slane %v656, %v664
      %v666 = vlaneseq
      %v667 = vshrl.u32 %v666, 7
      %v668 = vsub.s32 2, %v667
      %v669 = vrot.slane %v656, %v668
      %v670 = vlaneseq
      %v671 = vshrl.u32 %v670, 7
      %v672 = vsub.s32 3, %v671
      %v673 = vrot.slane %v656, %v672
      %v674 = vlaneseq
      %v675 = vshrl.u32 %v674, 7
      %v676 = vsub.s32 4, %v675
      %v677 = vrot.slane %v656, %v676
      %v678 = vlaneseq
      %v679 = vshrl.u32 %v678, 7
      %v680 = vsub.s32 5, %v679
      %v681 = vrot.slane %v656, %v680
      %v682 = vlaneseq
      %v683 = vshrl.u32 %v682, 7
      %v684 = vsub.s32 6, %v683
      %v685 = vrot.slane %v656, %v684
      %v686 = vlaneseq
      %v687 = vshrl.u32 %v686, 7
      %v688 = vsub.s32 7, %v687
      %v689 = vrot.slane %v656, %v688
      %v698 = vmul.f32 %v652, %v661
      %v699 = vmul.f32 %v651, %v665
      %v700 = vmul.f32 %v650, %v669
      %v701 = vmul.f32 %v649, %v673
      %v702 = vmul.f32 %v648, %v677
      %v703 = vmul.f32 %v647, %v681
      %v704 = vmul.f32 %v646, %v685
      %v705 = vmul.f32 %v645, %v689
      %706 = vst [vmem:[#allocation2 + $0x80] sm:$0xf] %v698
      %707 = vst [vmem:[#allocation2 + $0x88] sm:$0xf] %v699
      %708 = vst [vmem:[#allocation2 + $0x90] sm:$0xf] %v700
      %709 = vst [vmem:[#allocation2 + $0x98] sm:$0xf] %v701
      %710 = vst [vmem:[#allocation2 + $0xa0] sm:$0xf] %v702
      %711 = vst [vmem:[#allocation2 + $0xa8] sm:$0xf] %v703
      %712 = vst [vmem:[#allocation2 + $0xb0] sm:$0xf] %v704
      %713 = vst [vmem:[#allocation2 + $0xb8] sm:$0xf] %v705
      %714 = vrot.lane.b32.xlu0 %v367, 1
      %v715 = vpop.permute.xlu0 %714
      %716 = vrot.lane.b32.xlu0 %v447, 1
      %v717 = vpop.permute.xlu0 %716
      %718 = vrot.lane.b32.xlu0 %v368, 1
      %v719 = vpop.permute.xlu0 %718
      %720 = vrot.lane.b32.xlu0 %v448, 1
      %v721 = vpop.permute.xlu0 %720
      %722 = vrot.lane.b32.xlu0 %v369, 1
      %v723 = vpop.permute.xlu0 %722
      %724 = vrot.lane.b32.xlu0 %v449, 1
      %v725 = vpop.permute.xlu0 %724
      %726 = vrot.lane.b32.xlu0 %v370, 1
      %v727 = vpop.permute.xlu0 %726
      %728 = vrot.lane.b32.xlu0 %v450, 1
      %v729 = vpop.permute.xlu0 %728
      %vm730 = vcmp.lt.s32.totalorder %v472, 1
      %v731 = vsel %vm730, %v727, %v729
      %v732 = vsel %vm730, %v725, %v727
      %v733 = vsel %vm730, %v723, %v725
      %v734 = vsel %vm730, %v721, %v723
      %v735 = vsel %vm730, %v719, %v721
      %v736 = vsel %vm730, %v717, %v719
      %v737 = vsel %vm730, %v715, %v717
      %v738 = vsel %vm730, %v729, %v715
      %s739 = scalar_lea.vmem %s5, 3
      %v740 = vld [vmem:[%s739] ss:$8 sm:$0xf]
      %v741 = vld [vmem:[%s739] ss:$8 sm:$0xf0]
      %v742 = vor.u32 %v740, %v741
      %v744 = vlaneseq
      %v745 = vshrl.u32 %v744, 7
      %v746 = vsub.s32 0, %v745
      %v747 = vrot.slane %v742, %v746
      %v748 = vlaneseq
      %v749 = vshrl.u32 %v748, 7
      %v750 = vsub.s32 1, %v749
      %v751 = vrot.slane %v742, %v750
      %v752 = vlaneseq
      %v753 = vshrl.u32 %v752, 7
      %v754 = vsub.s32 2, %v753
      %v755 = vrot.slane %v742, %v754
      %v756 = vlaneseq
      %v757 = vshrl.u32 %v756, 7
      %v758 = vsub.s32 3, %v757
      %v759 = vrot.slane %v742, %v758
      %v760 = vlaneseq
      %v761 = vshrl.u32 %v760, 7
      %v762 = vsub.s32 4, %v761
      %v763 = vrot.slane %v742, %v762
      %v764 = vlaneseq
      %v765 = vshrl.u32 %v764, 7
      %v766 = vsub.s32 5, %v765
      %v767 = vrot.slane %v742, %v766
      %v768 = vlaneseq
      %v769 = vshrl.u32 %v768, 7
      %v770 = vsub.s32 6, %v769
      %v771 = vrot.slane %v742, %v770
      %v772 = vlaneseq
      %v773 = vshrl.u32 %v772, 7
      %v774 = vsub.s32 7, %v773
      %v775 = vrot.slane %v742, %v774
      %v784 = vmul.f32 %v738, %v747
      %v785 = vmul.f32 %v737, %v751
      %v786 = vmul.f32 %v736, %v755
      %v787 = vmul.f32 %v735, %v759
      %v788 = vmul.f32 %v734, %v763
      %v789 = vmul.f32 %v733, %v767
      %v790 = vmul.f32 %v732, %v771
      %v791 = vmul.f32 %v731, %v775
      %792 = vst [vmem:[#allocation2 + $0xc0] sm:$0xf] %v784
      %793 = vst [vmem:[#allocation2 + $0xc8] sm:$0xf] %v785
      %794 = vst [vmem:[#allocation2 + $0xd0] sm:$0xf] %v786
      %795 = vst [vmem:[#allocation2 + $0xd8] sm:$0xf] %v787
      %796 = vst [vmem:[#allocation2 + $0xe0] sm:$0xf] %v788
      %797 = vst [vmem:[#allocation2 + $0xe8] sm:$0xf] %v789
      %798 = vst [vmem:[#allocation2 + $0xf0] sm:$0xf] %v790
      %799 = vst [vmem:[#allocation2 + $0xf8] sm:$0xf] %v791
      %800 = vst [vmem:[#allocation2 + $0x100] sm:$0xf] %v367
      %801 = vst [vmem:[#allocation2 + $0x108] sm:$0xf] %v447
      %802 = vst [vmem:[#allocation2 + $0x110] sm:$0xf] %v368
      %803 = vst [vmem:[#allocation2 + $0x118] sm:$0xf] %v448
      %804 = vst [vmem:[#allocation2 + $0x120] sm:$0xf] %v369
      %805 = vst [vmem:[#allocation2 + $0x128] sm:$0xf] %v449
      %806 = vst [vmem:[#allocation2 + $0x130] sm:$0xf] %v370
      %807 = vst [vmem:[#allocation2 + $0x138] sm:$0xf] %v450
      %808 = vrot.lane.b32.xlu0 %v367, 127
      %v809 = vpop.permute.xlu0 %808
      %810 = vrot.lane.b32.xlu0 %v447, 127
      %v811 = vpop.permute.xlu0 %810
      %812 = vrot.lane.b32.xlu0 %v368, 127
      %v813 = vpop.permute.xlu0 %812
      %814 = vrot.lane.b32.xlu0 %v448, 127
      %v815 = vpop.permute.xlu0 %814
      %816 = vrot.lane.b32.xlu0 %v369, 127
      %v817 = vpop.permute.xlu0 %816
      %818 = vrot.lane.b32.xlu0 %v449, 127
      %v819 = vpop.permute.xlu0 %818
      %820 = vrot.lane.b32.xlu0 %v370, 127
      %v821 = vpop.permute.xlu0 %820
      %822 = vrot.lane.b32.xlu0 %v450, 127
      %v823 = vpop.permute.xlu0 %822
      %vm824 = vcmp.lt.s32.totalorder %v472, 127
      %v825 = vsel %vm824, %v821, %v823
      %v826 = vsel %vm824, %v819, %v821
      %v827 = vsel %vm824, %v817, %v819
      %v828 = vsel %vm824, %v815, %v817
      %v829 = vsel %vm824, %v813, %v815
      %v830 = vsel %vm824, %v811, %v813
      %v831 = vsel %vm824, %v809, %v811
      %v832 = vsel %vm824, %v823, %v809
      %s833 = scalar_lea.vmem %s5, 5
      %v834 = vld [vmem:[%s833] ss:$8 sm:$0xf]
      %v835 = vld [vmem:[%s833] ss:$8 sm:$0xf0]
      %v836 = vor.u32 %v834, %v835
      %v838 = vlaneseq
      %v839 = vshrl.u32 %v838, 7
      %v840 = vsub.s32 0, %v839
      %v841 = vrot.slane %v836, %v840
      %v842 = vlaneseq
      %v843 = vshrl.u32 %v842, 7
      %v844 = vsub.s32 1, %v843
      %v845 = vrot.slane %v836, %v844
      %v846 = vlaneseq
      %v847 = vshrl.u32 %v846, 7
      %v848 = vsub.s32 2, %v847
      %v849 = vrot.slane %v836, %v848
      %v850 = vlaneseq
      %v851 = vshrl.u32 %v850, 7
      %v852 = vsub.s32 3, %v851
      %v853 = vrot.slane %v836, %v852
      %v854 = vlaneseq
      %v855 = vshrl.u32 %v854, 7
      %v856 = vsub.s32 4, %v855
      %v857 = vrot.slane %v836, %v856
      %v858 = vlaneseq
      %v859 = vshrl.u32 %v858, 7
      %v860 = vsub.s32 5, %v859
      %v861 = vrot.slane %v836, %v860
      %v862 = vlaneseq
      %v863 = vshrl.u32 %v862, 7
      %v864 = vsub.s32 6, %v863
      %v865 = vrot.slane %v836, %v864
      %v866 = vlaneseq
      %v867 = vshrl.u32 %v866, 7
      %v868 = vsub.s32 7, %v867
      %v869 = vrot.slane %v836, %v868
      %v878 = vmul.f32 %v831, %v841
      %v879 = vmul.f32 %v830, %v845
      %v880 = vmul.f32 %v829, %v849
      %v881 = vmul.f32 %v828, %v853
      %v882 = vmul.f32 %v827, %v857
      %v883 = vmul.f32 %v826, %v861
      %v884 = vmul.f32 %v825, %v865
      %v885 = vmul.f32 %v832, %v869
      %886 = vst [vmem:[#allocation2 + $0x140] sm:$0xf] %v878
      %887 = vst [vmem:[#allocation2 + $0x148] sm:$0xf] %v879
      %888 = vst [vmem:[#allocation2 + $0x150] sm:$0xf] %v880
      %889 = vst [vmem:[#allocation2 + $0x158] sm:$0xf] %v881
      %890 = vst [vmem:[#allocation2 + $0x160] sm:$0xf] %v882
      %891 = vst [vmem:[#allocation2 + $0x168] sm:$0xf] %v883
      %892 = vst [vmem:[#allocation2 + $0x170] sm:$0xf] %v884
      %893 = vst [vmem:[#allocation2 + $0x178] sm:$0xf] %v885
      %894 = vrot.lane.b32.xlu0 %v367, 97
      %v895 = vpop.permute.xlu0 %894
      %896 = vrot.lane.b32.xlu0 %v447, 97
      %v897 = vpop.permute.xlu0 %896
      %898 = vrot.lane.b32.xlu0 %v368, 97
      %v899 = vpop.permute.xlu0 %898
      %900 = vrot.lane.b32.xlu0 %v448, 97
      %v901 = vpop.permute.xlu0 %900
      %902 = vrot.lane.b32.xlu0 %v369, 97
      %v903 = vpop.permute.xlu0 %902
      %904 = vrot.lane.b32.xlu0 %v449, 97
      %v905 = vpop.permute.xlu0 %904
      %906 = vrot.lane.b32.xlu0 %v370, 97
      %v907 = vpop.permute.xlu0 %906
      %908 = vrot.lane.b32.xlu0 %v450, 97
      %v909 = vpop.permute.xlu0 %908
      %vm910 = vcmp.lt.s32.totalorder %v472, 97
      %v911 = vsel %vm910, %v907, %v909
      %v912 = vsel %vm910, %v905, %v907
      %v913 = vsel %vm910, %v903, %v905
      %v914 = vsel %vm910, %v901, %v903
      %v915 = vsel %vm910, %v899, %v901
      %v916 = vsel %vm910, %v897, %v899
      %v917 = vsel %vm910, %v895, %v897
      %v918 = vsel %vm910, %v909, %v895
      %s919 = scalar_lea.vmem %s5, 6
      %v920 = vld [vmem:[%s919] ss:$8 sm:$0xf]
      %v921 = vld [vmem:[%s919] ss:$8 sm:$0xf0]
      %v922 = vor.u32 %v920, %v921
      %v924 = vlaneseq
      %v925 = vshrl.u32 %v924, 7
      %v926 = vsub.s32 0, %v925
      %v927 = vrot.slane %v922, %v926
      %v928 = vlaneseq
      %v929 = vshrl.u32 %v928, 7
      %v930 = vsub.s32 1, %v929
      %v931 = vrot.slane %v922, %v930
      %v932 = vlaneseq
      %v933 = vshrl.u32 %v932, 7
      %v934 = vsub.s32 2, %v933
      %v935 = vrot.slane %v922, %v934
      %v936 = vlaneseq
      %v937 = vshrl.u32 %v936, 7
      %v938 = vsub.s32 3, %v937
      %v939 = vrot.slane %v922, %v938
      %v940 = vlaneseq
      %v941 = vshrl.u32 %v940, 7
      %v942 = vsub.s32 4, %v941
      %v943 = vrot.slane %v922, %v942
      %v944 = vlaneseq
      %v945 = vshrl.u32 %v944, 7
      %v946 = vsub.s32 5, %v945
      %v947 = vrot.slane %v922, %v946
      %v948 = vlaneseq
      %v949 = vshrl.u32 %v948, 7
      %v950 = vsub.s32 6, %v949
      %v951 = vrot.slane %v922, %v950
      %v952 = vlaneseq
      %v953 = vshrl.u32 %v952, 7
      %v954 = vsub.s32 7, %v953
      %v955 = vrot.slane %v922, %v954
      %v964 = vmul.f32 %v917, %v927
      %v965 = vmul.f32 %v916, %v931
      %v966 = vmul.f32 %v915, %v935
      %v967 = vmul.f32 %v914, %v939
      %v968 = vmul.f32 %v913, %v943
      %v969 = vmul.f32 %v912, %v947
      %v970 = vmul.f32 %v911, %v951
      %v971 = vmul.f32 %v918, %v955
      %972 = vst [vmem:[#allocation2 + $0x180] sm:$0xf] %v964
      %973 = vst [vmem:[#allocation2 + $0x188] sm:$0xf] %v965
      %974 = vst [vmem:[#allocation2 + $0x190] sm:$0xf] %v966
      %975 = vst [vmem:[#allocation2 + $0x198] sm:$0xf] %v967
      %976 = vst [vmem:[#allocation2 + $0x1a0] sm:$0xf] %v968
      %977 = vst [vmem:[#allocation2 + $0x1a8] sm:$0xf] %v969
      %978 = vst [vmem:[#allocation2 + $0x1b0] sm:$0xf] %v970
      %979 = vst [vmem:[#allocation2 + $0x1b8] sm:$0xf] %v971
      %980 = vrot.lane.b32.xlu0 %v367, 96
      %v981 = vpop.permute.xlu0 %980
      %982 = vrot.lane.b32.xlu0 %v447, 96
      %v983 = vpop.permute.xlu0 %982
      %984 = vrot.lane.b32.xlu0 %v368, 96
      %v985 = vpop.permute.xlu0 %984
      %986 = vrot.lane.b32.xlu0 %v448, 96
      %v987 = vpop.permute.xlu0 %986
      %988 = vrot.lane.b32.xlu0 %v369, 96
      %v989 = vpop.permute.xlu0 %988
      %990 = vrot.lane.b32.xlu0 %v449, 96
      %v991 = vpop.permute.xlu0 %990
      %992 = vrot.lane.b32.xlu0 %v370, 96
      %v993 = vpop.permute.xlu0 %992
      %994 = vrot.lane.b32.xlu0 %v450, 96
      %v995 = vpop.permute.xlu0 %994
      %vm996 = vcmp.lt.s32.totalorder %v472, 96
      %v997 = vsel %vm996, %v993, %v995
      %v998 = vsel %vm996, %v991, %v993
      %v999 = vsel %vm996, %v989, %v991
      %v1000 = vsel %vm996, %v987, %v989
      %v1001 = vsel %vm996, %v985, %v987
      %v1002 = vsel %vm996, %v983, %v985
      %v1003 = vsel %vm996, %v981, %v983
      %v1004 = vsel %vm996, %v995, %v981
      %s1005 = scalar_lea.vmem %s5, 7
      %v1006 = vld [vmem:[%s1005] ss:$8 sm:$0xf]
      %v1007 = vld [vmem:[%s1005] ss:$8 sm:$0xf0]
      %v1008 = vor.u32 %v1006, %v1007
      %v1010 = vlaneseq
      %v1011 = vshrl.u32 %v1010, 7
      %v1012 = vsub.s32 0, %v1011
      %v1013 = vrot.slane %v1008, %v1012
      %v1014 = vlaneseq
      %v1015 = vshrl.u32 %v1014, 7
      %v1016 = vsub.s32 1, %v1015
      %v1017 = vrot.slane %v1008, %v1016
      %v1018 = vlaneseq
      %v1019 = vshrl.u32 %v1018, 7
      %v1020 = vsub.s32 2, %v1019
      %v1021 = vrot.slane %v1008, %v1020
      %v1022 = vlaneseq
      %v1023 = vshrl.u32 %v1022, 7
      %v1024 = vsub.s32 3, %v1023
      %v1025 = vrot.slane %v1008, %v1024
      %v1026 = vlaneseq
      %v1027 = vshrl.u32 %v1026, 7
      %v1028 = vsub.s32 4, %v1027
      %v1029 = vrot.slane %v1008, %v1028
      %v1030 = vlaneseq
      %v1031 = vshrl.u32 %v1030, 7
      %v1032 = vsub.s32 5, %v1031
      %v1033 = vrot.slane %v1008, %v1032
      %v1034 = vlaneseq
      %v1035 = vshrl.u32 %v1034, 7
      %v1036 = vsub.s32 6, %v1035
      %v1037 = vrot.slane %v1008, %v1036
      %v1038 = vlaneseq
      %v1039 = vshrl.u32 %v1038, 7
      %v1040 = vsub.s32 7, %v1039
      %v1041 = vrot.slane %v1008, %v1040
      %v1050 = vmul.f32 %v1003, %v1013
      %v1051 = vmul.f32 %v1002, %v1017
      %v1052 = vmul.f32 %v1001, %v1021
      %v1053 = vmul.f32 %v1000, %v1025
      %v1054 = vmul.f32 %v999, %v1029
      %v1055 = vmul.f32 %v998, %v1033
      %v1056 = vmul.f32 %v997, %v1037
      %v1057 = vmul.f32 %v1004, %v1041
      %1058 = vst [vmem:[#allocation2 + $0x1c0] sm:$0xf] %v1050
      %1059 = vst [vmem:[#allocation2 + $0x1c8] sm:$0xf] %v1051
      %1060 = vst [vmem:[#allocation2 + $0x1d0] sm:$0xf] %v1052
      %1061 = vst [vmem:[#allocation2 + $0x1d8] sm:$0xf] %v1053
      %1062 = vst [vmem:[#allocation2 + $0x1e0] sm:$0xf] %v1054
      %1063 = vst [vmem:[#allocation2 + $0x1e8] sm:$0xf] %v1055
      %1064 = vst [vmem:[#allocation2 + $0x1f0] sm:$0xf] %v1056
      %1065 = vst [vmem:[#allocation2 + $0x1f8] sm:$0xf] %v1057
      %1066 = vrot.lane.b32.xlu0 %v367, 95
      %v1067 = vpop.permute.xlu0 %1066
      %1068 = vrot.lane.b32.xlu0 %v447, 95
      %v1069 = vpop.permute.xlu0 %1068
      %1070 = vrot.lane.b32.xlu0 %v368, 95
      %v1071 = vpop.permute.xlu0 %1070
      %1072 = vrot.lane.b32.xlu0 %v448, 95
      %v1073 = vpop.permute.xlu0 %1072
      %1074 = vrot.lane.b32.xlu0 %v369, 95
      %v1075 = vpop.permute.xlu0 %1074
      %1076 = vrot.lane.b32.xlu0 %v449, 95
      %v1077 = vpop.permute.xlu0 %1076
      %1078 = vrot.lane.b32.xlu0 %v370, 95
      %v1079 = vpop.permute.xlu0 %1078
      %1080 = vrot.lane.b32.xlu0 %v450, 95
      %v1081 = vpop.permute.xlu0 %1080
      %vm1082 = vcmp.lt.s32.totalorder %v472, 95
      %v1083 = vsel %vm1082, %v1079, %v1081
      %v1084 = vsel %vm1082, %v1077, %v1079
      %v1085 = vsel %vm1082, %v1075, %v1077
      %v1086 = vsel %vm1082, %v1073, %v1075
      %v1087 = vsel %vm1082, %v1071, %v1073
      %v1088 = vsel %vm1082, %v1069, %v1071
      %v1089 = vsel %vm1082, %v1067, %v1069
      %v1090 = vsel %vm1082, %v1081, %v1067
      %s1091 = scalar_lea.vmem %s5, 64
      %v1092 = vld [vmem:[%s1091] ss:$8 sm:$0xf]
      %v1093 = vld [vmem:[%s1091] ss:$8 sm:$0xf0]
      %v1094 = vor.u32 %v1092, %v1093
      %v1096 = vlaneseq
      %v1097 = vshrl.u32 %v1096, 7
      %v1098 = vsub.s32 0, %v1097
      %v1099 = vrot.slane %v1094, %v1098
      %v1100 = vlaneseq
      %v1101 = vshrl.u32 %v1100, 7
      %v1102 = vsub.s32 1, %v1101
      %v1103 = vrot.slane %v1094, %v1102
      %v1104 = vlaneseq
      %v1105 = vshrl.u32 %v1104, 7
      %v1106 = vsub.s32 2, %v1105
      %v1107 = vrot.slane %v1094, %v1106
      %v1108 = vlaneseq
      %v1109 = vshrl.u32 %v1108, 7
      %v1110 = vsub.s32 3, %v1109
      %v1111 = vrot.slane %v1094, %v1110
      %v1112 = vlaneseq
      %v1113 = vshrl.u32 %v1112, 7
      %v1114 = vsub.s32 4, %v1113
      %v1115 = vrot.slane %v1094, %v1114
      %v1116 = vlaneseq
      %v1117 = vshrl.u32 %v1116, 7
      %v1118 = vsub.s32 5, %v1117
      %v1119 = vrot.slane %v1094, %v1118
      %v1120 = vlaneseq
      %v1121 = vshrl.u32 %v1120, 7
      %v1122 = vsub.s32 6, %v1121
      %v1123 = vrot.slane %v1094, %v1122
      %v1124 = vlaneseq
      %v1125 = vshrl.u32 %v1124, 7
      %v1126 = vsub.s32 7, %v1125
      %v1127 = vrot.slane %v1094, %v1126
      %v1136 = vmul.f32 %v1089, %v1099
      %v1137 = vmul.f32 %v1088, %v1103
      %v1138 = vmul.f32 %v1087, %v1107
      %v1139 = vmul.f32 %v1086, %v1111
      %v1140 = vmul.f32 %v1085, %v1115
      %v1141 = vmul.f32 %v1084, %v1119
      %v1142 = vmul.f32 %v1083, %v1123
      %v1143 = vmul.f32 %v1090, %v1127
      %1144 = vst [vmem:[#allocation2 + $0x200] sm:$0xf] %v1136
      %1145 = vst [vmem:[#allocation2 + $0x208] sm:$0xf] %v1137
      %1146 = vst [vmem:[#allocation2 + $0x210] sm:$0xf] %v1138
      %1147 = vst [vmem:[#allocation2 + $0x218] sm:$0xf] %v1139
      %1148 = vst [vmem:[#allocation2 + $0x220] sm:$0xf] %v1140
      %1149 = vst [vmem:[#allocation2 + $0x228] sm:$0xf] %v1141
      %1150 = vst [vmem:[#allocation2 + $0x230] sm:$0xf] %v1142
      %1151 = vst [vmem:[#allocation2 + $0x238] sm:$0xf] %v1143
      %v1152 = vld [vmem:[%s3] sm:$0xf]
      %v1153 = vld [vmem:[#allocation2] sm:$0xff]
      %v1154 = vld [vmem:[#allocation2 + $0x8] sm:$0xff]
      %v1155 = vld [vmem:[#allocation2 + $0x10] sm:$0xff]
      %v1156 = vld [vmem:[#allocation2 + $0x18] sm:$0xff]
      %v1157 = vld [vmem:[#allocation2 + $0x20] sm:$0xff]
      %v1158 = vld [vmem:[#allocation2 + $0x28] sm:$0xff]
      %v1159 = vld [vmem:[#allocation2 + $0x30] sm:$0xff]
      %v1160 = vld [vmem:[#allocation2 + $0x38] sm:$0xff]
      %v1161 = vld [vmem:[#allocation2 + $0x40] sm:$0xff]
      %v1162 = vld [vmem:[#allocation2 + $0x48] sm:$0xff]
      %v1163 = vld [vmem:[#allocation2 + $0x50] sm:$0xff]
      %v1164 = vld [vmem:[#allocation2 + $0x58] sm:$0xff]
      %v1165 = vld [vmem:[#allocation2 + $0x60] sm:$0xff]
      %v1166 = vld [vmem:[#allocation2 + $0x68] sm:$0xff]
      %v1167 = vld [vmem:[#allocation2 + $0x70] sm:$0xff]
      %v1168 = vld [vmem:[#allocation2 + $0x78] sm:$0xff]
      %v1169 = vld [vmem:[#allocation2 + $0x80] sm:$0xff]
      %v1170 = vld [vmem:[#allocation2 + $0x88] sm:$0xff]
      %v1171 = vld [vmem:[#allocation2 + $0x90] sm:$0xff]
      %v1172 = vld [vmem:[#allocation2 + $0x98] sm:$0xff]
      %v1173 = vld [vmem:[#allocation2 + $0xa0] sm:$0xff]
      %v1174 = vld [vmem:[#allocation2 + $0xa8] sm:$0xff]
      %v1175 = vld [vmem:[#allocation2 + $0xb0] sm:$0xff]
      %v1176 = vld [vmem:[#allocation2 + $0xb8] sm:$0xff]
      %v1177 = vld [vmem:[#allocation2 + $0xc0] sm:$0xff]
      %v1178 = vld [vmem:[#allocation2 + $0xc8] sm:$0xff]
      %v1179 = vld [vmem:[#allocation2 + $0xd0] sm:$0xff]
      %v1180 = vld [vmem:[#allocation2 + $0xd8] sm:$0xff]
      %v1181 = vld [vmem:[#allocation2 + $0xe0] sm:$0xff]
      %v1182 = vld [vmem:[#allocation2 + $0xe8] sm:$0xff]
      %v1183 = vld [vmem:[#allocation2 + $0xf0] sm:$0xff]
      %v1184 = vld [vmem:[#allocation2 + $0xf8] sm:$0xff]
      %v1185 = vld [vmem:[#allocation2 + $0x100] sm:$0xff]
      %v1186 = vld [vmem:[#allocation2 + $0x108] sm:$0xff]
      %v1187 = vld [vmem:[#allocation2 + $0x110] sm:$0xff]
      %v1188 = vld [vmem:[#allocation2 + $0x118] sm:$0xff]
      %v1189 = vld [vmem:[#allocation2 + $0x120] sm:$0xff]
      %v1190 = vld [vmem:[#allocation2 + $0x128] sm:$0xff]
      %v1191 = vld [vmem:[#allocation2 + $0x130] sm:$0xff]
      %v1192 = vld [vmem:[#allocation2 + $0x138] sm:$0xff]
      %v1193 = vld [vmem:[#allocation2 + $0x140] sm:$0xff]
      %v1194 = vld [vmem:[#allocation2 + $0x148] sm:$0xff]
      %v1195 = vld [vmem:[#allocation2 + $0x150] sm:$0xff]
      %v1196 = vld [vmem:[#allocation2 + $0x158] sm:$0xff]
      %v1197 = vld [vmem:[#allocation2 + $0x160] sm:$0xff]
      %v1198 = vld [vmem:[#allocation2 + $0x168] sm:$0xff]
      %v1199 = vld [vmem:[#allocation2 + $0x170] sm:$0xff]
      %v1200 = vld [vmem:[#allocation2 + $0x178] sm:$0xff]
      %v1201 = vld [vmem:[#allocation2 + $0x180] sm:$0xff]
      %v1202 = vld [vmem:[#allocation2 + $0x188] sm:$0xff]
      %v1203 = vld [vmem:[#allocation2 + $0x190] sm:$0xff]
      %v1204 = vld [vmem:[#allocation2 + $0x198] sm:$0xff]
      %v1205 = vld [vmem:[#allocation2 + $0x1a0] sm:$0xff]
      %v1206 = vld [vmem:[#allocation2 + $0x1a8] sm:$0xff]
      %v1207 = vld [vmem:[#allocation2 + $0x1b0] sm:$0xff]
      %v1208 = vld [vmem:[#allocation2 + $0x1b8] sm:$0xff]
      %v1209 = vld [vmem:[#allocation2 + $0x1c0] sm:$0xff]
      %v1210 = vld [vmem:[#allocation2 + $0x1c8] sm:$0xff]
      %v1211 = vld [vmem:[#allocation2 + $0x1d0] sm:$0xff]
      %v1212 = vld [vmem:[#allocation2 + $0x1d8] sm:$0xff]
      %v1213 = vld [vmem:[#allocation2 + $0x1e0] sm:$0xff]
      %v1214 = vld [vmem:[#allocation2 + $0x1e8] sm:$0xff]
      %v1215 = vld [vmem:[#allocation2 + $0x1f0] sm:$0xff]
      %v1216 = vld [vmem:[#allocation2 + $0x1f8] sm:$0xff]
      %v1217 = vld [vmem:[#allocation2 + $0x200] sm:$0xff]
      %v1218 = vld [vmem:[#allocation2 + $0x208] sm:$0xff]
      %v1219 = vld [vmem:[#allocation2 + $0x210] sm:$0xff]
      %v1220 = vld [vmem:[#allocation2 + $0x218] sm:$0xff]
      %v1221 = vld [vmem:[#allocation2 + $0x220] sm:$0xff]
      %v1222 = vld [vmem:[#allocation2 + $0x228] sm:$0xff]
      %v1223 = vld [vmem:[#allocation2 + $0x230] sm:$0xff]
      %v1224 = vld [vmem:[#allocation2 + $0x238] sm:$0xff]
      %v1225 = vpack.c.bf16 %v1161, %v1153
      %v1226 = vpack.c.bf16 %v1162, %v1154
      %v1227 = vpack.c.bf16 %v1163, %v1155
      %v1228 = vpack.c.bf16 %v1164, %v1156
      %v1229 = vpack.c.bf16 %v1165, %v1157
      %v1230 = vpack.c.bf16 %v1166, %v1158
      %v1231 = vpack.c.bf16 %v1167, %v1159
      %v1232 = vpack.c.bf16 %v1168, %v1160
      %v1233 = vpack.c.bf16 %v1177, %v1169
      %v1234 = vpack.c.bf16 %v1178, %v1170
      %v1235 = vpack.c.bf16 %v1179, %v1171
      %v1236 = vpack.c.bf16 %v1180, %v1172
      %v1237 = vpack.c.bf16 %v1181, %v1173
      %v1238 = vpack.c.bf16 %v1182, %v1174
      %v1239 = vpack.c.bf16 %v1183, %v1175
      %v1240 = vpack.c.bf16 %v1184, %v1176
      %v1241 = vpack.c.bf16 %v1193, %v1185
      %v1242 = vpack.c.bf16 %v1194, %v1186
      %v1243 = vpack.c.bf16 %v1195, %v1187
      %v1244 = vpack.c.bf16 %v1196, %v1188
      %v1245 = vpack.c.bf16 %v1197, %v1189
      %v1246 = vpack.c.bf16 %v1198, %v1190
      %v1247 = vpack.c.bf16 %v1199, %v1191
      %v1248 = vpack.c.bf16 %v1200, %v1192
      %v1249 = vpack.c.bf16 %v1209, %v1201
      %v1250 = vpack.c.bf16 %v1210, %v1202
      %v1251 = vpack.c.bf16 %v1211, %v1203
      %v1252 = vpack.c.bf16 %v1212, %v1204
      %v1253 = vpack.c.bf16 %v1213, %v1205
      %v1254 = vpack.c.bf16 %v1214, %v1206
      %v1255 = vpack.c.bf16 %v1215, %v1207
      %v1256 = vpack.c.bf16 %v1216, %v1208
      %v1257 = vpack.c.bf16 %v1217, %v1217
      %v1258 = vpack.c.bf16 %v1218, %v1218
      %v1259 = vpack.c.bf16 %v1219, %v1219
      %v1260 = vpack.c.bf16 %v1220, %v1220
      %v1261 = vpack.c.bf16 %v1221, %v1221
      %v1262 = vpack.c.bf16 %v1222, %v1222
      %v1263 = vpack.c.bf16 %v1223, %v1223
      %v1264 = vpack.c.bf16 %v1224, %v1224
      %v1265 = vld [vmem:[%s4] sm:$0xff]
      %1267 = vset.pattern.permute.xlu0 0
      %1268 = vperm.xlu0 %1267, %v1265
      %v1269 = vpop.permute.xlu0 %1268
      %vm1271 = vcmask 588800
      %v1273 = vsel %vm1271, %v1152, 0
      %vm1275 = vcmask 1043456
      %v1277 = vsel %vm1275, %v1257, 0
      %v1280 = vsel %vm1275, %v1258, 0
      %v1283 = vsel %vm1275, %v1259, 0
      %v1286 = vsel %vm1275, %v1260, 0
      %v1289 = vsel %vm1275, %v1261, 0
      %v1292 = vsel %vm1275, %v1262, 0
      %v1295 = vsel %vm1275, %v1263, 0
      %v1298 = vsel %vm1275, %v1264, 0
      %1300 = vmatprep.subr.bf16.mxu0 0
      %1301 = vmatpush1.bf16.msra.mxu0 0
      %1302 = vmatprep.subr.bf16.mxu0 0
      %1303 = vmatpush1.bf16.msra.mxu0 0
      %1304 = vmatprep.subr.bf16.mxu0 0
      %1305 = vmatpush1.bf16.msra.mxu0 0
      %1306 = vmatprep.subr.bf16.mxu0 %v1280
      %1307 = vmatpush1.bf16.msra.mxu0 %v1277
      %1308 = vmatprep.subr.bf16.mxu0 %v1250
      %1309 = vmatpush1.bf16.msra.mxu0 %v1249
      %1310 = vmatprep.subr.bf16.mxu0 %v1242
      %1311 = vmatpush1.bf16.msra.mxu0 %v1241
      %1312 = vmatprep.subr.bf16.mxu0 %v1234
      %1313 = vmatpush1.bf16.msra.mxu0 %v1233
      %1314 = vmatprep.subr.bf16.mxu0 %v1226
      %1315 = vmatpush1.bf16.msra.mxu0 %v1225
      %1316 = vmatprep.subr.bf16.mxu0 0
      %1317 = vmatpush2.bf16.msra.mxu0 0
      %1318 = vmatprep.subr.bf16.mxu0 0
      %1319 = vmatpush2.bf16.msra.mxu0 0
      %1320 = vmatprep.subr.bf16.mxu0 0
      %1321 = vmatpush2.bf16.msra.mxu0 0
      %1322 = vmatprep.subr.bf16.mxu0 0
      %1323 = vmatpush2.bf16.msra.mxu0 0
      %1324 = vmatprep.subr.bf16.mxu0 0
      %1325 = vmatpush2.bf16.msra.mxu0 0
      %1326 = vmatprep.subr.bf16.mxu0 0
      %1327 = vmatpush2.bf16.msra.mxu0 0
      %1328 = vmatprep.subr.bf16.mxu0 0
      %1329 = vmatpush2.bf16.msra.mxu0 0
      %1330 = vmatprep.subr.bf16.mxu0 0
      %1331 = vmatpush2.bf16.msra.mxu0 0
      %1332 = vmatprep.mubr.bf16.mxu0 0
      %1333 = vmatmul.mubr.bf16.gmra.mxu0 %v1273
      %v1334 = vpop.f32.mrf.mxu0
      %v1335 = vadd.f32 %v1269, %v1334
      %v1336 = vpop.f32.mrf.mxu0
      %v1337 = vadd.f32 %v1269, %v1336
      %v1338 = vpop.f32.mrf.mxu0
      %v1339 = vpop.f32.mrf.mxu0
      %1340 = vdwg.mxu0
      %1341 = vmatprep.subr.bf16.mxu0 0
      %1342 = vmatpush1.bf16.msra.mxu0 0
      %1343 = vmatprep.subr.bf16.mxu0 0
      %1344 = vmatpush1.bf16.msra.mxu0 0
      %1345 = vmatprep.subr.bf16.mxu0 0
      %1346 = vmatpush1.bf16.msra.mxu0 0
      %1347 = vmatprep.subr.bf16.mxu0 %v1286
      %1348 = vmatpush1.bf16.msra.mxu0 %v1283
      %1349 = vmatprep.subr.bf16.mxu0 %v1252
      %1350 = vmatpush1.bf16.msra.mxu0 %v1251
      %1351 = vmatprep.subr.bf16.mxu0 %v1244
      %1352 = vmatpush1.bf16.msra.mxu0 %v1243
      %1353 = vmatprep.subr.bf16.mxu0 %v1236
      %1354 = vmatpush1.bf16.msra.mxu0 %v1235
      %1355 = vmatprep.subr.bf16.mxu0 %v1228
      %1356 = vmatpush1.bf16.msra.mxu0 %v1227
      %1357 = vmatprep.subr.bf16.mxu0 0
      %1358 = vmatpush2.bf16.msra.mxu0 0
      %1359 = vmatprep.subr.bf16.mxu0 0
      %1360 = vmatpush2.bf16.msra.mxu0 0
      %1361 = vmatprep.subr.bf16.mxu0 0
      %1362 = vmatpush2.bf16.msra.mxu0 0
      %1363 = vmatprep.subr.bf16.mxu0 0
      %1364 = vmatpush2.bf16.msra.mxu0 0
      %1365 = vmatprep.subr.bf16.mxu0 0
      %1366 = vmatpush2.bf16.msra.mxu0 0
      %1367 = vmatprep.subr.bf16.mxu0 0
      %1368 = vmatpush2.bf16.msra.mxu0 0
      %1369 = vmatprep.subr.bf16.mxu0 0
      %1370 = vmatpush2.bf16.msra.mxu0 0
      %1371 = vmatprep.subr.bf16.mxu0 0
      %1372 = vmatpush2.bf16.msra.mxu0 0
      %1373 = vmatprep.mubr.bf16.mxu0 0
      %1374 = vmatmul.mubr.bf16.gmra.mxu0 %v1273
      %v1375 = vpop.f32.mrf.mxu0
      %v1376 = vadd.f32 %v1269, %v1375
      %v1377 = vpop.f32.mrf.mxu0
      %v1378 = vadd.f32 %v1269, %v1377
      %v1379 = vpop.f32.mrf.mxu0
      %v1380 = vpop.f32.mrf.mxu0
      %1381 = vdwg.mxu0
      %1382 = vmatprep.subr.bf16.mxu0 0
      %1383 = vmatpush1.bf16.msra.mxu0 0
      %1384 = vmatprep.subr.bf16.mxu0 0
      %1385 = vmatpush1.bf16.msra.mxu0 0
      %1386 = vmatprep.subr.bf16.mxu0 0
      %1387 = vmatpush1.bf16.msra.mxu0 0
      %1388 = vmatprep.subr.bf16.mxu0 %v1292
      %1389 = vmatpush1.bf16.msra.mxu0 %v1289
      %1390 = vmatprep.subr.bf16.mxu0 %v1254
      %1391 = vmatpush1.bf16.msra.mxu0 %v1253
      %1392 = vmatprep.subr.bf16.mxu0 %v1246
      %1393 = vmatpush1.bf16.msra.mxu0 %v1245
      %1394 = vmatprep.subr.bf16.mxu0 %v1238
      %1395 = vmatpush1.bf16.msra.mxu0 %v1237
      %1396 = vmatprep.subr.bf16.mxu0 %v1230
      %1397 = vmatpush1.bf16.msra.mxu0 %v1229
      %1398 = vmatprep.subr.bf16.mxu0 0
      %1399 = vmatpush2.bf16.msra.mxu0 0
      %1400 = vmatprep.subr.bf16.mxu0 0
      %1401 = vmatpush2.bf16.msra.mxu0 0
      %1402 = vmatprep.subr.bf16.mxu0 0
      %1403 = vmatpush2.bf16.msra.mxu0 0
      %1404 = vmatprep.subr.bf16.mxu0 0
      %1405 = vmatpush2.bf16.msra.mxu0 0
      %1406 = vmatprep.subr.bf16.mxu0 0
      %1407 = vmatpush2.bf16.msra.mxu0 0
      %1408 = vmatprep.subr.bf16.mxu0 0
      %1409 = vmatpush2.bf16.msra.mxu0 0
      %1410 = vmatprep.subr.bf16.mxu0 0
      %1411 = vmatpush2.bf16.msra.mxu0 0
      %1412 = vmatprep.subr.bf16.mxu0 0
      %1413 = vmatpush2.bf16.msra.mxu0 0
      %1414 = vmatprep.mubr.bf16.mxu0 0
      %1415 = vmatmul.mubr.bf16.gmra.mxu0 %v1273
      %v1416 = vpop.f32.mrf.mxu0
      %v1417 = vadd.f32 %v1269, %v1416
      %v1418 = vpop.f32.mrf.mxu0
      %v1419 = vadd.f32 %v1269, %v1418
      %v1420 = vpop.f32.mrf.mxu0
      %v1421 = vpop.f32.mrf.mxu0
      %1422 = vdwg.mxu0
      %1423 = vmatprep.subr.bf16.mxu0 0
      %1424 = vmatpush1.bf16.msra.mxu0 0
      %1425 = vmatprep.subr.bf16.mxu0 0
      %1426 = vmatpush1.bf16.msra.mxu0 0
      %1427 = vmatprep.subr.bf16.mxu0 0
      %1428 = vmatpush1.bf16.msra.mxu0 0
      %1429 = vmatprep.subr.bf16.mxu0 %v1298
      %1430 = vmatpush1.bf16.msra.mxu0 %v1295
      %1431 = vmatprep.subr.bf16.mxu0 %v1256
      %1432 = vmatpush1.bf16.msra.mxu0 %v1255
      %1433 = vmatprep.subr.bf16.mxu0 %v1248
      %1434 = vmatpush1.bf16.msra.mxu0 %v1247
      %1435 = vmatprep.subr.bf16.mxu0 %v1240
      %1436 = vmatpush1.bf16.msra.mxu0 %v1239
      %1437 = vmatprep.subr.bf16.mxu0 %v1232
      %1438 = vmatpush1.bf16.msra.mxu0 %v1231
      %1439 = vmatprep.subr.bf16.mxu0 0
      %1440 = vmatpush2.bf16.msra.mxu0 0
      %1441 = vmatprep.subr.bf16.mxu0 0
      %1442 = vmatpush2.bf16.msra.mxu0 0
      %1443 = vmatprep.subr.bf16.mxu0 0
      %1444 = vmatpush2.bf16.msra.mxu0 0
      %1445 = vmatprep.subr.bf16.mxu0 0
      %1446 = vmatpush2.bf16.msra.mxu0 0
      %1447 = vmatprep.subr.bf16.mxu0 0
      %1448 = vmatpush2.bf16.msra.mxu0 0
      %1449 = vmatprep.subr.bf16.mxu0 0
      %1450 = vmatpush2.bf16.msra.mxu0 0
      %1451 = vmatprep.subr.bf16.mxu0 0
      %1452 = vmatpush2.bf16.msra.mxu0 0
      %1453 = vmatprep.subr.bf16.mxu0 0
      %1454 = vmatpush2.bf16.msra.mxu0 0
      %1455 = vmatprep.mubr.bf16.mxu0 0
      %1456 = vmatmul.mubr.bf16.gmra.mxu0 %v1273
      %v1457 = vpop.f32.mrf.mxu0
      %v1458 = vadd.f32 %v1269, %v1457
      %v1459 = vpop.f32.mrf.mxu0
      %v1460 = vadd.f32 %v1269, %v1459
      %v1461 = vpop.f32.mrf.mxu0
      %v1462 = vpop.f32.mrf.mxu0
      %1463 = vdwg.mxu0
      %v1464 = vpack.c.bf16 %v1335, %v1335
      %v1465 = vpack.c.bf16 %v1337, %v1337
      %v1466 = vpack.c.bf16 %v1376, %v1376
      %v1467 = vpack.c.bf16 %v1378, %v1378
      %v1468 = vpack.c.bf16 %v1417, %v1417
      %v1469 = vpack.c.bf16 %v1419, %v1419
      %v1470 = vpack.c.bf16 %v1458, %v1458
      %v1471 = vpack.c.bf16 %v1460, %v1460
      %v1480 = vunpack.c.l.b16 %v1464
      %v1481 = vunpack.c.l.b16 %v1465
      %v1482 = vunpack.c.l.b16 %v1466
      %v1483 = vunpack.c.l.b16 %v1467
      %v1484 = vunpack.c.l.b16 %v1468
      %v1485 = vunpack.c.l.b16 %v1469
      %v1486 = vunpack.c.l.b16 %v1470
      %v1487 = vunpack.c.l.b16 %v1471
      %v1488 = vpack.c.b16 %v1481, %v1480
      %v1489 = vpack.c.b16 %v1483, %v1482
      %v1490 = vpack.c.b16 %v1485, %v1484
      %v1491 = vpack.c.b16 %v1487, %v1486
      %1496 = vst [vmem:[%s320] sm:$0xff] %v1488
      %1497 = vst [vmem:[%s320 + $0x8] sm:$0xff] %v1489
      %1498 = vst [vmem:[%s320 + $0x10] sm:$0xff] %v1490
      %1499 = vst [vmem:[%s320 + $0x18] sm:$0xff] %v1491
      %v1500 = vadd.f32 %v1335, %v1337
      %v1501 = vadd.f32 %v1500, %v1376
      %v1502 = vadd.f32 %v1501, %v1378
      %v1503 = vadd.f32 %v1502, %v1417
      %v1504 = vadd.f32 %v1503, %v1419
      %v1505 = vadd.f32 %v1504, %v1458
      %v1506 = vadd.f32 %v1505, %v1460
      %1507 = vadd.xlane.f32.xlu0 %v1506
      %v1508 = vpop.xlane.xlu0 %1507
      %vm1509 = vcmask 7168
      %1510 = vst.msk [vmem:[%s325] sm:$0xff] %vm1509, %v1508
      %v1511 = vmul.f32 %v1335, %v1335
      %v1512 = vmul.f32 %v1337, %v1337
      %v1513 = vmul.f32 %v1376, %v1376
      %v1514 = vmul.f32 %v1378, %v1378
      %v1515 = vmul.f32 %v1417, %v1417
      %v1516 = vmul.f32 %v1419, %v1419
      %v1517 = vmul.f32 %v1458, %v1458
      %v1518 = vmul.f32 %v1460, %v1460
      %v1519 = vadd.f32 %v1511, %v1512
      %v1520 = vadd.f32 %v1519, %v1513
      %v1521 = vadd.f32 %v1520, %v1514
      %v1522 = vadd.f32 %v1521, %v1515
      %v1523 = vadd.f32 %v1522, %v1516
      %v1524 = vadd.f32 %v1523, %v1517
      %v1525 = vadd.f32 %v1524, %v1518
      %1526 = vadd.xlane.f32.xlu0 %v1525
      %v1527 = vpop.xlane.xlu0 %1526
      %1528 = vst.msk [vmem:[%s325 + $0x8] sm:$0xff] %vm1509, %v1527
      %p1529 = scmp.lt.s32.totalorder %s19, 1
      %s1530 = scalar_select %p1529, %s19, 1
      %s1531 = smul.addr %s1530, 8
      %s1532 = smul.addr %s1531, 4
      %s1533 = scalar_lea.vmem %s6, %s1532
      %p1534 = scmp.lt.s32.totalorder %s19, 1
      %s1535 = scalar_select %p1534, %s19, 1
      %s1536 = smul.addr %s1535, 2
      %s1537 = smul.addr %s1536, 8
      %s1538 = scalar_lea.vmem %s7, %s1537
      // Predicated region
      $region45: #{gen_residual_block_forward.4} parent=43 // pred_check
        %p1539 = pneg %p178
      $region46: #{gen_residual_block_forward.4} parent=43 // pred_check_branch
        %1541 = sbr.rel (%p1539) target = $region48
      $region47: #{gen_residual_block_forward.4} parent=43 // pred_region
        _
      $region48: #{gen_residual_block_forward.4} parent=43 // pred_fallthru
        _
      // Predicated region
      $region49: #{gen_residual_block_forward.4} parent=43 // pred_check
        %p1542 = pneg %p204
      $region50: #{gen_residual_block_forward.4} parent=43 // pred_check_branch
        %1544 = sbr.rel (%p1542) target = $region52
      $region51: #{gen_residual_block_forward.4} parent=43 // pred_region
        _
      $region52: #{gen_residual_block_forward.4} parent=43 // pred_fallthru
        _
    $region44: #{gen_residual_block_forward.4} parent=5 // pred_fallthru
      _
    %p1545 = scmp.le.s32.totalorder 2, %s14
    // Predicated region
    $region53: #{gen_residual_block_forward.4} parent=5 // pred_check
      %p1546 = pneg %p1545
    $region54: #{gen_residual_block_forward.4} parent=5 // pred_check_branch
      %1548 = sbr.rel (%p1546) target = $region56
    $region55: #{gen_residual_block_forward.4} parent=5 // pred_region
      %s1549 = ssub.s32 %s14, 2
      // Predicated region
      $region57: #{gen_residual_block_forward.4} parent=55 // pred_check
        %p1550 = pneg %p184
      $region58: #{gen_residual_block_forward.4} parent=55 // pred_check_branch
        %1552 = sbr.rel (%p1550) target = $region60
      $region59: #{gen_residual_block_forward.4} parent=55 // pred_region
        %p1553 = scmp.lt.s32.totalorder %s20, 1
        %s1554 = scalar_select %p1553, %s20, 1
        %s1555 = smul.addr %s1554, 8
        %s1556 = smul.addr %s1555, 4
        %s1557 = scalar_lea.vmem %s6, %s1556
      $region60: #{gen_residual_block_forward.4} parent=55 // pred_fallthru
        _
      // Predicated region
      $region61: #{gen_residual_block_forward.4} parent=55 // pred_check
        %p1558 = pneg %p210
      $region62: #{gen_residual_block_forward.4} parent=55 // pred_check_branch
        %1560 = sbr.rel (%p1558) target = $region64
      $region63: #{gen_residual_block_forward.4} parent=55 // pred_region
        %p1561 = scmp.lt.s32.totalorder %s20, 1
        %s1562 = scalar_select %p1561, %s20, 1
        %s1563 = smul.addr %s1562, 2
        %s1564 = smul.addr %s1563, 8
        %s1565 = scalar_lea.vmem %s7, %s1564
      $region64: #{gen_residual_block_forward.4} parent=55 // pred_fallthru
        _
    $region56: #{gen_residual_block_forward.4} parent=5 // pred_fallthru
      _
  $region6: #{gen_residual_block_forward.4} parent=0 // loop_footer
    %s18 = sadd.s32 1, %s14
  $region7: #{gen_residual_block_forward.4} parent=0 // loop_footer_branch
    %13 = sbr.rel target = $region3
  $region8: #{gen_residual_block_forward.4} parent=0 // loop_exit
    _

// kernel: gen_residual_block_forward.5
$region0: #{gen_residual_block_forward.5}
  #allocation0 [shape = 'u32[]', space=smem, size = 0x4, offset = 0x4, fixed_abs, tag = 'smem constant byte address 0x4 - core index']
  #allocation1 [shape = 'u32[144,128]{1,0:T(1,128)}', space=vmem, size = 0x12000, scoped, tag = 'internal scratch']
  #allocation2 [shape = 'f32[72,1024]{1,0:T(8,128)}', space=vmem, size = 0x48000, scoped, tag = 'scratch operand']
  %s0 = inlined_call_operand.vmem [shape: bf16[2,8,1024], index: 0, kind: input, shape index: {}]
  %s1 = inlined_call_operand.vmem [shape: f32[2,8,1], index: 1, kind: input, shape index: {}]
  %s2 = inlined_call_operand.vmem [shape: f32[2,8,1], index: 2, kind: input, shape index: {}]
  %s3 = inlined_call_operand.vmem [shape: bf16[8,72], index: 3, kind: input, shape index: {}]
  %s4 = inlined_call_operand.vmem [shape: f32[8,1], index: 4, kind: input, shape index: {}]
  %s5 = inlined_call_operand.vmem [shape: f32[9,1024], index: 5, kind: input, shape index: {}]
  %s6 = inlined_call_operand.vmem [shape: bf16[2,8,1024], index: 6, kind: input, shape index: {}]
  %s7 = inlined_call_operand.vmem [shape: f32[2,8,1024], index: 7, kind: output, shape index: {}]
  %s8 = sld [smem:[#allocation0]]
  $region61: #{gen_residual_block_forward.5} parent=0
    _
  %s10 = ssub.s32 1, %s8
  %s11 = scalar_select 0, %s10, %s8
  loop: start=0, step=1, limit=4
  $region2: #{gen_residual_block_forward.5} parent=0 // loop_pre_header
    _
  $region3: #{gen_residual_block_forward.5} parent=0 // loop_header
    %s13 = sphi 0, %s17
    %p14 = scmp.ge.s32.totalorder %s13, 4
    %s23 = sphi 0, %s25
    %s26 = sphi 0, %s23
    %s27 = sphi 0, %s26
    %s43 = sphi 0, %s27
    %s49 = sphi 0, %s51
    %s52 = sphi 0, %s49
    %s53 = sphi 0, %s52
    %s69 = sphi 0, %s53
    %s75 = sphi 0, %s77
    %s78 = sphi 0, %s75
    %s79 = sphi 0, %s78
    %s95 = sphi 0, %s79
    %s99 = sphi 0, %s99
    %s101 = sphi 0, %s99
    %s102 = sphi 0, %s101
    %s116 = sphi 0, %s102
    %s120 = sphi 0, %s120
    %s122 = sphi 0, %s120
    %s123 = sphi 0, %s122
    %s137 = sphi 0, %s123
    %s141 = sphi 0, %s141
    %s143 = sphi 0, %s141
    %s144 = sphi 0, %s143
    %s158 = sphi 0, %s144
    %s164 = sphi 0, %s166
    %s167 = sphi 0, %s164
    %s168 = sphi 0, %s167
    %s184 = sphi 0, %s168
    %s190 = sphi 0, %s192
    %s193 = sphi 0, %s190
    %s194 = sphi 0, %s193
    %s210 = sphi 0, %s194
  $region4: #{gen_residual_block_forward.5} parent=0 // loop_header_branch
    %16 = sbr.rel (%p14) target = $region8
  $region5: #{gen_residual_block_forward.5} parent=0 // loop_body
    %s18 = ssub.s32 %s13, 1
    %s19 = ssub.s32 %s13, 2
    %s20 = sadd.s32 %s13, 1
    %s21 = ssub.s32 %s13, %s20
    %p22 = scmp.eq.s32.totalorder %s21, 0
    %s24 = sadd.s32 %s23, 1
    %s25 = scalar_select %p22, %s23, %s24
    %p28 = pneg %p22
    %p29 = scmp.eq.s32.totalorder %s13, 1
    %p30 = por %p28, %p29
    %p31 = scmp.ne.s32.totalorder %s23, %s26
    %p32 = scmp.eq.s32.totalorder %s13, 0
    %p33 = por %p31, %p32
    %p34 = scmp.ne.s32.totalorder %s23, %s26
    %p35 = scmp.eq.s32.totalorder %s18, 1
    %p36 = por %p34, %p35
    %p37 = scmp.ne.s32.totalorder %s26, %s27
    %p38 = scmp.eq.s32.totalorder %s18, 0
    %p39 = por %p37, %p38
    %p40 = scmp.ne.s32.totalorder %s26, %s27
    %p41 = scmp.eq.s32.totalorder %s19, 1
    %p42 = por %p40, %p41
    %p44 = scmp.ne.s32.totalorder %s27, %s43
    %p45 = scmp.eq.s32.totalorder %s19, 0
    %p46 = por %p44, %p45
    %s47 = ssub.s32 %s13, %s20
    %p48 = scmp.eq.s32.totalorder %s47, 0
    %s50 = sadd.s32 %s49, 1
    %s51 = scalar_select %p48, %s49, %s50
    %p54 = pneg %p48
    %p55 = scmp.eq.s32.totalorder %s13, 1
    %p56 = por %p54, %p55
    %p57 = scmp.ne.s32.totalorder %s49, %s52
    %p58 = scmp.eq.s32.totalorder %s13, 0
    %p59 = por %p57, %p58
    %p60 = scmp.ne.s32.totalorder %s49, %s52
    %p61 = scmp.eq.s32.totalorder %s18, 1
    %p62 = por %p60, %p61
    %p63 = scmp.ne.s32.totalorder %s52, %s53
    %p64 = scmp.eq.s32.totalorder %s18, 0
    %p65 = por %p63, %p64
    %p66 = scmp.ne.s32.totalorder %s52, %s53
    %p67 = scmp.eq.s32.totalorder %s19, 1
    %p68 = por %p66, %p67
    %p70 = scmp.ne.s32.totalorder %s53, %s69
    %p71 = scmp.eq.s32.totalorder %s19, 0
    %p72 = por %p70, %p71
    %s73 = ssub.s32 %s13, %s20
    %p74 = scmp.eq.s32.totalorder %s73, 0
    %s76 = sadd.s32 %s75, 1
    %s77 = scalar_select %p74, %s75, %s76
    %p80 = pneg %p74
    %p81 = scmp.eq.s32.totalorder %s13, 1
    %p82 = por %p80, %p81
    %p83 = scmp.ne.s32.totalorder %s75, %s78
    %p84 = scmp.eq.s32.totalorder %s13, 0
    %p85 = por %p83, %p84
    %p86 = scmp.ne.s32.totalorder %s75, %s78
    %p87 = scmp.eq.s32.totalorder %s18, 1
    %p88 = por %p86, %p87
    %p89 = scmp.ne.s32.totalorder %s78, %s79
    %p90 = scmp.eq.s32.totalorder %s18, 0
    %p91 = por %p89, %p90
    %p92 = scmp.ne.s32.totalorder %s78, %s79
    %p93 = scmp.eq.s32.totalorder %s19, 1
    %p94 = por %p92, %p93
    %p96 = scmp.ne.s32.totalorder %s79, %s95
    %p97 = scmp.eq.s32.totalorder %s19, 0
    %p98 = por %p96, %p97
    %s100 = sadd.s32 %s99, 1
    %p103 = scmp.eq.s32.totalorder %s13, 1
    %p104 = scmp.ne.s32.totalorder %s99, %s101
    %p105 = scmp.eq.s32.totalorder %s13, 0
    %p106 = por %p104, %p105
    %p107 = scmp.ne.s32.totalorder %s99, %s101
    %p108 = scmp.eq.s32.totalorder %s18, 1
    %p109 = por %p107, %p108
    %p110 = scmp.ne.s32.totalorder %s101, %s102
    %p111 = scmp.eq.s32.totalorder %s18, 0
    %p112 = por %p110, %p111
    %p113 = scmp.ne.s32.totalorder %s101, %s102
    %p114 = scmp.eq.s32.totalorder %s19, 1
    %p115 = por %p113, %p114
    %p117 = scmp.ne.s32.totalorder %s102, %s116
    %p118 = scmp.eq.s32.totalorder %s19, 0
    %p119 = por %p117, %p118
    %s121 = sadd.s32 %s120, 1
    %p124 = scmp.eq.s32.totalorder %s13, 1
    %p125 = scmp.ne.s32.totalorder %s120, %s122
    %p126 = scmp.eq.s32.totalorder %s13, 0
    %p127 = por %p125, %p126
    %p128 = scmp.ne.s32.totalorder %s120, %s122
    %p129 = scmp.eq.s32.totalorder %s18, 1
    %p130 = por %p128, %p129
    %p131 = scmp.ne.s32.totalorder %s122, %s123
    %p132 = scmp.eq.s32.totalorder %s18, 0
    %p133 = por %p131, %p132
    %p134 = scmp.ne.s32.totalorder %s122, %s123
    %p135 = scmp.eq.s32.totalorder %s19, 1
    %p136 = por %p134, %p135
    %p138 = scmp.ne.s32.totalorder %s123, %s137
    %p139 = scmp.eq.s32.totalorder %s19, 0
    %p140 = por %p138, %p139
    %s142 = sadd.s32 %s141, 1
    %p145 = scmp.eq.s32.totalorder %s13, 1
    %p146 = scmp.ne.s32.totalorder %s141, %s143
    %p147 = scmp.eq.s32.totalorder %s13, 0
    %p148 = por %p146, %p147
    %p149 = scmp.ne.s32.totalorder %s141, %s143
    %p150 = scmp.eq.s32.totalorder %s18, 1
    %p151 = por %p149, %p150
    %p152 = scmp.ne.s32.totalorder %s143, %s144
    %p153 = scmp.eq.s32.totalorder %s18, 0
    %p154 = por %p152, %p153
    %p155 = scmp.ne.s32.totalorder %s143, %s144
    %p156 = scmp.eq.s32.totalorder %s19, 1
    %p157 = por %p155, %p156
    %p159 = scmp.ne.s32.totalorder %s144, %s158
    %p160 = scmp.eq.s32.totalorder %s19, 0
    %p161 = por %p159, %p160
    %s162 = ssub.s32 %s13, %s20
    %p163 = scmp.eq.s32.totalorder %s162, 0
    %s165 = sadd.s32 %s164, 1
    %s166 = scalar_select %p163, %s164, %s165
    %p169 = pneg %p163
    %p170 = scmp.eq.s32.totalorder %s13, 1
    %p171 = por %p169, %p170
    %p172 = scmp.ne.s32.totalorder %s164, %s167
    %p173 = scmp.eq.s32.totalorder %s13, 0
    %p174 = por %p172, %p173
    %p175 = scmp.ne.s32.totalorder %s164, %s167
    %p176 = scmp.eq.s32.totalorder %s18, 1
    %p177 = por %p175, %p176
    %p178 = scmp.ne.s32.totalorder %s167, %s168
    %p179 = scmp.eq.s32.totalorder %s18, 0
    %p180 = por %p178, %p179
    %p181 = scmp.ne.s32.totalorder %s167, %s168
    %p182 = scmp.eq.s32.totalorder %s19, 1
    %p183 = por %p181, %p182
    %p185 = scmp.ne.s32.totalorder %s168, %s184
    %p186 = scmp.eq.s32.totalorder %s19, 0
    %p187 = por %p185, %p186
    %s188 = ssub.s32 %s13, %s20
    %p189 = scmp.eq.s32.totalorder %s188, 0
    %s191 = sadd.s32 %s190, 1
    %s192 = scalar_select %p189, %s190, %s191
    %p195 = pneg %p189
    %p196 = scmp.eq.s32.totalorder %s13, 1
    %p197 = por %p195, %p196
    %p198 = scmp.ne.s32.totalorder %s190, %s193
    %p199 = scmp.eq.s32.totalorder %s13, 0
    %p200 = por %p198, %p199
    %p201 = scmp.ne.s32.totalorder %s190, %s193
    %p202 = scmp.eq.s32.totalorder %s18, 1
    %p203 = por %p201, %p202
    %p204 = scmp.ne.s32.totalorder %s193, %s194
    %p205 = scmp.eq.s32.totalorder %s18, 0
    %p206 = por %p204, %p205
    %p207 = scmp.ne.s32.totalorder %s193, %s194
    %p208 = scmp.eq.s32.totalorder %s19, 1
    %p209 = por %p207, %p208
    %p211 = scmp.ne.s32.totalorder %s194, %s210
    %p212 = scmp.eq.s32.totalorder %s19, 0
    %p213 = por %p211, %p212
    %p214 = scmp.le.s32.totalorder 1, %s13
    %p215 = scmp.lt.s32.totalorder %s13, 3
    %p216 = pnand %p214, %p215
    %p217 = pneg %p216
    // Predicated region
    $region9: #{gen_residual_block_forward.5} parent=5 // pred_check
      _
    $region10: #{gen_residual_block_forward.5} parent=5 // pred_check_branch
      %219 = sbr.rel (%p216) target = $region12
    $region11: #{gen_residual_block_forward.5} parent=5 // pred_region
      %s220 = ssub.s32 %s13, 1
      // Predicated region
      $region13: #{gen_residual_block_forward.5} parent=11 // pred_check
        %p221 = pneg %p112
      $region14: #{gen_residual_block_forward.5} parent=11 // pred_check_branch
        %223 = sbr.rel (%p221) target = $region16
      $region15: #{gen_residual_block_forward.5} parent=11 // pred_region
        _
      $region16: #{gen_residual_block_forward.5} parent=11 // pred_fallthru
        _
      // Predicated region
      $region17: #{gen_residual_block_forward.5} parent=11 // pred_check
        %p224 = pneg %p133
      $region18: #{gen_residual_block_forward.5} parent=11 // pred_check_branch
        %226 = sbr.rel (%p224) target = $region20
      $region19: #{gen_residual_block_forward.5} parent=11 // pred_region
        _
      $region20: #{gen_residual_block_forward.5} parent=11 // pred_fallthru
        _
      // Predicated region
      $region21: #{gen_residual_block_forward.5} parent=11 // pred_check
        %p227 = pneg %p154
      $region22: #{gen_residual_block_forward.5} parent=11 // pred_check_branch
        %229 = sbr.rel (%p227) target = $region24
      $region23: #{gen_residual_block_forward.5} parent=11 // pred_region
        _
      $region24: #{gen_residual_block_forward.5} parent=11 // pred_fallthru
        _
    $region12: #{gen_residual_block_forward.5} parent=5 // pred_fallthru
      _
    %p230 = scmp.lt.s32.totalorder %s13, 2
    // Predicated region
    $region25: #{gen_residual_block_forward.5} parent=5 // pred_check
      %p231 = pneg %p230
    $region26: #{gen_residual_block_forward.5} parent=5 // pred_check_branch
      %233 = sbr.rel (%p231) target = $region28
    $region27: #{gen_residual_block_forward.5} parent=5 // pred_region
      // Predicated region
      $region29: #{gen_residual_block_forward.5} parent=27 // pred_check
        %p234 = pneg %p33
      $region30: #{gen_residual_block_forward.5} parent=27 // pred_check_branch
        %236 = sbr.rel (%p234) target = $region32
      $region31: #{gen_residual_block_forward.5} parent=27 // pred_region
        %p237 = scmp.lt.s32.totalorder %s13, 1
        %s238 = scalar_select %p237, %s13, 1
        %s239 = smul.addr %s238, 8
        %s240 = smul.addr %s239, 4
        %s241 = scalar_lea.vmem %s0, %s240
      $region32: #{gen_residual_block_forward.5} parent=27 // pred_fallthru
        _
      // Predicated region
      $region33: #{gen_residual_block_forward.5} parent=27 // pred_check
        %p242 = pneg %p59
      $region34: #{gen_residual_block_forward.5} parent=27 // pred_check_branch
        %244 = sbr.rel (%p242) target = $region36
      $region35: #{gen_residual_block_forward.5} parent=27 // pred_region
        %p245 = scmp.lt.s32.totalorder %s13, 1
        %s246 = scalar_select %p245, %s13, 1
        %s247 = smul.addr %s246, 8
        %s248 = scalar_lea.vmem %s1, %s247
      $region36: #{gen_residual_block_forward.5} parent=27 // pred_fallthru
        _
      // Predicated region
      $region37: #{gen_residual_block_forward.5} parent=27 // pred_check
        %p249 = pneg %p85
      $region38: #{gen_residual_block_forward.5} parent=27 // pred_check_branch
        %251 = sbr.rel (%p249) target = $region40
      $region39: #{gen_residual_block_forward.5} parent=27 // pred_region
        %p252 = scmp.lt.s32.totalorder %s13, 1
        %s253 = scalar_select %p252, %s13, 1
        %s254 = smul.addr %s253, 8
        %s255 = scalar_lea.vmem %s2, %s254
      $region40: #{gen_residual_block_forward.5} parent=27 // pred_fallthru
        _
      // Predicated region
      $region41: #{gen_residual_block_forward.5} parent=27 // pred_check
        %p256 = pneg %p174
      $region42: #{gen_residual_block_forward.5} parent=27 // pred_check_branch
        %258 = sbr.rel (%p256) target = $region44
      $region43: #{gen_residual_block_forward.5} parent=27 // pred_region
        %p259 = scmp.lt.s32.totalorder %s13, 1
        %s260 = scalar_select %p259, %s13, 1
        %s261 = smul.addr %s260, 8
        %s262 = smul.addr %s261, 4
        %s263 = scalar_lea.vmem %s6, %s262
      $region44: #{gen_residual_block_forward.5} parent=27 // pred_fallthru
        _
    $region28: #{gen_residual_block_forward.5} parent=5 // pred_fallthru
      _
    %p264 = scmp.le.s32.totalorder 1, %s13
    %p265 = scmp.lt.s32.totalorder %s13, 3
    %p266 = pnand %p264, %p265
    %p267 = pneg %p266
    // Predicated region
    $region45: #{gen_residual_block_forward.5} parent=5 // pred_check
      _
    $region46: #{gen_residual_block_forward.5} parent=5 // pred_check_branch
      %269 = sbr.rel (%p266) target = $region48
    $region47: #{gen_residual_block_forward.5} parent=5 // pred_region
      %s270 = ssub.s32 %s13, 1
      %p271 = scmp.lt.s32.totalorder %s18, 1
      %s272 = scalar_select %p271, %s18, 1
      %s273 = smul.addr %s272, 8
      %s274 = smul.addr %s273, 4
      %s275 = scalar_lea.vmem %s0, %s274
      %p276 = pneg %p39
      %p277 = pneg %p36
      %p278 = scmp.lt.s32.totalorder %s18, 1
      %s279 = scalar_select %p278, %s18, 1
      %s280 = smul.addr %s279, 8
      %s281 = scalar_lea.vmem %s1, %s280
      %p282 = pneg %p65
      %p283 = pneg %p62
      %p284 = scmp.lt.s32.totalorder %s18, 1
      %s285 = scalar_select %p284, %s18, 1
      %s286 = smul.addr %s285, 8
      %s287 = scalar_lea.vmem %s2, %s286
      %p288 = pneg %p91
      %p289 = pneg %p88
      %p290 = pneg %p112
      %p291 = pneg %p109
      %p292 = pneg %p133
      %p293 = pneg %p130
      %p294 = pneg %p154
      %p295 = pneg %p151
      %p296 = scmp.lt.s32.totalorder %s18, 1
      %s297 = scalar_select %p296, %s18, 1
      %s298 = smul.addr %s297, 8
      %s299 = smul.addr %s298, 4
      %s300 = scalar_lea.vmem %s6, %s299
      %p301 = pneg %p180
      %p302 = pneg %p177
      %p303 = pneg %p206
      %p304 = pneg %p203
      %p305 = scmp.lt.s32.totalorder %s18, 1
      %s306 = scalar_select %p305, %s18, 1
      %s307 = smul.addr %s306, 8
      %s308 = smul.addr %s307, 8
      %s309 = scalar_lea.vmem %s7, %s308
      %p310 = scmp.lt.s32.totalorder %s18, 1
      %s311 = scalar_select %p310, %s18, 1
      %s312 = smul.addr %s311, 8
      %s313 = smul.addr %s312, 4
      %s314 = scalar_lea.vmem %s0, %s313
      %p315 = scmp.lt.s32.totalorder %s18, 1
      %s316 = scalar_select %p315, %s18, 1
      %s317 = smul.addr %s316, 8
      %s318 = scalar_lea.vmem %s1, %s317
      %p319 = scmp.lt.s32.totalorder %s18, 1
      %s320 = scalar_select %p319, %s18, 1
      %s321 = smul.addr %s320, 8
      %s322 = scalar_lea.vmem %s2, %s321
      %p323 = scmp.lt.s32.totalorder %s18, 1
      %s324 = scalar_select %p323, %s18, 1
      %s325 = smul.addr %s324, 8
      %s326 = smul.addr %s325, 4
      %s327 = scalar_lea.vmem %s6, %s326
      %p328 = scmp.lt.s32.totalorder %s18, 1
      %s329 = scalar_select %p328, %s18, 1
      %s330 = smul.addr %s329, 8
      %s331 = smul.addr %s330, 8
      %s332 = scalar_lea.vmem %s7, %s331
      %v334 = vld [vmem:[%s314] sm:$0xff]
      %v335 = vld [vmem:[%s314 + $0x8] sm:$0xff]
      %v336 = vld [vmem:[%s314 + $0x10] sm:$0xff]
      %v337 = vld [vmem:[%s314 + $0x18] sm:$0xff]
      %v338 = vunpack.c.l.bf16 %v334
      %v339 = vunpack.c.h.bf16 %v334
      %v340 = vunpack.c.l.bf16 %v335
      %v341 = vunpack.c.h.bf16 %v335
      %v342 = vunpack.c.l.bf16 %v336
      %v343 = vunpack.c.h.bf16 %v336
      %v344 = vunpack.c.l.bf16 %v337
      %v345 = vunpack.c.h.bf16 %v337
      %v346 = vld [vmem:[%s318] sm:$0xff]
      %348 = vset.pattern.permute.xlu0 0
      %349 = vperm.xlu0 %348, %v346
      %v350 = vpop.permute.xlu0 %349
      %v352 = vmul.f32 %v338, %v350
      %v353 = vmul.f32 %v339, %v350
      %v354 = vmul.f32 %v340, %v350
      %v355 = vmul.f32 %v341, %v350
      %v356 = vmul.f32 %v342, %v350
      %v357 = vmul.f32 %v343, %v350
      %v358 = vmul.f32 %v344, %v350
      %v359 = vmul.f32 %v345, %v350
      %v360 = vld [vmem:[%s322] sm:$0xff]
      %362 = vset.pattern.permute.xlu0 0
      %363 = vperm.xlu0 %362, %v360
      %v364 = vpop.permute.xlu0 %363
      %v366 = vadd.f32 %v352, %v364
      %v367 = vadd.f32 %v353, %v364
      %v368 = vadd.f32 %v354, %v364
      %v369 = vadd.f32 %v355, %v364
      %v370 = vadd.f32 %v356, %v364
      %v371 = vadd.f32 %v357, %v364
      %v372 = vadd.f32 %v358, %v364
      %v373 = vadd.f32 %v359, %v364
      %v374 = vmax.f32 %v366, 0.0
      %v375 = vmax.f32 %v367, 0.0
      %v376 = vmax.f32 %v368, 0.0
      %v377 = vmax.f32 %v369, 0.0
      %v378 = vmax.f32 %v370, 0.0
      %v379 = vmax.f32 %v371, 0.0
      %v380 = vmax.f32 %v372, 0.0
      %v381 = vmax.f32 %v373, 0.0
      %382 = vrot.lane.b32.xlu0 %v374, 33
      %v383 = vpop.permute.xlu0 %382
      %384 = vrot.lane.b32.xlu0 %v375, 33
      %v385 = vpop.permute.xlu0 %384
      %386 = vrot.lane.b32.xlu0 %v376, 33
      %v387 = vpop.permute.xlu0 %386
      %388 = vrot.lane.b32.xlu0 %v377, 33
      %v389 = vpop.permute.xlu0 %388
      %390 = vrot.lane.b32.xlu0 %v378, 33
      %v391 = vpop.permute.xlu0 %390
      %392 = vrot.lane.b32.xlu0 %v379, 33
      %v393 = vpop.permute.xlu0 %392
      %394 = vrot.lane.b32.xlu0 %v380, 33
      %v395 = vpop.permute.xlu0 %394
      %396 = vrot.lane.b32.xlu0 %v381, 33
      %v397 = vpop.permute.xlu0 %396
      %v398 = vlaneseq
      %v399 = vand.u32 %v398, 127
      %vm400 = vcmp.lt.s32.totalorder %v399, 33
      %v401 = vsel %vm400, %v395, %v397
      %v402 = vsel %vm400, %v393, %v395
      %v403 = vsel %vm400, %v391, %v393
      %v404 = vsel %vm400, %v389, %v391
      %v405 = vsel %vm400, %v387, %v389
      %v406 = vsel %vm400, %v385, %v387
      %v407 = vsel %vm400, %v383, %v385
      %v408 = vsel %vm400, %v397, %v383
      %v409 = vld [vmem:[%s5] ss:$8 sm:$0xf]
      %v410 = vld [vmem:[%s5] ss:$8 sm:$0xf0]
      %v411 = vor.u32 %v409, %v410
      %v413 = vlaneseq
      %v414 = vshrl.u32 %v413, 7
      %v415 = vsub.s32 0, %v414
      %v416 = vrot.slane %v411, %v415
      %v417 = vlaneseq
      %v418 = vshrl.u32 %v417, 7
      %v419 = vsub.s32 1, %v418
      %v420 = vrot.slane %v411, %v419
      %v421 = vlaneseq
      %v422 = vshrl.u32 %v421, 7
      %v423 = vsub.s32 2, %v422
      %v424 = vrot.slane %v411, %v423
      %v425 = vlaneseq
      %v426 = vshrl.u32 %v425, 7
      %v427 = vsub.s32 3, %v426
      %v428 = vrot.slane %v411, %v427
      %v429 = vlaneseq
      %v430 = vshrl.u32 %v429, 7
      %v431 = vsub.s32 4, %v430
      %v432 = vrot.slane %v411, %v431
      %v433 = vlaneseq
      %v434 = vshrl.u32 %v433, 7
      %v435 = vsub.s32 5, %v434
      %v436 = vrot.slane %v411, %v435
      %v437 = vlaneseq
      %v438 = vshrl.u32 %v437, 7
      %v439 = vsub.s32 6, %v438
      %v440 = vrot.slane %v411, %v439
      %v441 = vlaneseq
      %v442 = vshrl.u32 %v441, 7
      %v443 = vsub.s32 7, %v442
      %v444 = vrot.slane %v411, %v443
      %v453 = vmul.f32 %v408, %v416
      %v454 = vmul.f32 %v407, %v420
      %v455 = vmul.f32 %v406, %v424
      %v456 = vmul.f32 %v405, %v428
      %v457 = vmul.f32 %v404, %v432
      %v458 = vmul.f32 %v403, %v436
      %v459 = vmul.f32 %v402, %v440
      %v460 = vmul.f32 %v401, %v444
      %461 = vst [vmem:[#allocation2] sm:$0xff] %v453
      %462 = vst [vmem:[#allocation2 + $0x8] sm:$0xff] %v454
      %463 = vst [vmem:[#allocation2 + $0x10] sm:$0xff] %v455
      %464 = vst [vmem:[#allocation2 + $0x18] sm:$0xff] %v456
      %465 = vst [vmem:[#allocation2 + $0x20] sm:$0xff] %v457
      %466 = vst [vmem:[#allocation2 + $0x28] sm:$0xff] %v458
      %467 = vst [vmem:[#allocation2 + $0x30] sm:$0xff] %v459
      %468 = vst [vmem:[#allocation2 + $0x38] sm:$0xff] %v460
      %469 = vrot.lane.b32.xlu0 %v374, 32
      %v470 = vpop.permute.xlu0 %469
      %471 = vrot.lane.b32.xlu0 %v375, 32
      %v472 = vpop.permute.xlu0 %471
      %473 = vrot.lane.b32.xlu0 %v376, 32
      %v474 = vpop.permute.xlu0 %473
      %475 = vrot.lane.b32.xlu0 %v377, 32
      %v476 = vpop.permute.xlu0 %475
      %477 = vrot.lane.b32.xlu0 %v378, 32
      %v478 = vpop.permute.xlu0 %477
      %479 = vrot.lane.b32.xlu0 %v379, 32
      %v480 = vpop.permute.xlu0 %479
      %481 = vrot.lane.b32.xlu0 %v380, 32
      %v482 = vpop.permute.xlu0 %481
      %483 = vrot.lane.b32.xlu0 %v381, 32
      %v484 = vpop.permute.xlu0 %483
      %vm485 = vcmp.lt.s32.totalorder %v399, 32
      %v486 = vsel %vm485, %v482, %v484
      %v487 = vsel %vm485, %v480, %v482
      %v488 = vsel %vm485, %v478, %v480
      %v489 = vsel %vm485, %v476, %v478
      %v490 = vsel %vm485, %v474, %v476
      %v491 = vsel %vm485, %v472, %v474
      %v492 = vsel %vm485, %v470, %v472
      %v493 = vsel %vm485, %v484, %v470
      %s494 = scalar_lea.vmem %s5, 1
      %v495 = vld [vmem:[%s494] ss:$8 sm:$0xf]
      %v496 = vld [vmem:[%s494] ss:$8 sm:$0xf0]
      %v497 = vor.u32 %v495, %v496
      %v499 = vlaneseq
      %v500 = vshrl.u32 %v499, 7
      %v501 = vsub.s32 0, %v500
      %v502 = vrot.slane %v497, %v501
      %v503 = vlaneseq
      %v504 = vshrl.u32 %v503, 7
      %v505 = vsub.s32 1, %v504
      %v506 = vrot.slane %v497, %v505
      %v507 = vlaneseq
      %v508 = vshrl.u32 %v507, 7
      %v509 = vsub.s32 2, %v508
      %v510 = vrot.slane %v497, %v509
      %v511 = vlaneseq
      %v512 = vshrl.u32 %v511, 7
      %v513 = vsub.s32 3, %v512
      %v514 = vrot.slane %v497, %v513
      %v515 = vlaneseq
      %v516 = vshrl.u32 %v515, 7
      %v517 = vsub.s32 4, %v516
      %v518 = vrot.slane %v497, %v517
      %v519 = vlaneseq
      %v520 = vshrl.u32 %v519, 7
      %v521 = vsub.s32 5, %v520
      %v522 = vrot.slane %v497, %v521
      %v523 = vlaneseq
      %v524 = vshrl.u32 %v523, 7
      %v525 = vsub.s32 6, %v524
      %v526 = vrot.slane %v497, %v525
      %v527 = vlaneseq
      %v528 = vshrl.u32 %v527, 7
      %v529 = vsub.s32 7, %v528
      %v530 = vrot.slane %v497, %v529
      %v539 = vmul.f32 %v493, %v502
      %v540 = vmul.f32 %v492, %v506
      %v541 = vmul.f32 %v491, %v510
      %v542 = vmul.f32 %v490, %v514
      %v543 = vmul.f32 %v489, %v518
      %v544 = vmul.f32 %v488, %v522
      %v545 = vmul.f32 %v487, %v526
      %v546 = vmul.f32 %v486, %v530
      %547 = vst [vmem:[#allocation2 + $0x40] sm:$0xff] %v539
      %548 = vst [vmem:[#allocation2 + $0x48] sm:$0xff] %v540
      %549 = vst [vmem:[#allocation2 + $0x50] sm:$0xff] %v541
      %550 = vst [vmem:[#allocation2 + $0x58] sm:$0xff] %v542
      %551 = vst [vmem:[#allocation2 + $0x60] sm:$0xff] %v543
      %552 = vst [vmem:[#allocation2 + $0x68] sm:$0xff] %v544
      %553 = vst [vmem:[#allocation2 + $0x70] sm:$0xff] %v545
      %554 = vst [vmem:[#allocation2 + $0x78] sm:$0xff] %v546
      %555 = vrot.lane.b32.xlu0 %v374, 31
      %v556 = vpop.permute.xlu0 %555
      %557 = vrot.lane.b32.xlu0 %v375, 31
      %v558 = vpop.permute.xlu0 %557
      %559 = vrot.lane.b32.xlu0 %v376, 31
      %v560 = vpop.permute.xlu0 %559
      %561 = vrot.lane.b32.xlu0 %v377, 31
      %v562 = vpop.permute.xlu0 %561
      %563 = vrot.lane.b32.xlu0 %v378, 31
      %v564 = vpop.permute.xlu0 %563
      %565 = vrot.lane.b32.xlu0 %v379, 31
      %v566 = vpop.permute.xlu0 %565
      %567 = vrot.lane.b32.xlu0 %v380, 31
      %v568 = vpop.permute.xlu0 %567
      %569 = vrot.lane.b32.xlu0 %v381, 31
      %v570 = vpop.permute.xlu0 %569
      %vm571 = vcmp.lt.s32.totalorder %v399, 31
      %v572 = vsel %vm571, %v568, %v570
      %v573 = vsel %vm571, %v566, %v568
      %v574 = vsel %vm571, %v564, %v566
      %v575 = vsel %vm571, %v562, %v564
      %v576 = vsel %vm571, %v560, %v562
      %v577 = vsel %vm571, %v558, %v560
      %v578 = vsel %vm571, %v556, %v558
      %v579 = vsel %vm571, %v570, %v556
      %s580 = scalar_lea.vmem %s5, 2
      %v581 = vld [vmem:[%s580] ss:$8 sm:$0xf]
      %v582 = vld [vmem:[%s580] ss:$8 sm:$0xf0]
      %v583 = vor.u32 %v581, %v582
      %v585 = vlaneseq
      %v586 = vshrl.u32 %v585, 7
      %v587 = vsub.s32 0, %v586
      %v588 = vrot.slane %v583, %v587
      %v589 = vlaneseq
      %v590 = vshrl.u32 %v589, 7
      %v591 = vsub.s32 1, %v590
      %v592 = vrot.slane %v583, %v591
      %v593 = vlaneseq
      %v594 = vshrl.u32 %v593, 7
      %v595 = vsub.s32 2, %v594
      %v596 = vrot.slane %v583, %v595
      %v597 = vlaneseq
      %v598 = vshrl.u32 %v597, 7
      %v599 = vsub.s32 3, %v598
      %v600 = vrot.slane %v583, %v599
      %v601 = vlaneseq
      %v602 = vshrl.u32 %v601, 7
      %v603 = vsub.s32 4, %v602
      %v604 = vrot.slane %v583, %v603
      %v605 = vlaneseq
      %v606 = vshrl.u32 %v605, 7
      %v607 = vsub.s32 5, %v606
      %v608 = vrot.slane %v583, %v607
      %v609 = vlaneseq
      %v610 = vshrl.u32 %v609, 7
      %v611 = vsub.s32 6, %v610
      %v612 = vrot.slane %v583, %v611
      %v613 = vlaneseq
      %v614 = vshrl.u32 %v613, 7
      %v615 = vsub.s32 7, %v614
      %v616 = vrot.slane %v583, %v615
      %v625 = vmul.f32 %v579, %v588
      %v626 = vmul.f32 %v578, %v592
      %v627 = vmul.f32 %v577, %v596
      %v628 = vmul.f32 %v576, %v600
      %v629 = vmul.f32 %v575, %v604
      %v630 = vmul.f32 %v574, %v608
      %v631 = vmul.f32 %v573, %v612
      %v632 = vmul.f32 %v572, %v616
      %633 = vst [vmem:[#allocation2 + $0x80] sm:$0xff] %v625
      %634 = vst [vmem:[#allocation2 + $0x88] sm:$0xff] %v626
      %635 = vst [vmem:[#allocation2 + $0x90] sm:$0xff] %v627
      %636 = vst [vmem:[#allocation2 + $0x98] sm:$0xff] %v628
      %637 = vst [vmem:[#allocation2 + $0xa0] sm:$0xff] %v629
      %638 = vst [vmem:[#allocation2 + $0xa8] sm:$0xff] %v630
      %639 = vst [vmem:[#allocation2 + $0xb0] sm:$0xff] %v631
      %640 = vst [vmem:[#allocation2 + $0xb8] sm:$0xff] %v632
      %641 = vrot.lane.b32.xlu0 %v374, 1
      %v642 = vpop.permute.xlu0 %641
      %643 = vrot.lane.b32.xlu0 %v375, 1
      %v644 = vpop.permute.xlu0 %643
      %645 = vrot.lane.b32.xlu0 %v376, 1
      %v646 = vpop.permute.xlu0 %645
      %647 = vrot.lane.b32.xlu0 %v377, 1
      %v648 = vpop.permute.xlu0 %647
      %649 = vrot.lane.b32.xlu0 %v378, 1
      %v650 = vpop.permute.xlu0 %649
      %651 = vrot.lane.b32.xlu0 %v379, 1
      %v652 = vpop.permute.xlu0 %651
      %653 = vrot.lane.b32.xlu0 %v380, 1
      %v654 = vpop.permute.xlu0 %653
      %655 = vrot.lane.b32.xlu0 %v381, 1
      %v656 = vpop.permute.xlu0 %655
      %vm657 = vcmp.lt.s32.totalorder %v399, 1
      %v658 = vsel %vm657, %v654, %v656
      %v659 = vsel %vm657, %v652, %v654
      %v660 = vsel %vm657, %v650, %v652
      %v661 = vsel %vm657, %v648, %v650
      %v662 = vsel %vm657, %v646, %v648
      %v663 = vsel %vm657, %v644, %v646
      %v664 = vsel %vm657, %v642, %v644
      %v665 = vsel %vm657, %v656, %v642
      %s666 = scalar_lea.vmem %s5, 3
      %v667 = vld [vmem:[%s666] ss:$8 sm:$0xf]
      %v668 = vld [vmem:[%s666] ss:$8 sm:$0xf0]
      %v669 = vor.u32 %v667, %v668
      %v671 = vlaneseq
      %v672 = vshrl.u32 %v671, 7
      %v673 = vsub.s32 0, %v672
      %v674 = vrot.slane %v669, %v673
      %v675 = vlaneseq
      %v676 = vshrl.u32 %v675, 7
      %v677 = vsub.s32 1, %v676
      %v678 = vrot.slane %v669, %v677
      %v679 = vlaneseq
      %v680 = vshrl.u32 %v679, 7
      %v681 = vsub.s32 2, %v680
      %v682 = vrot.slane %v669, %v681
      %v683 = vlaneseq
      %v684 = vshrl.u32 %v683, 7
      %v685 = vsub.s32 3, %v684
      %v686 = vrot.slane %v669, %v685
      %v687 = vlaneseq
      %v688 = vshrl.u32 %v687, 7
      %v689 = vsub.s32 4, %v688
      %v690 = vrot.slane %v669, %v689
      %v691 = vlaneseq
      %v692 = vshrl.u32 %v691, 7
      %v693 = vsub.s32 5, %v692
      %v694 = vrot.slane %v669, %v693
      %v695 = vlaneseq
      %v696 = vshrl.u32 %v695, 7
      %v697 = vsub.s32 6, %v696
      %v698 = vrot.slane %v669, %v697
      %v699 = vlaneseq
      %v700 = vshrl.u32 %v699, 7
      %v701 = vsub.s32 7, %v700
      %v702 = vrot.slane %v669, %v701
      %v711 = vmul.f32 %v665, %v674
      %v712 = vmul.f32 %v664, %v678
      %v713 = vmul.f32 %v663, %v682
      %v714 = vmul.f32 %v662, %v686
      %v715 = vmul.f32 %v661, %v690
      %v716 = vmul.f32 %v660, %v694
      %v717 = vmul.f32 %v659, %v698
      %v718 = vmul.f32 %v658, %v702
      %719 = vst [vmem:[#allocation2 + $0xc0] sm:$0xff] %v711
      %720 = vst [vmem:[#allocation2 + $0xc8] sm:$0xff] %v712
      %721 = vst [vmem:[#allocation2 + $0xd0] sm:$0xff] %v713
      %722 = vst [vmem:[#allocation2 + $0xd8] sm:$0xff] %v714
      %723 = vst [vmem:[#allocation2 + $0xe0] sm:$0xff] %v715
      %724 = vst [vmem:[#allocation2 + $0xe8] sm:$0xff] %v716
      %725 = vst [vmem:[#allocation2 + $0xf0] sm:$0xff] %v717
      %726 = vst [vmem:[#allocation2 + $0xf8] sm:$0xff] %v718
      %727 = vst [vmem:[#allocation2 + $0x100] sm:$0xff] %v374
      %728 = vst [vmem:[#allocation2 + $0x108] sm:$0xff] %v375
      %729 = vst [vmem:[#allocation2 + $0x110] sm:$0xff] %v376
      %730 = vst [vmem:[#allocation2 + $0x118] sm:$0xff] %v377
      %731 = vst [vmem:[#allocation2 + $0x120] sm:$0xff] %v378
      %732 = vst [vmem:[#allocation2 + $0x128] sm:$0xff] %v379
      %733 = vst [vmem:[#allocation2 + $0x130] sm:$0xff] %v380
      %734 = vst [vmem:[#allocation2 + $0x138] sm:$0xff] %v381
      %735 = vrot.lane.b32.xlu0 %v374, 127
      %v736 = vpop.permute.xlu0 %735
      %737 = vrot.lane.b32.xlu0 %v375, 127
      %v738 = vpop.permute.xlu0 %737
      %739 = vrot.lane.b32.xlu0 %v376, 127
      %v740 = vpop.permute.xlu0 %739
      %741 = vrot.lane.b32.xlu0 %v377, 127
      %v742 = vpop.permute.xlu0 %741
      %743 = vrot.lane.b32.xlu0 %v378, 127
      %v744 = vpop.permute.xlu0 %743
      %745 = vrot.lane.b32.xlu0 %v379, 127
      %v746 = vpop.permute.xlu0 %745
      %747 = vrot.lane.b32.xlu0 %v380, 127
      %v748 = vpop.permute.xlu0 %747
      %749 = vrot.lane.b32.xlu0 %v381, 127
      %v750 = vpop.permute.xlu0 %749
      %vm751 = vcmp.lt.s32.totalorder %v399, 127
      %v752 = vsel %vm751, %v748, %v750
      %v753 = vsel %vm751, %v746, %v748
      %v754 = vsel %vm751, %v744, %v746
      %v755 = vsel %vm751, %v742, %v744
      %v756 = vsel %vm751, %v740, %v742
      %v757 = vsel %vm751, %v738, %v740
      %v758 = vsel %vm751, %v736, %v738
      %v759 = vsel %vm751, %v750, %v736
      %s760 = scalar_lea.vmem %s5, 5
      %v761 = vld [vmem:[%s760] ss:$8 sm:$0xf]
      %v762 = vld [vmem:[%s760] ss:$8 sm:$0xf0]
      %v763 = vor.u32 %v761, %v762
      %v765 = vlaneseq
      %v766 = vshrl.u32 %v765, 7
      %v767 = vsub.s32 0, %v766
      %v768 = vrot.slane %v763, %v767
      %v769 = vlaneseq
      %v770 = vshrl.u32 %v769, 7
      %v771 = vsub.s32 1, %v770
      %v772 = vrot.slane %v763, %v771
      %v773 = vlaneseq
      %v774 = vshrl.u32 %v773, 7
      %v775 = vsub.s32 2, %v774
      %v776 = vrot.slane %v763, %v775
      %v777 = vlaneseq
      %v778 = vshrl.u32 %v777, 7
      %v779 = vsub.s32 3, %v778
      %v780 = vrot.slane %v763, %v779
      %v781 = vlaneseq
      %v782 = vshrl.u32 %v781, 7
      %v783 = vsub.s32 4, %v782
      %v784 = vrot.slane %v763, %v783
      %v785 = vlaneseq
      %v786 = vshrl.u32 %v785, 7
      %v787 = vsub.s32 5, %v786
      %v788 = vrot.slane %v763, %v787
      %v789 = vlaneseq
      %v790 = vshrl.u32 %v789, 7
      %v791 = vsub.s32 6, %v790
      %v792 = vrot.slane %v763, %v791
      %v793 = vlaneseq
      %v794 = vshrl.u32 %v793, 7
      %v795 = vsub.s32 7, %v794
      %v796 = vrot.slane %v763, %v795
      %v805 = vmul.f32 %v758, %v768
      %v806 = vmul.f32 %v757, %v772
      %v807 = vmul.f32 %v756, %v776
      %v808 = vmul.f32 %v755, %v780
      %v809 = vmul.f32 %v754, %v784
      %v810 = vmul.f32 %v753, %v788
      %v811 = vmul.f32 %v752, %v792
      %v812 = vmul.f32 %v759, %v796
      %813 = vst [vmem:[#allocation2 + $0x140] sm:$0xff] %v805
      %814 = vst [vmem:[#allocation2 + $0x148] sm:$0xff] %v806
      %815 = vst [vmem:[#allocation2 + $0x150] sm:$0xff] %v807
      %816 = vst [vmem:[#allocation2 + $0x158] sm:$0xff] %v808
      %817 = vst [vmem:[#allocation2 + $0x160] sm:$0xff] %v809
      %818 = vst [vmem:[#allocation2 + $0x168] sm:$0xff] %v810
      %819 = vst [vmem:[#allocation2 + $0x170] sm:$0xff] %v811
      %820 = vst [vmem:[#allocation2 + $0x178] sm:$0xff] %v812
      %821 = vrot.lane.b32.xlu0 %v374, 97
      %v822 = vpop.permute.xlu0 %821
      %823 = vrot.lane.b32.xlu0 %v375, 97
      %v824 = vpop.permute.xlu0 %823
      %825 = vrot.lane.b32.xlu0 %v376, 97
      %v826 = vpop.permute.xlu0 %825
      %827 = vrot.lane.b32.xlu0 %v377, 97
      %v828 = vpop.permute.xlu0 %827
      %829 = vrot.lane.b32.xlu0 %v378, 97
      %v830 = vpop.permute.xlu0 %829
      %831 = vrot.lane.b32.xlu0 %v379, 97
      %v832 = vpop.permute.xlu0 %831
      %833 = vrot.lane.b32.xlu0 %v380, 97
      %v834 = vpop.permute.xlu0 %833
      %835 = vrot.lane.b32.xlu0 %v381, 97
      %v836 = vpop.permute.xlu0 %835
      %vm837 = vcmp.lt.s32.totalorder %v399, 97
      %v838 = vsel %vm837, %v834, %v836
      %v839 = vsel %vm837, %v832, %v834
      %v840 = vsel %vm837, %v830, %v832
      %v841 = vsel %vm837, %v828, %v830
      %v842 = vsel %vm837, %v826, %v828
      %v843 = vsel %vm837, %v824, %v826
      %v844 = vsel %vm837, %v822, %v824
      %v845 = vsel %vm837, %v836, %v822
      %s846 = scalar_lea.vmem %s5, 6
      %v847 = vld [vmem:[%s846] ss:$8 sm:$0xf]
      %v848 = vld [vmem:[%s846] ss:$8 sm:$0xf0]
      %v849 = vor.u32 %v847, %v848
      %v851 = vlaneseq
      %v852 = vshrl.u32 %v851, 7
      %v853 = vsub.s32 0, %v852
      %v854 = vrot.slane %v849, %v853
      %v855 = vlaneseq
      %v856 = vshrl.u32 %v855, 7
      %v857 = vsub.s32 1, %v856
      %v858 = vrot.slane %v849, %v857
      %v859 = vlaneseq
      %v860 = vshrl.u32 %v859, 7
      %v861 = vsub.s32 2, %v860
      %v862 = vrot.slane %v849, %v861
      %v863 = vlaneseq
      %v864 = vshrl.u32 %v863, 7
      %v865 = vsub.s32 3, %v864
      %v866 = vrot.slane %v849, %v865
      %v867 = vlaneseq
      %v868 = vshrl.u32 %v867, 7
      %v869 = vsub.s32 4, %v868
      %v870 = vrot.slane %v849, %v869
      %v871 = vlaneseq
      %v872 = vshrl.u32 %v871, 7
      %v873 = vsub.s32 5, %v872
      %v874 = vrot.slane %v849, %v873
      %v875 = vlaneseq
      %v876 = vshrl.u32 %v875, 7
      %v877 = vsub.s32 6, %v876
      %v878 = vrot.slane %v849, %v877
      %v879 = vlaneseq
      %v880 = vshrl.u32 %v879, 7
      %v881 = vsub.s32 7, %v880
      %v882 = vrot.slane %v849, %v881
      %v891 = vmul.f32 %v844, %v854
      %v892 = vmul.f32 %v843, %v858
      %v893 = vmul.f32 %v842, %v862
      %v894 = vmul.f32 %v841, %v866
      %v895 = vmul.f32 %v840, %v870
      %v896 = vmul.f32 %v839, %v874
      %v897 = vmul.f32 %v838, %v878
      %v898 = vmul.f32 %v845, %v882
      %899 = vst [vmem:[#allocation2 + $0x180] sm:$0xff] %v891
      %900 = vst [vmem:[#allocation2 + $0x188] sm:$0xff] %v892
      %901 = vst [vmem:[#allocation2 + $0x190] sm:$0xff] %v893
      %902 = vst [vmem:[#allocation2 + $0x198] sm:$0xff] %v894
      %903 = vst [vmem:[#allocation2 + $0x1a0] sm:$0xff] %v895
      %904 = vst [vmem:[#allocation2 + $0x1a8] sm:$0xff] %v896
      %905 = vst [vmem:[#allocation2 + $0x1b0] sm:$0xff] %v897
      %906 = vst [vmem:[#allocation2 + $0x1b8] sm:$0xff] %v898
      %907 = vrot.lane.b32.xlu0 %v374, 96
      %v908 = vpop.permute.xlu0 %907
      %909 = vrot.lane.b32.xlu0 %v375, 96
      %v910 = vpop.permute.xlu0 %909
      %911 = vrot.lane.b32.xlu0 %v376, 96
      %v912 = vpop.permute.xlu0 %911
      %913 = vrot.lane.b32.xlu0 %v377, 96
      %v914 = vpop.permute.xlu0 %913
      %915 = vrot.lane.b32.xlu0 %v378, 96
      %v916 = vpop.permute.xlu0 %915
      %917 = vrot.lane.b32.xlu0 %v379, 96
      %v918 = vpop.permute.xlu0 %917
      %919 = vrot.lane.b32.xlu0 %v380, 96
      %v920 = vpop.permute.xlu0 %919
      %921 = vrot.lane.b32.xlu0 %v381, 96
      %v922 = vpop.permute.xlu0 %921
      %vm923 = vcmp.lt.s32.totalorder %v399, 96
      %v924 = vsel %vm923, %v920, %v922
      %v925 = vsel %vm923, %v918, %v920
      %v926 = vsel %vm923, %v916, %v918
      %v927 = vsel %vm923, %v914, %v916
      %v928 = vsel %vm923, %v912, %v914
      %v929 = vsel %vm923, %v910, %v912
      %v930 = vsel %vm923, %v908, %v910
      %v931 = vsel %vm923, %v922, %v908
      %s932 = scalar_lea.vmem %s5, 7
      %v933 = vld [vmem:[%s932] ss:$8 sm:$0xf]
      %v934 = vld [vmem:[%s932] ss:$8 sm:$0xf0]
      %v935 = vor.u32 %v933, %v934
      %v937 = vlaneseq
      %v938 = vshrl.u32 %v937, 7
      %v939 = vsub.s32 0, %v938
      %v940 = vrot.slane %v935, %v939
      %v941 = vlaneseq
      %v942 = vshrl.u32 %v941, 7
      %v943 = vsub.s32 1, %v942
      %v944 = vrot.slane %v935, %v943
      %v945 = vlaneseq
      %v946 = vshrl.u32 %v945, 7
      %v947 = vsub.s32 2, %v946
      %v948 = vrot.slane %v935, %v947
      %v949 = vlaneseq
      %v950 = vshrl.u32 %v949, 7
      %v951 = vsub.s32 3, %v950
      %v952 = vrot.slane %v935, %v951
      %v953 = vlaneseq
      %v954 = vshrl.u32 %v953, 7
      %v955 = vsub.s32 4, %v954
      %v956 = vrot.slane %v935, %v955
      %v957 = vlaneseq
      %v958 = vshrl.u32 %v957, 7
      %v959 = vsub.s32 5, %v958
      %v960 = vrot.slane %v935, %v959
      %v961 = vlaneseq
      %v962 = vshrl.u32 %v961, 7
      %v963 = vsub.s32 6, %v962
      %v964 = vrot.slane %v935, %v963
      %v965 = vlaneseq
      %v966 = vshrl.u32 %v965, 7
      %v967 = vsub.s32 7, %v966
      %v968 = vrot.slane %v935, %v967
      %v977 = vmul.f32 %v930, %v940
      %v978 = vmul.f32 %v929, %v944
      %v979 = vmul.f32 %v928, %v948
      %v980 = vmul.f32 %v927, %v952
      %v981 = vmul.f32 %v926, %v956
      %v982 = vmul.f32 %v925, %v960
      %v983 = vmul.f32 %v924, %v964
      %v984 = vmul.f32 %v931, %v968
      %985 = vst [vmem:[#allocation2 + $0x1c0] sm:$0xff] %v977
      %986 = vst [vmem:[#allocation2 + $0x1c8] sm:$0xff] %v978
      %987 = vst [vmem:[#allocation2 + $0x1d0] sm:$0xff] %v979
      %988 = vst [vmem:[#allocation2 + $0x1d8] sm:$0xff] %v980
      %989 = vst [vmem:[#allocation2 + $0x1e0] sm:$0xff] %v981
      %990 = vst [vmem:[#allocation2 + $0x1e8] sm:$0xff] %v982
      %991 = vst [vmem:[#allocation2 + $0x1f0] sm:$0xff] %v983
      %992 = vst [vmem:[#allocation2 + $0x1f8] sm:$0xff] %v984
      %993 = vrot.lane.b32.xlu0 %v374, 95
      %v994 = vpop.permute.xlu0 %993
      %995 = vrot.lane.b32.xlu0 %v375, 95
      %v996 = vpop.permute.xlu0 %995
      %997 = vrot.lane.b32.xlu0 %v376, 95
      %v998 = vpop.permute.xlu0 %997
      %999 = vrot.lane.b32.xlu0 %v377, 95
      %v1000 = vpop.permute.xlu0 %999
      %1001 = vrot.lane.b32.xlu0 %v378, 95
      %v1002 = vpop.permute.xlu0 %1001
      %1003 = vrot.lane.b32.xlu0 %v379, 95
      %v1004 = vpop.permute.xlu0 %1003
      %1005 = vrot.lane.b32.xlu0 %v380, 95
      %v1006 = vpop.permute.xlu0 %1005
      %1007 = vrot.lane.b32.xlu0 %v381, 95
      %v1008 = vpop.permute.xlu0 %1007
      %vm1009 = vcmp.lt.s32.totalorder %v399, 95
      %v1010 = vsel %vm1009, %v1006, %v1008
      %v1011 = vsel %vm1009, %v1004, %v1006
      %v1012 = vsel %vm1009, %v1002, %v1004
      %v1013 = vsel %vm1009, %v1000, %v1002
      %v1014 = vsel %vm1009, %v998, %v1000
      %v1015 = vsel %vm1009, %v996, %v998
      %v1016 = vsel %vm1009, %v994, %v996
      %v1017 = vsel %vm1009, %v1008, %v994
      %s1018 = scalar_lea.vmem %s5, 64
      %v1019 = vld [vmem:[%s1018] ss:$8 sm:$0xf]
      %v1020 = vld [vmem:[%s1018] ss:$8 sm:$0xf0]
      %v1021 = vor.u32 %v1019, %v1020
      %v1023 = vlaneseq
      %v1024 = vshrl.u32 %v1023, 7
      %v1025 = vsub.s32 0, %v1024
      %v1026 = vrot.slane %v1021, %v1025
      %v1027 = vlaneseq
      %v1028 = vshrl.u32 %v1027, 7
      %v1029 = vsub.s32 1, %v1028
      %v1030 = vrot.slane %v1021, %v1029
      %v1031 = vlaneseq
      %v1032 = vshrl.u32 %v1031, 7
      %v1033 = vsub.s32 2, %v1032
      %v1034 = vrot.slane %v1021, %v1033
      %v1035 = vlaneseq
      %v1036 = vshrl.u32 %v1035, 7
      %v1037 = vsub.s32 3, %v1036
      %v1038 = vrot.slane %v1021, %v1037
      %v1039 = vlaneseq
      %v1040 = vshrl.u32 %v1039, 7
      %v1041 = vsub.s32 4, %v1040
      %v1042 = vrot.slane %v1021, %v1041
      %v1043 = vlaneseq
      %v1044 = vshrl.u32 %v1043, 7
      %v1045 = vsub.s32 5, %v1044
      %v1046 = vrot.slane %v1021, %v1045
      %v1047 = vlaneseq
      %v1048 = vshrl.u32 %v1047, 7
      %v1049 = vsub.s32 6, %v1048
      %v1050 = vrot.slane %v1021, %v1049
      %v1051 = vlaneseq
      %v1052 = vshrl.u32 %v1051, 7
      %v1053 = vsub.s32 7, %v1052
      %v1054 = vrot.slane %v1021, %v1053
      %v1063 = vmul.f32 %v1016, %v1026
      %v1064 = vmul.f32 %v1015, %v1030
      %v1065 = vmul.f32 %v1014, %v1034
      %v1066 = vmul.f32 %v1013, %v1038
      %v1067 = vmul.f32 %v1012, %v1042
      %v1068 = vmul.f32 %v1011, %v1046
      %v1069 = vmul.f32 %v1010, %v1050
      %v1070 = vmul.f32 %v1017, %v1054
      %1071 = vst [vmem:[#allocation2 + $0x200] sm:$0xff] %v1063
      %1072 = vst [vmem:[#allocation2 + $0x208] sm:$0xff] %v1064
      %1073 = vst [vmem:[#allocation2 + $0x210] sm:$0xff] %v1065
      %1074 = vst [vmem:[#allocation2 + $0x218] sm:$0xff] %v1066
      %1075 = vst [vmem:[#allocation2 + $0x220] sm:$0xff] %v1067
      %1076 = vst [vmem:[#allocation2 + $0x228] sm:$0xff] %v1068
      %1077 = vst [vmem:[#allocation2 + $0x230] sm:$0xff] %v1069
      %1078 = vst [vmem:[#allocation2 + $0x238] sm:$0xff] %v1070
      %v1079 = vld [vmem:[%s3] sm:$0xf]
      %v1080 = vld [vmem:[#allocation2] sm:$0xff]
      %v1081 = vld [vmem:[#allocation2 + $0x8] sm:$0xff]
      %v1082 = vld [vmem:[#allocation2 + $0x10] sm:$0xff]
      %v1083 = vld [vmem:[#allocation2 + $0x18] sm:$0xff]
      %v1084 = vld [vmem:[#allocation2 + $0x20] sm:$0xff]
      %v1085 = vld [vmem:[#allocation2 + $0x28] sm:$0xff]
      %v1086 = vld [vmem:[#allocation2 + $0x30] sm:$0xff]
      %v1087 = vld [vmem:[#allocation2 + $0x38] sm:$0xff]
      %v1088 = vld [vmem:[#allocation2 + $0x40] sm:$0xff]
      %v1089 = vld [vmem:[#allocation2 + $0x48] sm:$0xff]
      %v1090 = vld [vmem:[#allocation2 + $0x50] sm:$0xff]
      %v1091 = vld [vmem:[#allocation2 + $0x58] sm:$0xff]
      %v1092 = vld [vmem:[#allocation2 + $0x60] sm:$0xff]
      %v1093 = vld [vmem:[#allocation2 + $0x68] sm:$0xff]
      %v1094 = vld [vmem:[#allocation2 + $0x70] sm:$0xff]
      %v1095 = vld [vmem:[#allocation2 + $0x78] sm:$0xff]
      %v1096 = vld [vmem:[#allocation2 + $0x80] sm:$0xff]
      %v1097 = vld [vmem:[#allocation2 + $0x88] sm:$0xff]
      %v1098 = vld [vmem:[#allocation2 + $0x90] sm:$0xff]
      %v1099 = vld [vmem:[#allocation2 + $0x98] sm:$0xff]
      %v1100 = vld [vmem:[#allocation2 + $0xa0] sm:$0xff]
      %v1101 = vld [vmem:[#allocation2 + $0xa8] sm:$0xff]
      %v1102 = vld [vmem:[#allocation2 + $0xb0] sm:$0xff]
      %v1103 = vld [vmem:[#allocation2 + $0xb8] sm:$0xff]
      %v1104 = vld [vmem:[#allocation2 + $0xc0] sm:$0xff]
      %v1105 = vld [vmem:[#allocation2 + $0xc8] sm:$0xff]
      %v1106 = vld [vmem:[#allocation2 + $0xd0] sm:$0xff]
      %v1107 = vld [vmem:[#allocation2 + $0xd8] sm:$0xff]
      %v1108 = vld [vmem:[#allocation2 + $0xe0] sm:$0xff]
      %v1109 = vld [vmem:[#allocation2 + $0xe8] sm:$0xff]
      %v1110 = vld [vmem:[#allocation2 + $0xf0] sm:$0xff]
      %v1111 = vld [vmem:[#allocation2 + $0xf8] sm:$0xff]
      %v1112 = vld [vmem:[#allocation2 + $0x100] sm:$0xff]
      %v1113 = vld [vmem:[#allocation2 + $0x108] sm:$0xff]
      %v1114 = vld [vmem:[#allocation2 + $0x110] sm:$0xff]
      %v1115 = vld [vmem:[#allocation2 + $0x118] sm:$0xff]
      %v1116 = vld [vmem:[#allocation2 + $0x120] sm:$0xff]
      %v1117 = vld [vmem:[#allocation2 + $0x128] sm:$0xff]
      %v1118 = vld [vmem:[#allocation2 + $0x130] sm:$0xff]
      %v1119 = vld [vmem:[#allocation2 + $0x138] sm:$0xff]
      %v1120 = vld [vmem:[#allocation2 + $0x140] sm:$0xff]
      %v1121 = vld [vmem:[#allocation2 + $0x148] sm:$0xff]
      %v1122 = vld [vmem:[#allocation2 + $0x150] sm:$0xff]
      %v1123 = vld [vmem:[#allocation2 + $0x158] sm:$0xff]
      %v1124 = vld [vmem:[#allocation2 + $0x160] sm:$0xff]
      %v1125 = vld [vmem:[#allocation2 + $0x168] sm:$0xff]
      %v1126 = vld [vmem:[#allocation2 + $0x170] sm:$0xff]
      %v1127 = vld [vmem:[#allocation2 + $0x178] sm:$0xff]
      %v1128 = vld [vmem:[#allocation2 + $0x180] sm:$0xff]
      %v1129 = vld [vmem:[#allocation2 + $0x188] sm:$0xff]
      %v1130 = vld [vmem:[#allocation2 + $0x190] sm:$0xff]
      %v1131 = vld [vmem:[#allocation2 + $0x198] sm:$0xff]
      %v1132 = vld [vmem:[#allocation2 + $0x1a0] sm:$0xff]
      %v1133 = vld [vmem:[#allocation2 + $0x1a8] sm:$0xff]
      %v1134 = vld [vmem:[#allocation2 + $0x1b0] sm:$0xff]
      %v1135 = vld [vmem:[#allocation2 + $0x1b8] sm:$0xff]
      %v1136 = vld [vmem:[#allocation2 + $0x1c0] sm:$0xff]
      %v1137 = vld [vmem:[#allocation2 + $0x1c8] sm:$0xff]
      %v1138 = vld [vmem:[#allocation2 + $0x1d0] sm:$0xff]
      %v1139 = vld [vmem:[#allocation2 + $0x1d8] sm:$0xff]
      %v1140 = vld [vmem:[#allocation2 + $0x1e0] sm:$0xff]
      %v1141 = vld [vmem:[#allocation2 + $0x1e8] sm:$0xff]
      %v1142 = vld [vmem:[#allocation2 + $0x1f0] sm:$0xff]
      %v1143 = vld [vmem:[#allocation2 + $0x1f8] sm:$0xff]
      %v1144 = vld [vmem:[#allocation2 + $0x200] sm:$0xff]
      %v1145 = vld [vmem:[#allocation2 + $0x208] sm:$0xff]
      %v1146 = vld [vmem:[#allocation2 + $0x210] sm:$0xff]
      %v1147 = vld [vmem:[#allocation2 + $0x218] sm:$0xff]
      %v1148 = vld [vmem:[#allocation2 + $0x220] sm:$0xff]
      %v1149 = vld [vmem:[#allocation2 + $0x228] sm:$0xff]
      %v1150 = vld [vmem:[#allocation2 + $0x230] sm:$0xff]
      %v1151 = vld [vmem:[#allocation2 + $0x238] sm:$0xff]
      %v1152 = vpack.c.bf16 %v1088, %v1080
      %v1153 = vpack.c.bf16 %v1089, %v1081
      %v1154 = vpack.c.bf16 %v1090, %v1082
      %v1155 = vpack.c.bf16 %v1091, %v1083
      %v1156 = vpack.c.bf16 %v1092, %v1084
      %v1157 = vpack.c.bf16 %v1093, %v1085
      %v1158 = vpack.c.bf16 %v1094, %v1086
      %v1159 = vpack.c.bf16 %v1095, %v1087
      %v1160 = vpack.c.bf16 %v1104, %v1096
      %v1161 = vpack.c.bf16 %v1105, %v1097
      %v1162 = vpack.c.bf16 %v1106, %v1098
      %v1163 = vpack.c.bf16 %v1107, %v1099
      %v1164 = vpack.c.bf16 %v1108, %v1100
      %v1165 = vpack.c.bf16 %v1109, %v1101
      %v1166 = vpack.c.bf16 %v1110, %v1102
      %v1167 = vpack.c.bf16 %v1111, %v1103
      %v1168 = vpack.c.bf16 %v1120, %v1112
      %v1169 = vpack.c.bf16 %v1121, %v1113
      %v1170 = vpack.c.bf16 %v1122, %v1114
      %v1171 = vpack.c.bf16 %v1123, %v1115
      %v1172 = vpack.c.bf16 %v1124, %v1116
      %v1173 = vpack.c.bf16 %v1125, %v1117
      %v1174 = vpack.c.bf16 %v1126, %v1118
      %v1175 = vpack.c.bf16 %v1127, %v1119
      %v1176 = vpack.c.bf16 %v1136, %v1128
      %v1177 = vpack.c.bf16 %v1137, %v1129
      %v1178 = vpack.c.bf16 %v1138, %v1130
      %v1179 = vpack.c.bf16 %v1139, %v1131
      %v1180 = vpack.c.bf16 %v1140, %v1132
      %v1181 = vpack.c.bf16 %v1141, %v1133
      %v1182 = vpack.c.bf16 %v1142, %v1134
      %v1183 = vpack.c.bf16 %v1143, %v1135
      %v1184 = vpack.c.bf16 %v1144, %v1144
      %v1185 = vpack.c.bf16 %v1145, %v1145
      %v1186 = vpack.c.bf16 %v1146, %v1146
      %v1187 = vpack.c.bf16 %v1147, %v1147
      %v1188 = vpack.c.bf16 %v1148, %v1148
      %v1189 = vpack.c.bf16 %v1149, %v1149
      %v1190 = vpack.c.bf16 %v1150, %v1150
      %v1191 = vpack.c.bf16 %v1151, %v1151
      %v1192 = vld [vmem:[%s4] sm:$0xff]
      %1194 = vset.pattern.permute.xlu0 0
      %1195 = vperm.xlu0 %1194, %v1192
      %v1196 = vpop.permute.xlu0 %1195
      %vm1198 = vcmask 588800
      %v1200 = vsel %vm1198, %v1079, 0
      %vm1202 = vcmask 1043456
      %v1204 = vsel %vm1202, %v1184, 0
      %v1207 = vsel %vm1202, %v1185, 0
      %v1210 = vsel %vm1202, %v1186, 0
      %v1213 = vsel %vm1202, %v1187, 0
      %v1216 = vsel %vm1202, %v1188, 0
      %v1219 = vsel %vm1202, %v1189, 0
      %v1222 = vsel %vm1202, %v1190, 0
      %v1225 = vsel %vm1202, %v1191, 0
      %1227 = vmatprep.subr.bf16.mxu0 0
      %1228 = vmatpush1.bf16.msra.mxu0 0
      %1229 = vmatprep.subr.bf16.mxu0 0
      %1230 = vmatpush1.bf16.msra.mxu0 0
      %1231 = vmatprep.subr.bf16.mxu0 0
      %1232 = vmatpush1.bf16.msra.mxu0 0
      %1233 = vmatprep.subr.bf16.mxu0 %v1207
      %1234 = vmatpush1.bf16.msra.mxu0 %v1204
      %1235 = vmatprep.subr.bf16.mxu0 %v1177
      %1236 = vmatpush1.bf16.msra.mxu0 %v1176
      %1237 = vmatprep.subr.bf16.mxu0 %v1169
      %1238 = vmatpush1.bf16.msra.mxu0 %v1168
      %1239 = vmatprep.subr.bf16.mxu0 %v1161
      %1240 = vmatpush1.bf16.msra.mxu0 %v1160
      %1241 = vmatprep.subr.bf16.mxu0 %v1153
      %1242 = vmatpush1.bf16.msra.mxu0 %v1152
      %1243 = vmatprep.subr.bf16.mxu0 0
      %1244 = vmatpush2.bf16.msra.mxu0 0
      %1245 = vmatprep.subr.bf16.mxu0 0
      %1246 = vmatpush2.bf16.msra.mxu0 0
      %1247 = vmatprep.subr.bf16.mxu0 0
      %1248 = vmatpush2.bf16.msra.mxu0 0
      %1249 = vmatprep.subr.bf16.mxu0 0
      %1250 = vmatpush2.bf16.msra.mxu0 0
      %1251 = vmatprep.subr.bf16.mxu0 0
      %1252 = vmatpush2.bf16.msra.mxu0 0
      %1253 = vmatprep.subr.bf16.mxu0 0
      %1254 = vmatpush2.bf16.msra.mxu0 0
      %1255 = vmatprep.subr.bf16.mxu0 0
      %1256 = vmatpush2.bf16.msra.mxu0 0
      %1257 = vmatprep.subr.bf16.mxu0 0
      %1258 = vmatpush2.bf16.msra.mxu0 0
      %1259 = vmatprep.mubr.bf16.mxu0 0
      %1260 = vmatmul.mubr.bf16.gmra.mxu0 %v1200
      %v1261 = vpop.f32.mrf.mxu0
      %v1262 = vadd.f32 %v1196, %v1261
      %v1263 = vpop.f32.mrf.mxu0
      %v1264 = vadd.f32 %v1196, %v1263
      %v1265 = vpop.f32.mrf.mxu0
      %v1266 = vpop.f32.mrf.mxu0
      %1267 = vdwg.mxu0
      %1268 = vmatprep.subr.bf16.mxu0 0
      %1269 = vmatpush1.bf16.msra.mxu0 0
      %1270 = vmatprep.subr.bf16.mxu0 0
      %1271 = vmatpush1.bf16.msra.mxu0 0
      %1272 = vmatprep.subr.bf16.mxu0 0
      %1273 = vmatpush1.bf16.msra.mxu0 0
      %1274 = vmatprep.subr.bf16.mxu0 %v1213
      %1275 = vmatpush1.bf16.msra.mxu0 %v1210
      %1276 = vmatprep.subr.bf16.mxu0 %v1179
      %1277 = vmatpush1.bf16.msra.mxu0 %v1178
      %1278 = vmatprep.subr.bf16.mxu0 %v1171
      %1279 = vmatpush1.bf16.msra.mxu0 %v1170
      %1280 = vmatprep.subr.bf16.mxu0 %v1163
      %1281 = vmatpush1.bf16.msra.mxu0 %v1162
      %1282 = vmatprep.subr.bf16.mxu0 %v1155
      %1283 = vmatpush1.bf16.msra.mxu0 %v1154
      %1284 = vmatprep.subr.bf16.mxu0 0
      %1285 = vmatpush2.bf16.msra.mxu0 0
      %1286 = vmatprep.subr.bf16.mxu0 0
      %1287 = vmatpush2.bf16.msra.mxu0 0
      %1288 = vmatprep.subr.bf16.mxu0 0
      %1289 = vmatpush2.bf16.msra.mxu0 0
      %1290 = vmatprep.subr.bf16.mxu0 0
      %1291 = vmatpush2.bf16.msra.mxu0 0
      %1292 = vmatprep.subr.bf16.mxu0 0
      %1293 = vmatpush2.bf16.msra.mxu0 0
      %1294 = vmatprep.subr.bf16.mxu0 0
      %1295 = vmatpush2.bf16.msra.mxu0 0
      %1296 = vmatprep.subr.bf16.mxu0 0
      %1297 = vmatpush2.bf16.msra.mxu0 0
      %1298 = vmatprep.subr.bf16.mxu0 0
      %1299 = vmatpush2.bf16.msra.mxu0 0
      %1300 = vmatprep.mubr.bf16.mxu0 0
      %1301 = vmatmul.mubr.bf16.gmra.mxu0 %v1200
      %v1302 = vpop.f32.mrf.mxu0
      %v1303 = vadd.f32 %v1196, %v1302
      %v1304 = vpop.f32.mrf.mxu0
      %v1305 = vadd.f32 %v1196, %v1304
      %v1306 = vpop.f32.mrf.mxu0
      %v1307 = vpop.f32.mrf.mxu0
      %1308 = vdwg.mxu0
      %1309 = vmatprep.subr.bf16.mxu0 0
      %1310 = vmatpush1.bf16.msra.mxu0 0
      %1311 = vmatprep.subr.bf16.mxu0 0
      %1312 = vmatpush1.bf16.msra.mxu0 0
      %1313 = vmatprep.subr.bf16.mxu0 0
      %1314 = vmatpush1.bf16.msra.mxu0 0
      %1315 = vmatprep.subr.bf16.mxu0 %v1219
      %1316 = vmatpush1.bf16.msra.mxu0 %v1216
      %1317 = vmatprep.subr.bf16.mxu0 %v1181
      %1318 = vmatpush1.bf16.msra.mxu0 %v1180
      %1319 = vmatprep.subr.bf16.mxu0 %v1173
      %1320 = vmatpush1.bf16.msra.mxu0 %v1172
      %1321 = vmatprep.subr.bf16.mxu0 %v1165
      %1322 = vmatpush1.bf16.msra.mxu0 %v1164
      %1323 = vmatprep.subr.bf16.mxu0 %v1157
      %1324 = vmatpush1.bf16.msra.mxu0 %v1156
      %1325 = vmatprep.subr.bf16.mxu0 0
      %1326 = vmatpush2.bf16.msra.mxu0 0
      %1327 = vmatprep.subr.bf16.mxu0 0
      %1328 = vmatpush2.bf16.msra.mxu0 0
      %1329 = vmatprep.subr.bf16.mxu0 0
      %1330 = vmatpush2.bf16.msra.mxu0 0
      %1331 = vmatprep.subr.bf16.mxu0 0
      %1332 = vmatpush2.bf16.msra.mxu0 0
      %1333 = vmatprep.subr.bf16.mxu0 0
      %1334 = vmatpush2.bf16.msra.mxu0 0
      %1335 = vmatprep.subr.bf16.mxu0 0
      %1336 = vmatpush2.bf16.msra.mxu0 0
      %1337 = vmatprep.subr.bf16.mxu0 0
      %1338 = vmatpush2.bf16.msra.mxu0 0
      %1339 = vmatprep.subr.bf16.mxu0 0
      %1340 = vmatpush2.bf16.msra.mxu0 0
      %1341 = vmatprep.mubr.bf16.mxu0 0
      %1342 = vmatmul.mubr.bf16.gmra.mxu0 %v1200
      %v1343 = vpop.f32.mrf.mxu0
      %v1344 = vadd.f32 %v1196, %v1343
      %v1345 = vpop.f32.mrf.mxu0
      %v1346 = vadd.f32 %v1196, %v1345
      %v1347 = vpop.f32.mrf.mxu0
      %v1348 = vpop.f32.mrf.mxu0
      %1349 = vdwg.mxu0
      %1350 = vmatprep.subr.bf16.mxu0 0
      %1351 = vmatpush1.bf16.msra.mxu0 0
      %1352 = vmatprep.subr.bf16.mxu0 0
      %1353 = vmatpush1.bf16.msra.mxu0 0
      %1354 = vmatprep.subr.bf16.mxu0 0
      %1355 = vmatpush1.bf16.msra.mxu0 0
      %1356 = vmatprep.subr.bf16.mxu0 %v1225
      %1357 = vmatpush1.bf16.msra.mxu0 %v1222
      %1358 = vmatprep.subr.bf16.mxu0 %v1183
      %1359 = vmatpush1.bf16.msra.mxu0 %v1182
      %1360 = vmatprep.subr.bf16.mxu0 %v1175
      %1361 = vmatpush1.bf16.msra.mxu0 %v1174
      %1362 = vmatprep.subr.bf16.mxu0 %v1167
      %1363 = vmatpush1.bf16.msra.mxu0 %v1166
      %1364 = vmatprep.subr.bf16.mxu0 %v1159
      %1365 = vmatpush1.bf16.msra.mxu0 %v1158
      %1366 = vmatprep.subr.bf16.mxu0 0
      %1367 = vmatpush2.bf16.msra.mxu0 0
      %1368 = vmatprep.subr.bf16.mxu0 0
      %1369 = vmatpush2.bf16.msra.mxu0 0
      %1370 = vmatprep.subr.bf16.mxu0 0
      %1371 = vmatpush2.bf16.msra.mxu0 0
      %1372 = vmatprep.subr.bf16.mxu0 0
      %1373 = vmatpush2.bf16.msra.mxu0 0
      %1374 = vmatprep.subr.bf16.mxu0 0
      %1375 = vmatpush2.bf16.msra.mxu0 0
      %1376 = vmatprep.subr.bf16.mxu0 0
      %1377 = vmatpush2.bf16.msra.mxu0 0
      %1378 = vmatprep.subr.bf16.mxu0 0
      %1379 = vmatpush2.bf16.msra.mxu0 0
      %1380 = vmatprep.subr.bf16.mxu0 0
      %1381 = vmatpush2.bf16.msra.mxu0 0
      %1382 = vmatprep.mubr.bf16.mxu0 0
      %1383 = vmatmul.mubr.bf16.gmra.mxu0 %v1200
      %v1384 = vpop.f32.mrf.mxu0
      %v1385 = vadd.f32 %v1196, %v1384
      %v1386 = vpop.f32.mrf.mxu0
      %v1387 = vadd.f32 %v1196, %v1386
      %v1388 = vpop.f32.mrf.mxu0
      %v1389 = vpop.f32.mrf.mxu0
      %1390 = vdwg.mxu0
      %v1391 = vld [vmem:[%s327] sm:$0xff]
      %v1392 = vld [vmem:[%s327 + $0x8] sm:$0xff]
      %v1393 = vld [vmem:[%s327 + $0x10] sm:$0xff]
      %v1394 = vld [vmem:[%s327 + $0x18] sm:$0xff]
      %v1395 = vunpack.c.l.bf16 %v1391
      %v1396 = vunpack.c.h.bf16 %v1391
      %v1397 = vunpack.c.l.bf16 %v1392
      %v1398 = vunpack.c.h.bf16 %v1392
      %v1399 = vunpack.c.l.bf16 %v1393
      %v1400 = vunpack.c.h.bf16 %v1393
      %v1401 = vunpack.c.l.bf16 %v1394
      %v1402 = vunpack.c.h.bf16 %v1394
      %v1403 = vadd.f32 %v1262, %v1395
      %v1404 = vadd.f32 %v1264, %v1396
      %v1405 = vadd.f32 %v1303, %v1397
      %v1406 = vadd.f32 %v1305, %v1398
      %v1407 = vadd.f32 %v1344, %v1399
      %v1408 = vadd.f32 %v1346, %v1400
      %v1409 = vadd.f32 %v1385, %v1401
      %v1410 = vadd.f32 %v1387, %v1402
      %1411 = vst [vmem:[%s332] sm:$0xff] %v1403
      %1412 = vst [vmem:[%s332 + $0x8] sm:$0xff] %v1404
      %1413 = vst [vmem:[%s332 + $0x10] sm:$0xff] %v1405
      %1414 = vst [vmem:[%s332 + $0x18] sm:$0xff] %v1406
      %1415 = vst [vmem:[%s332 + $0x20] sm:$0xff] %v1407
      %1416 = vst [vmem:[%s332 + $0x28] sm:$0xff] %v1408
      %1417 = vst [vmem:[%s332 + $0x30] sm:$0xff] %v1409
      %1418 = vst [vmem:[%s332 + $0x38] sm:$0xff] %v1410
      %p1419 = scmp.lt.s32.totalorder %s18, 1
      %s1420 = scalar_select %p1419, %s18, 1
      %s1421 = smul.addr %s1420, 8
      %s1422 = smul.addr %s1421, 8
      %s1423 = scalar_lea.vmem %s7, %s1422
      // Predicated region
      $region49: #{gen_residual_block_forward.5} parent=47 // pred_check
        %p1424 = pneg %p203
      $region50: #{gen_residual_block_forward.5} parent=47 // pred_check_branch
        %1426 = sbr.rel (%p1424) target = $region52
      $region51: #{gen_residual_block_forward.5} parent=47 // pred_region
        _
      $region52: #{gen_residual_block_forward.5} parent=47 // pred_fallthru
        _
    $region48: #{gen_residual_block_forward.5} parent=5 // pred_fallthru
      _
    %p1427 = scmp.le.s32.totalorder 2, %s13
    // Predicated region
    $region53: #{gen_residual_block_forward.5} parent=5 // pred_check
      %p1428 = pneg %p1427
    $region54: #{gen_residual_block_forward.5} parent=5 // pred_check_branch
      %1430 = sbr.rel (%p1428) target = $region56
    $region55: #{gen_residual_block_forward.5} parent=5 // pred_region
      %s1431 = ssub.s32 %s13, 2
      // Predicated region
      $region57: #{gen_residual_block_forward.5} parent=55 // pred_check
        %p1432 = pneg %p209
      $region58: #{gen_residual_block_forward.5} parent=55 // pred_check_branch
        %1434 = sbr.rel (%p1432) target = $region60
      $region59: #{gen_residual_block_forward.5} parent=55 // pred_region
        %p1435 = scmp.lt.s32.totalorder %s19, 1
        %s1436 = scalar_select %p1435, %s19, 1
        %s1437 = smul.addr %s1436, 8
        %s1438 = smul.addr %s1437, 8
        %s1439 = scalar_lea.vmem %s7, %s1438
      $region60: #{gen_residual_block_forward.5} parent=55 // pred_fallthru
        _
    $region56: #{gen_residual_block_forward.5} parent=5 // pred_fallthru
      _
  $region6: #{gen_residual_block_forward.5} parent=0 // loop_footer
    %s17 = sadd.s32 1, %s13
  $region7: #{gen_residual_block_forward.5} parent=0 // loop_footer_branch
    %12 = sbr.rel target = $region3
  $region8: #{gen_residual_block_forward.5} parent=0 // loop_exit
    _

</llo_original>
